<compile_context>
chip_gen: v7x
topology: tpu7x:2x2x1
jax: 0.10.0
libtpu: 0.0.40
codegen_flags: <defaults>
</compile_context>

<pallas_src>
import functools

import jax
import jax.numpy as jnp
from jax.experimental import pallas as pl
from jax.experimental.pallas import tpu as pltpu


def _encoder_kernel(x_ref, wqkv_ref, bqkv_ref, opw_ref, opb_ref,
                    g1_ref, be1_ref, w1_ref, b1_ref, w2_ref, b2_ref,
                    g2_ref, be2_ref, o_ref,
                    *, num_heads, eps, compute_dtype):
    Bt, S, H = x_ref.shape
    nh = num_heads
    hd = H // nh
    T = Bt * S
    cdt = compute_dtype

    x = x_ref[...].reshape(T, H)                  # f32 residual stream (tokens, H)
    xc = x.astype(cdt)

    # ---- fused QKV projection: one (T,H) @ (H,3H) MXU matmul ----
    # (weights pre-transposed; 1/sqrt(hd) already folded into Q cols + bias)
    qkv = jnp.dot(xc, wqkv_ref[...], preferred_element_type=jnp.float32)
    qkv = qkv + bqkv_ref[...]                     # (T, 3H) f32
    q = qkv[:, 0:H]
    k = qkv[:, H:2 * H]
    v = qkv[:, 2 * H:3 * H]

    # ---- head-batched attention: (Bt*nh, S, hd) layout, single batched dots ----
    def to_heads(t):                              # (T, H) -> (Bt*nh, S, hd)
        return jnp.stack(
            [t[b * S:(b + 1) * S, h * hd:(h + 1) * hd]
             for b in range(Bt) for h in range(nh)], axis=0).astype(cdt)

    qh = to_heads(q)
    kh = to_heads(k)
    vh = to_heads(v)

    s = jnp.einsum('bqd,bkd->bqk', qh, kh,
                   preferred_element_type=jnp.float32)            # (Bt*nh, S, S)
    s = s - jnp.max(s, axis=-1, keepdims=True)
    p = jnp.exp(s)
    p = p * pl.reciprocal(jnp.sum(p, axis=-1, keepdims=True), approx=True)
    attn_h = jnp.einsum('bqk,bkd->bqd', p.astype(cdt), vh,
                        preferred_element_type=jnp.float32)       # (Bt*nh, S, hd)

    # merge heads back to (T, H)
    attn = jnp.concatenate(
        [jnp.concatenate([attn_h[b * nh + h] for h in range(nh)], axis=-1)
         for b in range(Bt)], axis=0)

    # ---- output projection (weight pre-transposed to (H, H)) ----
    attn = jnp.dot(attn.astype(cdt), opw_ref[...],
                   preferred_element_type=jnp.float32) + opb_ref[...]

    def layer_norm(t, g, b):                      # f32 throughout
        mu = jnp.mean(t, axis=-1, keepdims=True)
        var = jnp.mean(jnp.square(t - mu), axis=-1, keepdims=True)
        return (t - mu) * jax.lax.rsqrt(var + eps) * g + b

    # ---- residual + LayerNorm1 ----
    x1 = layer_norm(x + attn, g1_ref[...], be1_ref[...])

    # ---- FFN: Linear(H->E) -> ReLU -> (Dropout: identity) -> Linear(E->H) ----
    h1 = jnp.dot(x1.astype(cdt), w1_ref[...],
                 preferred_element_type=jnp.float32) + b1_ref[...]   # (T, E)
    h1 = jnp.maximum(h1, 0.0)
    ffn = jnp.dot(h1.astype(cdt), w2_ref[...],
                  preferred_element_type=jnp.float32) + b2_ref[...]  # (T, H)

    # ---- residual + LayerNorm2 ----
    x2 = layer_norm(x1 + ffn, g2_ref[...], be2_ref[...])

    o_ref[...] = x2.reshape(Bt, S, H).astype(o_ref.dtype)


def _build_encoder_call(B, S, H, E, num_heads, block_b, compute_dtype,
                        single_buffer_weights, vmem_limit_bytes):
    kernel = functools.partial(_encoder_kernel, num_heads=num_heads,
                               eps=1e-5, compute_dtype=compute_dtype)

    def wspec(shape):
        # weight / bias block: full array, constant index_map across the grid
        nd = len(shape)
        kwargs = {}
        if single_buffer_weights:
            kwargs["pipeline_mode"] = pl.Buffered(1)   # never changes -> 1 buffer
        return pl.BlockSpec(shape, lambda b, _n=nd: (0,) * _n, **kwargs)

    in_specs = [
        pl.BlockSpec((block_b, S, H), lambda b: (b, 0, 0)),   # x
        wspec((H, 3 * H)),                                    # in_proj W^T (fused QKV, Q pre-scaled)
        wspec((1, 3 * H)),                                    # in_proj bias (Q pre-scaled)
        wspec((H, H)),                                        # out_proj W^T
        wspec((1, H)),                                        # out_proj bias
        wspec((1, H)),                                        # norm1 gamma
        wspec((1, H)),                                        # norm1 beta
        wspec((H, E)),                                        # ffn W1^T
        wspec((1, E)),                                        # ffn b1
        wspec((E, H)),                                        # ffn W2^T
        wspec((1, H)),                                        # ffn b2
        wspec((1, H)),                                        # norm2 gamma
        wspec((1, H)),                                        # norm2 beta
    ]

    cp_kwargs = dict(dimension_semantics=("parallel",))
    if vmem_limit_bytes is not None:
        cp_kwargs["vmem_limit_bytes"] = vmem_limit_bytes

    return pl.pallas_call(
        kernel,
        out_shape=jax.ShapeDtypeStruct((B, S, H), jnp.float32),
        grid_spec=pltpu.PrefetchScalarGridSpec(
            num_scalar_prefetch=0,
            grid=(B // block_b,),
            in_specs=in_specs,
            out_specs=pl.BlockSpec((block_b, S, H), lambda b: (b, 0, 0)),
        ),
        compiler_params=pltpu.CompilerParams(**cp_kwargs),
    )


def encoder_forward(x, params, *, embedding_dim, hidden_dim, num_heads,
                    block_b=1, compute_dtype=jnp.bfloat16,
                    vmem_limit_bytes=None):
    """x: (B, S, H) float32, params in PyTorch layout. Returns (B, S, H) f32."""
    B, S, H = x.shape
    E = embedding_dim
    assert H == hidden_dim and H % num_heads == 0 and B % block_b == 0
    f32 = jnp.float32
    cdt = compute_dtype
    hd = H // num_heads

    # One-time weight prep OUTSIDE the kernel: pre-transpose (kernel never does
    # `.T`), fold the attention scale 1/sqrt(hd) into the Q portion of the fused
    # QKV weight+bias, reshape biases to 2-D rows, cast MXU operands to cdt.
    scale = 1.0 / float(hd) ** 0.5
    qkv_colscale = jnp.concatenate(
        [jnp.full((H,), scale, f32), jnp.ones((2 * H,), f32)])       # (3H,)
    in_w = jnp.asarray(params["in_proj_w"]).astype(f32)              # (3H, H)
    in_b = jnp.asarray(params["in_proj_b"]).astype(f32)              # (3H,)
    wqkv = (in_w * qkv_colscale[:, None]).T.astype(cdt)              # (H, 3H)
    bqkv = (in_b * qkv_colscale).reshape(1, 3 * H).astype(f32)

    opw = jnp.asarray(params["out_proj_w"]).T.astype(cdt)            # (H, H)
    opb = jnp.asarray(params["out_proj_b"]).reshape(1, H).astype(f32)
    w1 = jnp.asarray(params["ffn_w1"]).T.astype(cdt)                 # (H, E)
    b1 = jnp.asarray(params["ffn_b1"]).reshape(1, E).astype(f32)
    w2 = jnp.asarray(params["ffn_w2"]).T.astype(cdt)                 # (E, H)
    b2 = jnp.asarray(params["ffn_b2"]).reshape(1, H).astype(f32)
    g1 = jnp.asarray(params["ln1_g"]).reshape(1, H).astype(f32)
    be1 = jnp.asarray(params["ln1_b"]).reshape(1, H).astype(f32)
    g2 = jnp.asarray(params["ln2_g"]).reshape(1, H).astype(f32)
    be2 = jnp.asarray(params["ln2_b"]).reshape(1, H).astype(f32)

    args = (x.astype(f32), wqkv, bqkv, opw, opb, g1, be1,
            w1, b1, w2, b2, g2, be2)

    try:
        call = _build_encoder_call(B, S, H, E, num_heads, block_b, cdt,
                                   True, vmem_limit_bytes)
        return call(*args)
    except Exception:
        # Fallback if this JAX/Mosaic build rejects pl.Buffered(1) (single
        # buffering); semantics are identical, just 2x weight VMEM.
        call = _build_encoder_call(B, S, H, E, num_heads, block_b, cdt,
                                   False, vmem_limit_bytes)
        return call(*args)


def init_params(key, embedding_dim, hidden_dim):
    """Parameters in native PyTorch layout (out_features, in_features)."""
    H, E = hidden_dim, embedding_dim
    ks = jax.random.split(key, 8)
    s = 0.05
    return {
        "in_proj_w": s * jax.random.normal(ks[0], (3 * H, H), jnp.float32),
        "in_proj_b": s * jax.random.normal(ks[1], (3 * H,), jnp.float32),
        "out_proj_w": s * jax.random.normal(ks[2], (H, H), jnp.float32),
        "out_proj_b": s * jax.random.normal(ks[3], (H,), jnp.float32),
        "ln1_g": jnp.ones((H,), jnp.float32),
        "ln1_b": jnp.zeros((H,), jnp.float32),
        "ffn_w1": s * jax.random.normal(ks[4], (E, H), jnp.float32),
        "ffn_b1": s * jax.random.normal(ks[5], (E,), jnp.float32),
        "ffn_w2": s * jax.random.normal(ks[6], (H, E), jnp.float32),
        "ffn_b2": s * jax.random.normal(ks[7], (H,), jnp.float32),
        "ln2_g": jnp.ones((H,), jnp.float32),
        "ln2_b": jnp.zeros((H,), jnp.float32),
    }


def encoder_reference(x, params, *, num_heads, eps=1e-5):
    """Pure-JAX f32 reference mirroring the PyTorch module (eval mode)."""
    B, S, H = x.shape
    nh = num_heads
    hd = H // nh
    wq, wk, wv = jnp.split(params["in_proj_w"], 3, axis=0)
    bq, bk, bv = jnp.split(params["in_proj_b"], 3, axis=0)
    q = x @ wq.T + bq
    k = x @ wk.T + bk
    v = x @ wv.T + bv

    def split_heads(t):
        return t.reshape(B, S, nh, hd).transpose(0, 2, 1, 3)

    qh, kh, vh = split_heads(q), split_heads(k), split_heads(v)
    scores = jnp.einsum('bhqd,bhkd->bhqk', qh, kh) / jnp.sqrt(float(hd))
    p = jax.nn.softmax(scores, axis=-1)
    attn = jnp.einsum('bhqk,bhkd->bhqd', p, vh)
    attn = attn.transpose(0, 2, 1, 3).reshape(B, S, H)
    attn = attn @ params["out_proj_w"].T + params["out_proj_b"]

    def ln(t, g, b):
        mu = t.mean(-1, keepdims=True)
        var = ((t - mu) ** 2).mean(-1, keepdims=True)
        return (t - mu) * jax.lax.rsqrt(var + eps) * g + b

    x1 = ln(x + attn, params["ln1_g"], params["ln1_b"])
    h1 = jnp.maximum(x1 @ params["ffn_w1"].T + params["ffn_b1"], 0.0)
    ffn = h1 @ params["ffn_w2"].T + params["ffn_b2"]
    return ln(x1 + ffn, params["ln2_g"], params["ln2_b"])


if __name__ == "__main__":
    # Small shapes consistent with the module's forward: (batch, seq, hidden)
    B, S = 2, 8
    hidden_dim = 32
    embedding_dim = 64
    num_heads = 4
    # dropout_rate irrelevant in eval mode (dropout == identity)

    key = jax.random.PRNGKey(0)
    kx, kp = jax.random.split(key)
    x = jax.random.normal(kx, (B, S, hidden_dim), jnp.float32)
    params = init_params(kp, embedding_dim, hidden_dim)

    out = encoder_forward(x, params,
                          embedding_dim=embedding_dim,
                          hidden_dim=hidden_dim,
                          num_heads=num_heads,
                          block_b=1)                 # grid=(2,): both v7x TCs busy
    out = jax.block_until_ready(out)
    assert out.shape == (B, S, hidden_dim)

    # Sanity check vs. pure-JAX f32 reference (kernel uses bf16 MXU inputs).
    ref = encoder_reference(x, params, num_heads=num_heads)
    max_err = float(jnp.max(jnp.abs(out - ref)))
    assert max_err < 1e-1, f"mismatch vs reference: {max_err}"
    print("KERNEL_OK")
</pallas_src>

<mosaic_0001>
module attributes {stable_mosaic.version = 11 : i64} {
  func.func @_encoder_kernel(%arg0: i32, %arg1: memref<1x8x32xf32, #tpu.memory_space<vmem>>, %arg2: memref<32x96xbf16, #tpu.memory_space<vmem>>, %arg3: memref<1x96xf32, #tpu.memory_space<vmem>>, %arg4: memref<32x32xbf16, #tpu.memory_space<vmem>>, %arg5: memref<1x32xf32, #tpu.memory_space<vmem>>, %arg6: memref<1x32xf32, #tpu.memory_space<vmem>>, %arg7: memref<1x32xf32, #tpu.memory_space<vmem>>, %arg8: memref<32x64xbf16, #tpu.memory_space<vmem>>, %arg9: memref<1x64xf32, #tpu.memory_space<vmem>>, %arg10: memref<64x32xbf16, #tpu.memory_space<vmem>>, %arg11: memref<1x32xf32, #tpu.memory_space<vmem>>, %arg12: memref<1x32xf32, #tpu.memory_space<vmem>>, %arg13: memref<1x32xf32, #tpu.memory_space<vmem>>, %arg14: memref<1x8x32xf32, #tpu.memory_space<vmem>>) attributes {dimension_semantics = [#tpu.dimension_semantics<parallel>], iteration_bounds = array<i64: 2>, scalar_prefetch = 0 : i64, scratch_operands = 0 : i64, tpu.core_type = #tpu.core_type<tc>, window_params = [{transform_indices = @transform_0, window_bounds = array<i64: 1, 8, 32>}, {pipeline_mode = #tpu.pipeline_mode<synchronous>, transform_indices = @transform_1, window_bounds = array<i64: 32, 96>}, {pipeline_mode = #tpu.pipeline_mode<synchronous>, transform_indices = @transform_2, window_bounds = array<i64: 1, 96>}, {pipeline_mode = #tpu.pipeline_mode<synchronous>, transform_indices = @transform_3, window_bounds = array<i64: 32, 32>}, {pipeline_mode = #tpu.pipeline_mode<synchronous>, transform_indices = @transform_4, window_bounds = array<i64: 1, 32>}, {pipeline_mode = #tpu.pipeline_mode<synchronous>, transform_indices = @transform_5, window_bounds = array<i64: 1, 32>}, {pipeline_mode = #tpu.pipeline_mode<synchronous>, transform_indices = @transform_6, window_bounds = array<i64: 1, 32>}, {pipeline_mode = #tpu.pipeline_mode<synchronous>, transform_indices = @transform_7, window_bounds = array<i64: 32, 64>}, {pipeline_mode = #tpu.pipeline_mode<synchronous>, transform_indices = @transform_8, window_bounds = array<i64: 1, 64>}, {pipeline_mode = #tpu.pipeline_mode<synchronous>, transform_indices = @transform_9, window_bounds = array<i64: 64, 32>}, {pipeline_mode = #tpu.pipeline_mode<synchronous>, transform_indices = @transform_10, window_bounds = array<i64: 1, 32>}, {pipeline_mode = #tpu.pipeline_mode<synchronous>, transform_indices = @transform_11, window_bounds = array<i64: 1, 32>}, {pipeline_mode = #tpu.pipeline_mode<synchronous>, transform_indices = @transform_12, window_bounds = array<i64: 1, 32>}, {transform_indices = @transform_13, window_bounds = array<i64: 1, 8, 32>}]} {
    %c0 = arith.constant 0 : index
    %c0_0 = arith.constant 0 : index
    %c0_1 = arith.constant 0 : index
    %0 = vector.load %arg1[%c0, %c0_0, %c0_1] : memref<1x8x32xf32, #tpu.memory_space<vmem>>, vector<1x8x32xf32>
    %1 = vector.shape_cast %0 : vector<1x8x32xf32> to vector<8x32xf32>
    %2 = arith.truncf %1 : vector<8x32xf32> to vector<8x32xbf16>
    %c0_2 = arith.constant 0 : index
    %c0_3 = arith.constant 0 : index
    %3 = vector.load %arg2[%c0_2, %c0_3] : memref<32x96xbf16, #tpu.memory_space<vmem>>, vector<32x96xbf16>
    %cst = arith.constant dense<0.000000e+00> : vector<8x96xf32>
    %4 = tpu.matmul %2, %3, %cst {dimension_numbers = #tpu.dot_dimension_numbers<[1], [0], [0], [1], [0, 0, 1, 1], [], []>} : vector<8x32xbf16>, vector<32x96xbf16>, vector<8x96xf32> -> vector<8x96xf32>
    %c0_4 = arith.constant 0 : index
    %c0_5 = arith.constant 0 : index
    %5 = vector.load %arg3[%c0_4, %c0_5] : memref<1x96xf32, #tpu.memory_space<vmem>>, vector<1x96xf32>
    %6 = vector.broadcast %5 : vector<1x96xf32> to vector<8x96xf32>
    %7 = arith.addf %4, %6 : vector<8x96xf32>
    %8 = vector.extract_strided_slice %7 {offsets = [0, 0], sizes = [8, 32], strides = [1, 1]} : vector<8x96xf32> to vector<8x32xf32>
    %9 = vector.extract_strided_slice %7 {offsets = [0, 32], sizes = [8, 32], strides = [1, 1]} : vector<8x96xf32> to vector<8x32xf32>
    %10 = vector.extract_strided_slice %7 {offsets = [0, 64], sizes = [8, 32], strides = [1, 1]} : vector<8x96xf32> to vector<8x32xf32>
    %11 = vector.extract_strided_slice %8 {offsets = [0, 0], sizes = [8, 8], strides = [1, 1]} : vector<8x32xf32> to vector<8x8xf32>
    %12 = vector.extract_strided_slice %8 {offsets = [0, 8], sizes = [8, 8], strides = [1, 1]} : vector<8x32xf32> to vector<8x8xf32>
    %13 = vector.extract_strided_slice %8 {offsets = [0, 16], sizes = [8, 8], strides = [1, 1]} : vector<8x32xf32> to vector<8x8xf32>
    %14 = vector.extract_strided_slice %8 {offsets = [0, 24], sizes = [8, 8], strides = [1, 1]} : vector<8x32xf32> to vector<8x8xf32>
    %15 = vector.shape_cast %11 : vector<8x8xf32> to vector<1x8x8xf32>
    %16 = vector.shape_cast %12 : vector<8x8xf32> to vector<1x8x8xf32>
    %17 = vector.shape_cast %13 : vector<8x8xf32> to vector<1x8x8xf32>
    %18 = vector.shape_cast %14 : vector<8x8xf32> to vector<1x8x8xf32>
    %19 = tpu.concatenate %15, %16, %17, %18 in 0 : vector<1x8x8xf32>, vector<1x8x8xf32>, vector<1x8x8xf32>, vector<1x8x8xf32> -> vector<4x8x8xf32>
    %20 = arith.truncf %19 : vector<4x8x8xf32> to vector<4x8x8xbf16>
    %21 = vector.extract_strided_slice %9 {offsets = [0, 0], sizes = [8, 8], strides = [1, 1]} : vector<8x32xf32> to vector<8x8xf32>
    %22 = vector.extract_strided_slice %9 {offsets = [0, 8], sizes = [8, 8], strides = [1, 1]} : vector<8x32xf32> to vector<8x8xf32>
    %23 = vector.extract_strided_slice %9 {offsets = [0, 16], sizes = [8, 8], strides = [1, 1]} : vector<8x32xf32> to vector<8x8xf32>
    %24 = vector.extract_strided_slice %9 {offsets = [0, 24], sizes = [8, 8], strides = [1, 1]} : vector<8x32xf32> to vector<8x8xf32>
    %25 = vector.shape_cast %21 : vector<8x8xf32> to vector<1x8x8xf32>
    %26 = vector.shape_cast %22 : vector<8x8xf32> to vector<1x8x8xf32>
    %27 = vector.shape_cast %23 : vector<8x8xf32> to vector<1x8x8xf32>
    %28 = vector.shape_cast %24 : vector<8x8xf32> to vector<1x8x8xf32>
    %29 = tpu.concatenate %25, %26, %27, %28 in 0 : vector<1x8x8xf32>, vector<1x8x8xf32>, vector<1x8x8xf32>, vector<1x8x8xf32> -> vector<4x8x8xf32>
    %30 = arith.truncf %29 : vector<4x8x8xf32> to vector<4x8x8xbf16>
    %31 = vector.extract_strided_slice %10 {offsets = [0, 0], sizes = [8, 8], strides = [1, 1]} : vector<8x32xf32> to vector<8x8xf32>
    %32 = vector.extract_strided_slice %10 {offsets = [0, 8], sizes = [8, 8], strides = [1, 1]} : vector<8x32xf32> to vector<8x8xf32>
    %33 = vector.extract_strided_slice %10 {offsets = [0, 16], sizes = [8, 8], strides = [1, 1]} : vector<8x32xf32> to vector<8x8xf32>
    %34 = vector.extract_strided_slice %10 {offsets = [0, 24], sizes = [8, 8], strides = [1, 1]} : vector<8x32xf32> to vector<8x8xf32>
    %35 = vector.shape_cast %31 : vector<8x8xf32> to vector<1x8x8xf32>
    %36 = vector.shape_cast %32 : vector<8x8xf32> to vector<1x8x8xf32>
    %37 = vector.shape_cast %33 : vector<8x8xf32> to vector<1x8x8xf32>
    %38 = vector.shape_cast %34 : vector<8x8xf32> to vector<1x8x8xf32>
    %39 = tpu.concatenate %35, %36, %37, %38 in 0 : vector<1x8x8xf32>, vector<1x8x8xf32>, vector<1x8x8xf32>, vector<1x8x8xf32> -> vector<4x8x8xf32>
    %40 = arith.truncf %39 : vector<4x8x8xf32> to vector<4x8x8xbf16>
    "tpu.trace_start"() <{level = 10 : i32, message = "bqd,bkd->bqk"}> : () -> ()
    %cst_6 = arith.constant dense<0.000000e+00> : vector<4x8x8xf32>
    %41 = tpu.matmul %20, %30, %cst_6 {dimension_numbers = #tpu.dot_dimension_numbers<[2], [2], [1], [1], [0, 0, 0, 1, 1, 1], [0], [0]>} : vector<4x8x8xbf16>, vector<4x8x8xbf16>, vector<4x8x8xf32> -> vector<4x8x8xf32>
    "tpu.trace_stop"() : () -> ()
    %cst_7 = arith.constant dense<0xFF800000> : vector<4x8xf32>
    %42 = vector.multi_reduction <maximumf>, %41, %cst_7 [2] : vector<4x8x8xf32> to vector<4x8xf32>
    %43 = vector.shape_cast %42 : vector<4x8xf32> to vector<4x8x1xf32>
    %44 = vector.broadcast %43 : vector<4x8x1xf32> to vector<4x8x8xf32>
    %45 = arith.subf %41, %44 : vector<4x8x8xf32>
    %46 = math.exp %45 : vector<4x8x8xf32>
    %cst_8 = arith.constant dense<0.000000e+00> : vector<4x8xf32>
    %47 = vector.multi_reduction <add>, %46, %cst_8 [2] : vector<4x8x8xf32> to vector<4x8xf32>
    %48 = vector.shape_cast %47 : vector<4x8xf32> to vector<4x8x1xf32>
    %49 = tpu.reciprocal %48 {approx = true} : vector<4x8x1xf32> -> vector<4x8x1xf32>
    %50 = vector.broadcast %49 : vector<4x8x1xf32> to vector<4x8x8xf32>
    %51 = arith.mulf %46, %50 : vector<4x8x8xf32>
    %52 = arith.truncf %51 : vector<4x8x8xf32> to vector<4x8x8xbf16>
    "tpu.trace_start"() <{level = 10 : i32, message = "bqk,bkd->bqd"}> : () -> ()
    %cst_9 = arith.constant dense<0.000000e+00> : vector<4x8x8xf32>
    %53 = tpu.matmul %52, %40, %cst_9 {dimension_numbers = #tpu.dot_dimension_numbers<[2], [1], [1], [2], [0, 0, 0, 1, 1, 2], [0], [0]>} : vector<4x8x8xbf16>, vector<4x8x8xbf16>, vector<4x8x8xf32> -> vector<4x8x8xf32>
    "tpu.trace_stop"() : () -> ()
    %54 = vector.extract_strided_slice %53 {offsets = [0, 0, 0], sizes = [1, 8, 8], strides = [1, 1, 1]} : vector<4x8x8xf32> to vector<1x8x8xf32>
    %55 = vector.shape_cast %54 : vector<1x8x8xf32> to vector<8x8xf32>
    %56 = vector.extract_strided_slice %53 {offsets = [1, 0, 0], sizes = [1, 8, 8], strides = [1, 1, 1]} : vector<4x8x8xf32> to vector<1x8x8xf32>
    %57 = vector.shape_cast %56 : vector<1x8x8xf32> to vector<8x8xf32>
    %58 = vector.extract_strided_slice %53 {offsets = [2, 0, 0], sizes = [1, 8, 8], strides = [1, 1, 1]} : vector<4x8x8xf32> to vector<1x8x8xf32>
    %59 = vector.shape_cast %58 : vector<1x8x8xf32> to vector<8x8xf32>
    %60 = vector.extract_strided_slice %53 {offsets = [3, 0, 0], sizes = [1, 8, 8], strides = [1, 1, 1]} : vector<4x8x8xf32> to vector<1x8x8xf32>
    %61 = vector.shape_cast %60 : vector<1x8x8xf32> to vector<8x8xf32>
    %62 = tpu.concatenate %55, %57, %59, %61 in 1 : vector<8x8xf32>, vector<8x8xf32>, vector<8x8xf32>, vector<8x8xf32> -> vector<8x32xf32>
    %63 = arith.truncf %62 : vector<8x32xf32> to vector<8x32xbf16>
    %c0_10 = arith.constant 0 : index
    %c0_11 = arith.constant 0 : index
    %64 = vector.load %arg4[%c0_10, %c0_11] : memref<32x32xbf16, #tpu.memory_space<vmem>>, vector<32x32xbf16>
    %cst_12 = arith.constant dense<0.000000e+00> : vector<8x32xf32>
    %65 = tpu.matmul %63, %64, %cst_12 {dimension_numbers = #tpu.dot_dimension_numbers<[1], [0], [0], [1], [0, 0, 1, 1], [], []>} : vector<8x32xbf16>, vector<32x32xbf16>, vector<8x32xf32> -> vector<8x32xf32>
    %c0_13 = arith.constant 0 : index
    %c0_14 = arith.constant 0 : index
    %66 = vector.load %arg5[%c0_13, %c0_14] : memref<1x32xf32, #tpu.memory_space<vmem>>, vector<1x32xf32>
    %67 = vector.broadcast %66 : vector<1x32xf32> to vector<8x32xf32>
    %68 = arith.addf %65, %67 : vector<8x32xf32>
    %69 = arith.addf %1, %68 : vector<8x32xf32>
    %c0_15 = arith.constant 0 : index
    %c0_16 = arith.constant 0 : index
    %70 = vector.load %arg6[%c0_15, %c0_16] : memref<1x32xf32, #tpu.memory_space<vmem>>, vector<1x32xf32>
    %c0_17 = arith.constant 0 : index
    %c0_18 = arith.constant 0 : index
    %71 = vector.load %arg7[%c0_17, %c0_18] : memref<1x32xf32, #tpu.memory_space<vmem>>, vector<1x32xf32>
    %cst_19 = arith.constant dense<0.000000e+00> : vector<8xf32>
    %72 = vector.multi_reduction <add>, %69, %cst_19 [1] : vector<8x32xf32> to vector<8xf32>
    %73 = vector.shape_cast %72 : vector<8xf32> to vector<8x1xf32>
    %cst_20 = arith.constant 3.200000e+01 : f32
    %74 = vector.broadcast %cst_20 : f32 to vector<8x1xf32>
    %75 = arith.divf %73, %74 : vector<8x1xf32>
    %76 = vector.broadcast %75 : vector<8x1xf32> to vector<8x32xf32>
    %77 = arith.subf %69, %76 : vector<8x32xf32>
    %78 = arith.mulf %77, %77 : vector<8x32xf32>
    %cst_21 = arith.constant dense<0.000000e+00> : vector<8xf32>
    %79 = vector.multi_reduction <add>, %78, %cst_21 [1] : vector<8x32xf32> to vector<8xf32>
    %80 = vector.shape_cast %79 : vector<8xf32> to vector<8x1xf32>
    %cst_22 = arith.constant 3.200000e+01 : f32
    %81 = vector.broadcast %cst_22 : f32 to vector<8x1xf32>
    %82 = arith.divf %80, %81 : vector<8x1xf32>
    %83 = vector.broadcast %75 : vector<8x1xf32> to vector<8x32xf32>
    %84 = arith.subf %69, %83 : vector<8x32xf32>
    %cst_23 = arith.constant 9.99999974E-6 : f32
    %85 = vector.broadcast %cst_23 : f32 to vector<8x1xf32>
    %86 = arith.addf %82, %85 : vector<8x1xf32>
    %87 = math.rsqrt %86 : vector<8x1xf32>
    %88 = vector.broadcast %87 : vector<8x1xf32> to vector<8x32xf32>
    %89 = arith.mulf %84, %88 : vector<8x32xf32>
    %90 = vector.broadcast %70 : vector<1x32xf32> to vector<8x32xf32>
    %91 = arith.mulf %89, %90 : vector<8x32xf32>
    %92 = vector.broadcast %71 : vector<1x32xf32> to vector<8x32xf32>
    %93 = arith.addf %91, %92 : vector<8x32xf32>
    %94 = arith.truncf %93 : vector<8x32xf32> to vector<8x32xbf16>
    %c0_24 = arith.constant 0 : index
    %c0_25 = arith.constant 0 : index
    %95 = vector.load %arg8[%c0_24, %c0_25] : memref<32x64xbf16, #tpu.memory_space<vmem>>, vector<32x64xbf16>
    %cst_26 = arith.constant dense<0.000000e+00> : vector<8x64xf32>
    %96 = tpu.matmul %94, %95, %cst_26 {dimension_numbers = #tpu.dot_dimension_numbers<[1], [0], [0], [1], [0, 0, 1, 1], [], []>} : vector<8x32xbf16>, vector<32x64xbf16>, vector<8x64xf32> -> vector<8x64xf32>
    %c0_27 = arith.constant 0 : index
    %c0_28 = arith.constant 0 : index
    %97 = vector.load %arg9[%c0_27, %c0_28] : memref<1x64xf32, #tpu.memory_space<vmem>>, vector<1x64xf32>
    %98 = vector.broadcast %97 : vector<1x64xf32> to vector<8x64xf32>
    %99 = arith.addf %96, %98 : vector<8x64xf32>
    %cst_29 = arith.constant 0.000000e+00 : f32
    %100 = vector.broadcast %cst_29 : f32 to vector<8x64xf32>
    %101 = arith.maximumf %99, %100 : vector<8x64xf32>
    %102 = arith.truncf %101 : vector<8x64xf32> to vector<8x64xbf16>
    %c0_30 = arith.constant 0 : index
    %c0_31 = arith.constant 0 : index
    %103 = vector.load %arg10[%c0_30, %c0_31] : memref<64x32xbf16, #tpu.memory_space<vmem>>, vector<64x32xbf16>
    %cst_32 = arith.constant dense<0.000000e+00> : vector<8x32xf32>
    %104 = tpu.matmul %102, %103, %cst_32 {dimension_numbers = #tpu.dot_dimension_numbers<[1], [0], [0], [1], [0, 0, 1, 1], [], []>} : vector<8x64xbf16>, vector<64x32xbf16>, vector<8x32xf32> -> vector<8x32xf32>
    %c0_33 = arith.constant 0 : index
    %c0_34 = arith.constant 0 : index
    %105 = vector.load %arg11[%c0_33, %c0_34] : memref<1x32xf32, #tpu.memory_space<vmem>>, vector<1x32xf32>
    %106 = vector.broadcast %105 : vector<1x32xf32> to vector<8x32xf32>
    %107 = arith.addf %104, %106 : vector<8x32xf32>
    %108 = arith.addf %93, %107 : vector<8x32xf32>
    %c0_35 = arith.constant 0 : index
    %c0_36 = arith.constant 0 : index
    %109 = vector.load %arg12[%c0_35, %c0_36] : memref<1x32xf32, #tpu.memory_space<vmem>>, vector<1x32xf32>
    %c0_37 = arith.constant 0 : index
    %c0_38 = arith.constant 0 : index
    %110 = vector.load %arg13[%c0_37, %c0_38] : memref<1x32xf32, #tpu.memory_space<vmem>>, vector<1x32xf32>
    %cst_39 = arith.constant dense<0.000000e+00> : vector<8xf32>
    %111 = vector.multi_reduction <add>, %108, %cst_39 [1] : vector<8x32xf32> to vector<8xf32>
    %112 = vector.shape_cast %111 : vector<8xf32> to vector<8x1xf32>
    %cst_40 = arith.constant 3.200000e+01 : f32
    %113 = vector.broadcast %cst_40 : f32 to vector<8x1xf32>
    %114 = arith.divf %112, %113 : vector<8x1xf32>
    %115 = vector.broadcast %114 : vector<8x1xf32> to vector<8x32xf32>
    %116 = arith.subf %108, %115 : vector<8x32xf32>
    %117 = arith.mulf %116, %116 : vector<8x32xf32>
    %cst_41 = arith.constant dense<0.000000e+00> : vector<8xf32>
    %118 = vector.multi_reduction <add>, %117, %cst_41 [1] : vector<8x32xf32> to vector<8xf32>
    %119 = vector.shape_cast %118 : vector<8xf32> to vector<8x1xf32>
    %cst_42 = arith.constant 3.200000e+01 : f32
    %120 = vector.broadcast %cst_42 : f32 to vector<8x1xf32>
    %121 = arith.divf %119, %120 : vector<8x1xf32>
    %122 = vector.broadcast %114 : vector<8x1xf32> to vector<8x32xf32>
    %123 = arith.subf %108, %122 : vector<8x32xf32>
    %cst_43 = arith.constant 9.99999974E-6 : f32
    %124 = vector.broadcast %cst_43 : f32 to vector<8x1xf32>
    %125 = arith.addf %121, %124 : vector<8x1xf32>
    %126 = math.rsqrt %125 : vector<8x1xf32>
    %127 = vector.broadcast %126 : vector<8x1xf32> to vector<8x32xf32>
    %128 = arith.mulf %123, %127 : vector<8x32xf32>
    %129 = vector.broadcast %109 : vector<1x32xf32> to vector<8x32xf32>
    %130 = arith.mulf %128, %129 : vector<8x32xf32>
    %131 = vector.broadcast %110 : vector<1x32xf32> to vector<8x32xf32>
    %132 = arith.addf %130, %131 : vector<8x32xf32>
    %133 = vector.shape_cast %132 : vector<8x32xf32> to vector<1x8x32xf32>
    %c0_44 = arith.constant 0 : index
    %c0_45 = arith.constant 0 : index
    %c0_46 = arith.constant 0 : index
    %134 = vector.load %arg14[%c0_44, %c0_45, %c0_46] : memref<1x8x32xf32, #tpu.memory_space<vmem>>, vector<1x8x32xf32>
    tpu.vector_store %arg14[%c0_44, %c0_45, %c0_46], %133 {strides = array<i32>} : memref<1x8x32xf32, #tpu.memory_space<vmem>>, vector<1x8x32xf32>,
    return
  }
  func.func @transform_0(%arg0: i32) -> (i32, i32, i32) {
    %c0_i32 = arith.constant 0 : i32
    %c0_i32_0 = arith.constant 0 : i32
    %c0_i32_1 = arith.constant 0 : i32
    return %arg0, %c0_i32, %c0_i32_0 : i32, i32, i32
  }
  func.func @transform_1(%arg0: i32) -> (i32, i32) {
    %c0_i32 = arith.constant 0 : i32
    %c0_i32_0 = arith.constant 0 : i32
    %c0_i32_1 = arith.constant 0 : i32
    return %c0_i32, %c0_i32_0 : i32, i32
  }
  func.func @transform_2(%arg0: i32) -> (i32, i32) {
    %c0_i32 = arith.constant 0 : i32
    %c0_i32_0 = arith.constant 0 : i32
    %c0_i32_1 = arith.constant 0 : i32
    return %c0_i32, %c0_i32_0 : i32, i32
  }
  func.func @transform_3(%arg0: i32) -> (i32, i32) {
    %c0_i32 = arith.constant 0 : i32
    %c0_i32_0 = arith.constant 0 : i32
    %c0_i32_1 = arith.constant 0 : i32
    return %c0_i32, %c0_i32_0 : i32, i32
  }
  func.func @transform_4(%arg0: i32) -> (i32, i32) {
    %c0_i32 = arith.constant 0 : i32
    %c0_i32_0 = arith.constant 0 : i32
    %c0_i32_1 = arith.constant 0 : i32
    return %c0_i32, %c0_i32_0 : i32, i32
  }
  func.func @transform_5(%arg0: i32) -> (i32, i32) {
    %c0_i32 = arith.constant 0 : i32
    %c0_i32_0 = arith.constant 0 : i32
    %c0_i32_1 = arith.constant 0 : i32
    return %c0_i32, %c0_i32_0 : i32, i32
  }
  func.func @transform_6(%arg0: i32) -> (i32, i32) {
    %c0_i32 = arith.constant 0 : i32
    %c0_i32_0 = arith.constant 0 : i32
    %c0_i32_1 = arith.constant 0 : i32
    return %c0_i32, %c0_i32_0 : i32, i32
  }
  func.func @transform_7(%arg0: i32) -> (i32, i32) {
    %c0_i32 = arith.constant 0 : i32
    %c0_i32_0 = arith.constant 0 : i32
    %c0_i32_1 = arith.constant 0 : i32
    return %c0_i32, %c0_i32_0 : i32, i32
  }
  func.func @transform_8(%arg0: i32) -> (i32, i32) {
    %c0_i32 = arith.constant 0 : i32
    %c0_i32_0 = arith.constant 0 : i32
    %c0_i32_1 = arith.constant 0 : i32
    return %c0_i32, %c0_i32_0 : i32, i32
  }
  func.func @transform_9(%arg0: i32) -> (i32, i32) {
    %c0_i32 = arith.constant 0 : i32
    %c0_i32_0 = arith.constant 0 : i32
    %c0_i32_1 = arith.constant 0 : i32
    return %c0_i32, %c0_i32_0 : i32, i32
  }
  func.func @transform_10(%arg0: i32) -> (i32, i32) {
    %c0_i32 = arith.constant 0 : i32
    %c0_i32_0 = arith.constant 0 : i32
    %c0_i32_1 = arith.constant 0 : i32
    return %c0_i32, %c0_i32_0 : i32, i32
  }
  func.func @transform_11(%arg0: i32) -> (i32, i32) {
    %c0_i32 = arith.constant 0 : i32
    %c0_i32_0 = arith.constant 0 : i32
    %c0_i32_1 = arith.constant 0 : i32
    return %c0_i32, %c0_i32_0 : i32, i32
  }
  func.func @transform_12(%arg0: i32) -> (i32, i32) {
    %c0_i32 = arith.constant 0 : i32
    %c0_i32_0 = arith.constant 0 : i32
    %c0_i32_1 = arith.constant 0 : i32
    return %c0_i32, %c0_i32_0 : i32, i32
  }
  func.func @transform_13(%arg0: i32) -> (i32, i32, i32) {
    %c0_i32 = arith.constant 0 : i32
    %c0_i32_0 = arith.constant 0 : i32
    %c0_i32_1 = arith.constant 0 : i32
    return %arg0, %c0_i32, %c0_i32_0 : i32, i32, i32
  }
}

module attributes {stable_mosaic.version = 11 : i64} {
  func.func @_encoder_kernel(%arg0: i32, %arg1: memref<1x8x32xf32, #tpu.memory_space<vmem>>, %arg2: memref<32x96xbf16, #tpu.memory_space<vmem>>, %arg3: memref<1x96xf32, #tpu.memory_space<vmem>>, %arg4: memref<32x32xbf16, #tpu.memory_space<vmem>>, %arg5: memref<1x32xf32, #tpu.memory_space<vmem>>, %arg6: memref<1x32xf32, #tpu.memory_space<vmem>>, %arg7: memref<1x32xf32, #tpu.memory_space<vmem>>, %arg8: memref<32x64xbf16, #tpu.memory_space<vmem>>, %arg9: memref<1x64xf32, #tpu.memory_space<vmem>>, %arg10: memref<64x32xbf16, #tpu.memory_space<vmem>>, %arg11: memref<1x32xf32, #tpu.memory_space<vmem>>, %arg12: memref<1x32xf32, #tpu.memory_space<vmem>>, %arg13: memref<1x32xf32, #tpu.memory_space<vmem>>, %arg14: memref<1x8x32xf32, #tpu.memory_space<vmem>>) attributes {dimension_semantics = [#tpu.dimension_semantics<parallel>], iteration_bounds = array<i64: 2>, scalar_prefetch = 0 : i64, scratch_operands = 0 : i64, tpu.core_type = #tpu.core_type<tc>, window_params = [{transform_indices = @transform_0, window_bounds = array<i64: 1, 8, 32>}, {pipeline_mode = #tpu.pipeline_mode<synchronous>, transform_indices = @transform_1, window_bounds = array<i64: 32, 96>}, {pipeline_mode = #tpu.pipeline_mode<synchronous>, transform_indices = @transform_2, window_bounds = array<i64: 1, 96>}, {pipeline_mode = #tpu.pipeline_mode<synchronous>, transform_indices = @transform_3, window_bounds = array<i64: 32, 32>}, {pipeline_mode = #tpu.pipeline_mode<synchronous>, transform_indices = @transform_4, window_bounds = array<i64: 1, 32>}, {pipeline_mode = #tpu.pipeline_mode<synchronous>, transform_indices = @transform_5, window_bounds = array<i64: 1, 32>}, {pipeline_mode = #tpu.pipeline_mode<synchronous>, transform_indices = @transform_6, window_bounds = array<i64: 1, 32>}, {pipeline_mode = #tpu.pipeline_mode<synchronous>, transform_indices = @transform_7, window_bounds = array<i64: 32, 64>}, {pipeline_mode = #tpu.pipeline_mode<synchronous>, transform_indices = @transform_8, window_bounds = array<i64: 1, 64>}, {pipeline_mode = #tpu.pipeline_mode<synchronous>, transform_indices = @transform_9, window_bounds = array<i64: 64, 32>}, {pipeline_mode = #tpu.pipeline_mode<synchronous>, transform_indices = @transform_10, window_bounds = array<i64: 1, 32>}, {pipeline_mode = #tpu.pipeline_mode<synchronous>, transform_indices = @transform_11, window_bounds = array<i64: 1, 32>}, {pipeline_mode = #tpu.pipeline_mode<synchronous>, transform_indices = @transform_12, window_bounds = array<i64: 1, 32>}, {transform_indices = @transform_13, window_bounds = array<i64: 1, 8, 32>}]} {
    %c0 = arith.constant 0 : index
    %c0_0 = arith.constant 0 : index
    %c0_1 = arith.constant 0 : index
    %0 = vector.load %arg1[%c0, %c0_0, %c0_1] : memref<1x8x32xf32, #tpu.memory_space<vmem>>, vector<1x8x32xf32>
    %1 = vector.shape_cast %0 : vector<1x8x32xf32> to vector<8x32xf32>
    %2 = arith.truncf %1 : vector<8x32xf32> to vector<8x32xbf16>
    %c0_2 = arith.constant 0 : index
    %c0_3 = arith.constant 0 : index
    %3 = vector.load %arg2[%c0_2, %c0_3] : memref<32x96xbf16, #tpu.memory_space<vmem>>, vector<32x96xbf16>
    %cst = arith.constant dense<0.000000e+00> : vector<8x96xf32>
    %4 = tpu.matmul %2, %3, %cst {dimension_numbers = #tpu.dot_dimension_numbers<[1], [0], [0], [1], [0, 0, 1, 1], [], []>} : vector<8x32xbf16>, vector<32x96xbf16>, vector<8x96xf32> -> vector<8x96xf32>
    %c0_4 = arith.constant 0 : index
    %c0_5 = arith.constant 0 : index
    %5 = vector.load %arg3[%c0_4, %c0_5] : memref<1x96xf32, #tpu.memory_space<vmem>>, vector<1x96xf32>
    %6 = vector.broadcast %5 : vector<1x96xf32> to vector<8x96xf32>
    %7 = arith.addf %4, %6 : vector<8x96xf32>
    %8 = vector.extract_strided_slice %7 {offsets = [0, 0], sizes = [8, 32], strides = [1, 1]} : vector<8x96xf32> to vector<8x32xf32>
    %9 = vector.extract_strided_slice %7 {offsets = [0, 32], sizes = [8, 32], strides = [1, 1]} : vector<8x96xf32> to vector<8x32xf32>
    %10 = vector.extract_strided_slice %7 {offsets = [0, 64], sizes = [8, 32], strides = [1, 1]} : vector<8x96xf32> to vector<8x32xf32>
    %11 = vector.extract_strided_slice %8 {offsets = [0, 0], sizes = [8, 8], strides = [1, 1]} : vector<8x32xf32> to vector<8x8xf32>
    %12 = vector.extract_strided_slice %8 {offsets = [0, 8], sizes = [8, 8], strides = [1, 1]} : vector<8x32xf32> to vector<8x8xf32>
    %13 = vector.extract_strided_slice %8 {offsets = [0, 16], sizes = [8, 8], strides = [1, 1]} : vector<8x32xf32> to vector<8x8xf32>
    %14 = vector.extract_strided_slice %8 {offsets = [0, 24], sizes = [8, 8], strides = [1, 1]} : vector<8x32xf32> to vector<8x8xf32>
    %15 = vector.shape_cast %11 : vector<8x8xf32> to vector<1x8x8xf32>
    %16 = vector.shape_cast %12 : vector<8x8xf32> to vector<1x8x8xf32>
    %17 = vector.shape_cast %13 : vector<8x8xf32> to vector<1x8x8xf32>
    %18 = vector.shape_cast %14 : vector<8x8xf32> to vector<1x8x8xf32>
    %19 = tpu.concatenate %15, %16, %17, %18 in 0 : vector<1x8x8xf32>, vector<1x8x8xf32>, vector<1x8x8xf32>, vector<1x8x8xf32> -> vector<4x8x8xf32>
    %20 = arith.truncf %19 : vector<4x8x8xf32> to vector<4x8x8xbf16>
    %21 = vector.extract_strided_slice %9 {offsets = [0, 0], sizes = [8, 8], strides = [1, 1]} : vector<8x32xf32> to vector<8x8xf32>
    %22 = vector.extract_strided_slice %9 {offsets = [0, 8], sizes = [8, 8], strides = [1, 1]} : vector<8x32xf32> to vector<8x8xf32>
    %23 = vector.extract_strided_slice %9 {offsets = [0, 16], sizes = [8, 8], strides = [1, 1]} : vector<8x32xf32> to vector<8x8xf32>
    %24 = vector.extract_strided_slice %9 {offsets = [0, 24], sizes = [8, 8], strides = [1, 1]} : vector<8x32xf32> to vector<8x8xf32>
    %25 = vector.shape_cast %21 : vector<8x8xf32> to vector<1x8x8xf32>
    %26 = vector.shape_cast %22 : vector<8x8xf32> to vector<1x8x8xf32>
    %27 = vector.shape_cast %23 : vector<8x8xf32> to vector<1x8x8xf32>
    %28 = vector.shape_cast %24 : vector<8x8xf32> to vector<1x8x8xf32>
    %29 = tpu.concatenate %25, %26, %27, %28 in 0 : vector<1x8x8xf32>, vector<1x8x8xf32>, vector<1x8x8xf32>, vector<1x8x8xf32> -> vector<4x8x8xf32>
    %30 = arith.truncf %29 : vector<4x8x8xf32> to vector<4x8x8xbf16>
    %31 = vector.extract_strided_slice %10 {offsets = [0, 0], sizes = [8, 8], strides = [1, 1]} : vector<8x32xf32> to vector<8x8xf32>
    %32 = vector.extract_strided_slice %10 {offsets = [0, 8], sizes = [8, 8], strides = [1, 1]} : vector<8x32xf32> to vector<8x8xf32>
    %33 = vector.extract_strided_slice %10 {offsets = [0, 16], sizes = [8, 8], strides = [1, 1]} : vector<8x32xf32> to vector<8x8xf32>
    %34 = vector.extract_strided_slice %10 {offsets = [0, 24], sizes = [8, 8], strides = [1, 1]} : vector<8x32xf32> to vector<8x8xf32>
    %35 = vector.shape_cast %31 : vector<8x8xf32> to vector<1x8x8xf32>
    %36 = vector.shape_cast %32 : vector<8x8xf32> to vector<1x8x8xf32>
    %37 = vector.shape_cast %33 : vector<8x8xf32> to vector<1x8x8xf32>
    %38 = vector.shape_cast %34 : vector<8x8xf32> to vector<1x8x8xf32>
    %39 = tpu.concatenate %35, %36, %37, %38 in 0 : vector<1x8x8xf32>, vector<1x8x8xf32>, vector<1x8x8xf32>, vector<1x8x8xf32> -> vector<4x8x8xf32>
    %40 = arith.truncf %39 : vector<4x8x8xf32> to vector<4x8x8xbf16>
    "tpu.trace_start"() <{level = 10 : i32, message = "bqd,bkd->bqk"}> : () -> ()
    %cst_6 = arith.constant dense<0.000000e+00> : vector<4x8x8xf32>
    %41 = tpu.matmul %20, %30, %cst_6 {dimension_numbers = #tpu.dot_dimension_numbers<[2], [2], [1], [1], [0, 0, 0, 1, 1, 1], [0], [0]>} : vector<4x8x8xbf16>, vector<4x8x8xbf16>, vector<4x8x8xf32> -> vector<4x8x8xf32>
    "tpu.trace_stop"() : () -> ()
    %cst_7 = arith.constant dense<0xFF800000> : vector<4x8xf32>
    %42 = vector.multi_reduction <maximumf>, %41, %cst_7 [2] : vector<4x8x8xf32> to vector<4x8xf32>
    %43 = vector.shape_cast %42 : vector<4x8xf32> to vector<4x8x1xf32>
    %44 = vector.broadcast %43 : vector<4x8x1xf32> to vector<4x8x8xf32>
    %45 = arith.subf %41, %44 : vector<4x8x8xf32>
    %46 = math.exp %45 : vector<4x8x8xf32>
    %cst_8 = arith.constant dense<0.000000e+00> : vector<4x8xf32>
    %47 = vector.multi_reduction <add>, %46, %cst_8 [2] : vector<4x8x8xf32> to vector<4x8xf32>
    %48 = vector.shape_cast %47 : vector<4x8xf32> to vector<4x8x1xf32>
    %49 = tpu.reciprocal %48 {approx = true} : vector<4x8x1xf32> -> vector<4x8x1xf32>
    %50 = vector.broadcast %49 : vector<4x8x1xf32> to vector<4x8x8xf32>
    %51 = arith.mulf %46, %50 : vector<4x8x8xf32>
    %52 = arith.truncf %51 : vector<4x8x8xf32> to vector<4x8x8xbf16>
    "tpu.trace_start"() <{level = 10 : i32, message = "bqk,bkd->bqd"}> : () -> ()
    %cst_9 = arith.constant dense<0.000000e+00> : vector<4x8x8xf32>
    %53 = tpu.matmul %52, %40, %cst_9 {dimension_numbers = #tpu.dot_dimension_numbers<[2], [1], [1], [2], [0, 0, 0, 1, 1, 2], [0], [0]>} : vector<4x8x8xbf16>, vector<4x8x8xbf16>, vector<4x8x8xf32> -> vector<4x8x8xf32>
    "tpu.trace_stop"() : () -> ()
    %54 = vector.extract_strided_slice %53 {offsets = [0, 0, 0], sizes = [1, 8, 8], strides = [1, 1, 1]} : vector<4x8x8xf32> to vector<1x8x8xf32>
    %55 = vector.shape_cast %54 : vector<1x8x8xf32> to vector<8x8xf32>
    %56 = vector.extract_strided_slice %53 {offsets = [1, 0, 0], sizes = [1, 8, 8], strides = [1, 1, 1]} : vector<4x8x8xf32> to vector<1x8x8xf32>
    %57 = vector.shape_cast %56 : vector<1x8x8xf32> to vector<8x8xf32>
    %58 = vector.extract_strided_slice %53 {offsets = [2, 0, 0], sizes = [1, 8, 8], strides = [1, 1, 1]} : vector<4x8x8xf32> to vector<1x8x8xf32>
    %59 = vector.shape_cast %58 : vector<1x8x8xf32> to vector<8x8xf32>
    %60 = vector.extract_strided_slice %53 {offsets = [3, 0, 0], sizes = [1, 8, 8], strides = [1, 1, 1]} : vector<4x8x8xf32> to vector<1x8x8xf32>
    %61 = vector.shape_cast %60 : vector<1x8x8xf32> to vector<8x8xf32>
    %62 = tpu.concatenate %55, %57, %59, %61 in 1 : vector<8x8xf32>, vector<8x8xf32>, vector<8x8xf32>, vector<8x8xf32> -> vector<8x32xf32>
    %63 = arith.truncf %62 : vector<8x32xf32> to vector<8x32xbf16>
    %c0_10 = arith.constant 0 : index
    %c0_11 = arith.constant 0 : index
    %64 = vector.load %arg4[%c0_10, %c0_11] : memref<32x32xbf16, #tpu.memory_space<vmem>>, vector<32x32xbf16>
    %cst_12 = arith.constant dense<0.000000e+00> : vector<8x32xf32>
    %65 = tpu.matmul %63, %64, %cst_12 {dimension_numbers = #tpu.dot_dimension_numbers<[1], [0], [0], [1], [0, 0, 1, 1], [], []>} : vector<8x32xbf16>, vector<32x32xbf16>, vector<8x32xf32> -> vector<8x32xf32>
    %c0_13 = arith.constant 0 : index
    %c0_14 = arith.constant 0 : index
    %66 = vector.load %arg5[%c0_13, %c0_14] : memref<1x32xf32, #tpu.memory_space<vmem>>, vector<1x32xf32>
    %67 = vector.broadcast %66 : vector<1x32xf32> to vector<8x32xf32>
    %68 = arith.addf %65, %67 : vector<8x32xf32>
    %69 = arith.addf %1, %68 : vector<8x32xf32>
    %c0_15 = arith.constant 0 : index
    %c0_16 = arith.constant 0 : index
    %70 = vector.load %arg6[%c0_15, %c0_16] : memref<1x32xf32, #tpu.memory_space<vmem>>, vector<1x32xf32>
    %c0_17 = arith.constant 0 : index
    %c0_18 = arith.constant 0 : index
    %71 = vector.load %arg7[%c0_17, %c0_18] : memref<1x32xf32, #tpu.memory_space<vmem>>, vector<1x32xf32>
    %cst_19 = arith.constant dense<0.000000e+00> : vector<8xf32>
    %72 = vector.multi_reduction <add>, %69, %cst_19 [1] : vector<8x32xf32> to vector<8xf32>
    %73 = vector.shape_cast %72 : vector<8xf32> to vector<8x1xf32>
    %cst_20 = arith.constant 3.200000e+01 : f32
    %74 = vector.broadcast %cst_20 : f32 to vector<8x1xf32>
    %75 = arith.divf %73, %74 : vector<8x1xf32>
    %76 = vector.broadcast %75 : vector<8x1xf32> to vector<8x32xf32>
    %77 = arith.subf %69, %76 : vector<8x32xf32>
    %78 = arith.mulf %77, %77 : vector<8x32xf32>
    %cst_21 = arith.constant dense<0.000000e+00> : vector<8xf32>
    %79 = vector.multi_reduction <add>, %78, %cst_21 [1] : vector<8x32xf32> to vector<8xf32>
    %80 = vector.shape_cast %79 : vector<8xf32> to vector<8x1xf32>
    %cst_22 = arith.constant 3.200000e+01 : f32
    %81 = vector.broadcast %cst_22 : f32 to vector<8x1xf32>
    %82 = arith.divf %80, %81 : vector<8x1xf32>
    %83 = vector.broadcast %75 : vector<8x1xf32> to vector<8x32xf32>
    %84 = arith.subf %69, %83 : vector<8x32xf32>
    %cst_23 = arith.constant 9.99999974E-6 : f32
    %85 = vector.broadcast %cst_23 : f32 to vector<8x1xf32>
    %86 = arith.addf %82, %85 : vector<8x1xf32>
    %87 = math.rsqrt %86 : vector<8x1xf32>
    %88 = vector.broadcast %87 : vector<8x1xf32> to vector<8x32xf32>
    %89 = arith.mulf %84, %88 : vector<8x32xf32>
    %90 = vector.broadcast %70 : vector<1x32xf32> to vector<8x32xf32>
    %91 = arith.mulf %89, %90 : vector<8x32xf32>
    %92 = vector.broadcast %71 : vector<1x32xf32> to vector<8x32xf32>
    %93 = arith.addf %91, %92 : vector<8x32xf32>
    %94 = arith.truncf %93 : vector<8x32xf32> to vector<8x32xbf16>
    %c0_24 = arith.constant 0 : index
    %c0_25 = arith.constant 0 : index
    %95 = vector.load %arg8[%c0_24, %c0_25] : memref<32x64xbf16, #tpu.memory_space<vmem>>, vector<32x64xbf16>
    %cst_26 = arith.constant dense<0.000000e+00> : vector<8x64xf32>
    %96 = tpu.matmul %94, %95, %cst_26 {dimension_numbers = #tpu.dot_dimension_numbers<[1], [0], [0], [1], [0, 0, 1, 1], [], []>} : vector<8x32xbf16>, vector<32x64xbf16>, vector<8x64xf32> -> vector<8x64xf32>
    %c0_27 = arith.constant 0 : index
    %c0_28 = arith.constant 0 : index
    %97 = vector.load %arg9[%c0_27, %c0_28] : memref<1x64xf32, #tpu.memory_space<vmem>>, vector<1x64xf32>
    %98 = vector.broadcast %97 : vector<1x64xf32> to vector<8x64xf32>
    %99 = arith.addf %96, %98 : vector<8x64xf32>
    %cst_29 = arith.constant 0.000000e+00 : f32
    %100 = vector.broadcast %cst_29 : f32 to vector<8x64xf32>
    %101 = arith.maximumf %99, %100 : vector<8x64xf32>
    %102 = arith.truncf %101 : vector<8x64xf32> to vector<8x64xbf16>
    %c0_30 = arith.constant 0 : index
    %c0_31 = arith.constant 0 : index
    %103 = vector.load %arg10[%c0_30, %c0_31] : memref<64x32xbf16, #tpu.memory_space<vmem>>, vector<64x32xbf16>
    %cst_32 = arith.constant dense<0.000000e+00> : vector<8x32xf32>
    %104 = tpu.matmul %102, %103, %cst_32 {dimension_numbers = #tpu.dot_dimension_numbers<[1], [0], [0], [1], [0, 0, 1, 1], [], []>} : vector<8x64xbf16>, vector<64x32xbf16>, vector<8x32xf32> -> vector<8x32xf32>
    %c0_33 = arith.constant 0 : index
    %c0_34 = arith.constant 0 : index
    %105 = vector.load %arg11[%c0_33, %c0_34] : memref<1x32xf32, #tpu.memory_space<vmem>>, vector<1x32xf32>
    %106 = vector.broadcast %105 : vector<1x32xf32> to vector<8x32xf32>
    %107 = arith.addf %104, %106 : vector<8x32xf32>
    %108 = arith.addf %93, %107 : vector<8x32xf32>
    %c0_35 = arith.constant 0 : index
    %c0_36 = arith.constant 0 : index
    %109 = vector.load %arg12[%c0_35, %c0_36] : memref<1x32xf32, #tpu.memory_space<vmem>>, vector<1x32xf32>
    %c0_37 = arith.constant 0 : index
    %c0_38 = arith.constant 0 : index
    %110 = vector.load %arg13[%c0_37, %c0_38] : memref<1x32xf32, #tpu.memory_space<vmem>>, vector<1x32xf32>
    %cst_39 = arith.constant dense<0.000000e+00> : vector<8xf32>
    %111 = vector.multi_reduction <add>, %108, %cst_39 [1] : vector<8x32xf32> to vector<8xf32>
    %112 = vector.shape_cast %111 : vector<8xf32> to vector<8x1xf32>
    %cst_40 = arith.constant 3.200000e+01 : f32
    %113 = vector.broadcast %cst_40 : f32 to vector<8x1xf32>
    %114 = arith.divf %112, %113 : vector<8x1xf32>
    %115 = vector.broadcast %114 : vector<8x1xf32> to vector<8x32xf32>
    %116 = arith.subf %108, %115 : vector<8x32xf32>
    %117 = arith.mulf %116, %116 : vector<8x32xf32>
    %cst_41 = arith.constant dense<0.000000e+00> : vector<8xf32>
    %118 = vector.multi_reduction <add>, %117, %cst_41 [1] : vector<8x32xf32> to vector<8xf32>
    %119 = vector.shape_cast %118 : vector<8xf32> to vector<8x1xf32>
    %cst_42 = arith.constant 3.200000e+01 : f32
    %120 = vector.broadcast %cst_42 : f32 to vector<8x1xf32>
    %121 = arith.divf %119, %120 : vector<8x1xf32>
    %122 = vector.broadcast %114 : vector<8x1xf32> to vector<8x32xf32>
    %123 = arith.subf %108, %122 : vector<8x32xf32>
    %cst_43 = arith.constant 9.99999974E-6 : f32
    %124 = vector.broadcast %cst_43 : f32 to vector<8x1xf32>
    %125 = arith.addf %121, %124 : vector<8x1xf32>
    %126 = math.rsqrt %125 : vector<8x1xf32>
    %127 = vector.broadcast %126 : vector<8x1xf32> to vector<8x32xf32>
    %128 = arith.mulf %123, %127 : vector<8x32xf32>
    %129 = vector.broadcast %109 : vector<1x32xf32> to vector<8x32xf32>
    %130 = arith.mulf %128, %129 : vector<8x32xf32>
    %131 = vector.broadcast %110 : vector<1x32xf32> to vector<8x32xf32>
    %132 = arith.addf %130, %131 : vector<8x32xf32>
    %133 = vector.shape_cast %132 : vector<8x32xf32> to vector<1x8x32xf32>
    %c0_44 = arith.constant 0 : index
    %c0_45 = arith.constant 0 : index
    %c0_46 = arith.constant 0 : index
    %134 = vector.load %arg14[%c0_44, %c0_45, %c0_46] : memref<1x8x32xf32, #tpu.memory_space<vmem>>, vector<1x8x32xf32>
    tpu.vector_store %arg14[%c0_44, %c0_45, %c0_46], %133 {strides = array<i32>} : memref<1x8x32xf32, #tpu.memory_space<vmem>>, vector<1x8x32xf32>,
    return
  }
  func.func @transform_0(%arg0: i32) -> (i32, i32, i32) {
    %c0_i32 = arith.constant 0 : i32
    %c0_i32_0 = arith.constant 0 : i32
    %c0_i32_1 = arith.constant 0 : i32
    return %arg0, %c0_i32, %c0_i32_0 : i32, i32, i32
  }
  func.func @transform_1(%arg0: i32) -> (i32, i32) {
    %c0_i32 = arith.constant 0 : i32
    %c0_i32_0 = arith.constant 0 : i32
    %c0_i32_1 = arith.constant 0 : i32
    return %c0_i32, %c0_i32_0 : i32, i32
  }
  func.func @transform_2(%arg0: i32) -> (i32, i32) {
    %c0_i32 = arith.constant 0 : i32
    %c0_i32_0 = arith.constant 0 : i32
    %c0_i32_1 = arith.constant 0 : i32
    return %c0_i32, %c0_i32_0 : i32, i32
  }
  func.func @transform_3(%arg0: i32) -> (i32, i32) {
    %c0_i32 = arith.constant 0 : i32
    %c0_i32_0 = arith.constant 0 : i32
    %c0_i32_1 = arith.constant 0 : i32
    return %c0_i32, %c0_i32_0 : i32, i32
  }
  func.func @transform_4(%arg0: i32) -> (i32, i32) {
    %c0_i32 = arith.constant 0 : i32
    %c0_i32_0 = arith.constant 0 : i32
    %c0_i32_1 = arith.constant 0 : i32
    return %c0_i32, %c0_i32_0 : i32, i32
  }
  func.func @transform_5(%arg0: i32) -> (i32, i32) {
    %c0_i32 = arith.constant 0 : i32
    %c0_i32_0 = arith.constant 0 : i32
    %c0_i32_1 = arith.constant 0 : i32
    return %c0_i32, %c0_i32_0 : i32, i32
  }
  func.func @transform_6(%arg0: i32) -> (i32, i32) {
    %c0_i32 = arith.constant 0 : i32
    %c0_i32_0 = arith.constant 0 : i32
    %c0_i32_1 = arith.constant 0 : i32
    return %c0_i32, %c0_i32_0 : i32, i32
  }
  func.func @transform_7(%arg0: i32) -> (i32, i32) {
    %c0_i32 = arith.constant 0 : i32
    %c0_i32_0 = arith.constant 0 : i32
    %c0_i32_1 = arith.constant 0 : i32
    return %c0_i32, %c0_i32_0 : i32, i32
  }
  func.func @transform_8(%arg0: i32) -> (i32, i32) {
    %c0_i32 = arith.constant 0 : i32
    %c0_i32_0 = arith.constant 0 : i32
    %c0_i32_1 = arith.constant 0 : i32
    return %c0_i32, %c0_i32_0 : i32, i32
  }
  func.func @transform_9(%arg0: i32) -> (i32, i32) {
    %c0_i32 = arith.constant 0 : i32
    %c0_i32_0 = arith.constant 0 : i32
    %c0_i32_1 = arith.constant 0 : i32
    return %c0_i32, %c0_i32_0 : i32, i32
  }
  func.func @transform_10(%arg0: i32) -> (i32, i32) {
    %c0_i32 = arith.constant 0 : i32
    %c0_i32_0 = arith.constant 0 : i32
    %c0_i32_1 = arith.constant 0 : i32
    return %c0_i32, %c0_i32_0 : i32, i32
  }
  func.func @transform_11(%arg0: i32) -> (i32, i32) {
    %c0_i32 = arith.constant 0 : i32
    %c0_i32_0 = arith.constant 0 : i32
    %c0_i32_1 = arith.constant 0 : i32
    return %c0_i32, %c0_i32_0 : i32, i32
  }
  func.func @transform_12(%arg0: i32) -> (i32, i32) {
    %c0_i32 = arith.constant 0 : i32
    %c0_i32_0 = arith.constant 0 : i32
    %c0_i32_1 = arith.constant 0 : i32
    return %c0_i32, %c0_i32_0 : i32, i32
  }
  func.func @transform_13(%arg0: i32) -> (i32, i32, i32) {
    %c0_i32 = arith.constant 0 : i32
    %c0_i32_0 = arith.constant 0 : i32
    %c0_i32_1 = arith.constant 0 : i32
    return %arg0, %c0_i32, %c0_i32_0 : i32, i32, i32
  }
}

</mosaic_0001>

<llo_original>
// kernel: tpu_custom_call.1
$region0: #{tpu_custom_call.1}
  #allocation0 [shape = 'u32[]', space=smem, size = 0x4, offset = 0x4, fixed_abs, tag = 'smem constant byte address 0x4 - core index']
  #allocation1 [shape = 'u32[144,128]{1,0:T(1,128)}', space=vmem, size = 0x12000, scoped, tag = 'internal scratch']
  %s0 = inlined_call_operand.vmem [shape: f32[2,8,32], index: 0, kind: input, shape index: {}]
  %s1 = inlined_call_operand.vmem [shape: bf16[32,96], index: 1, kind: input, shape index: {}]
  %s2 = inlined_call_operand.vmem [shape: f32[1,96], index: 2, kind: input, shape index: {}]
  %s3 = inlined_call_operand.vmem [shape: bf16[32,32], index: 3, kind: input, shape index: {}]
  %s4 = inlined_call_operand.vmem [shape: f32[1,32], index: 4, kind: input, shape index: {}]
  %s5 = inlined_call_operand.vmem [shape: f32[1,32], index: 5, kind: input, shape index: {}]
  %s6 = inlined_call_operand.vmem [shape: f32[1,32], index: 6, kind: input, shape index: {}]
  %s7 = inlined_call_operand.hbm [shape: bf16[32,64], index: 7, kind: input, shape index: {}]
  %s8 = inlined_call_operand.vmem [shape: f32[1,64], index: 8, kind: input, shape index: {}]
  %s9 = inlined_call_operand.vmem [shape: bf16[64,32], index: 9, kind: input, shape index: {}]
  %s10 = inlined_call_operand.vmem [shape: f32[1,32], index: 10, kind: input, shape index: {}]
  %s11 = inlined_call_operand.vmem [shape: f32[1,32], index: 11, kind: input, shape index: {}]
  %s12 = inlined_call_operand.vmem [shape: f32[1,32], index: 12, kind: input, shape index: {}]
  %s13 = inlined_call_operand.hbm [shape: f32[2,8,32], index: 13, kind: output, shape index: {}]
  %s14 = sld [smem:[#allocation0]]
  $region89: #{tpu_custom_call.1} parent=0
    _
  %s16 = ssub.s32 1, %s14
  %s17 = scalar_select 0, %s16, %s14
  $region1: #{tpu_custom_call.1} parent=0
    #allocation2 [shape = 'u8[8192]{0}', space=vmem, size = 0x2000, scoped, tag = 'input window, operand 7, single buffered']
    #allocation3 [shape = 's32[2]{0}', space=sflag, size = 0x8, scoped, tag = 'scoped memory for tpu_custom_call.1']
    #allocation4 [shape = 's32[2]{0}', space=sflag, size = 0x8, scoped, tag = 'scoped memory for tpu_custom_call.1']
    #allocation5 [shape = 'u8[8192]{0}', space=vmem, size = 0x2000, scoped, tag = 'output window, operand 0']
    %18 = vsyncpa [#allocation3], 0
    %19 = vsyncpa [#allocation4], 0
    %s20 = scalar_lea.sflag [#allocation4], 1
    %21 = vsyncpa %s20, 0
    loop: start=0, step=1, limit=4
    $region2: #{tpu_custom_call.1} parent=1 // loop_pre_header
      _
    $region3: #{tpu_custom_call.1} parent=1 // loop_header
      %s23 = sphi 0, %s27
      %p24 = scmp.ge.s32.totalorder %s23, 4
      %s33 = sphi 0, %s35
      %s36 = sphi 0, %s33
      %s37 = sphi 0, %s36
      %s53 = sphi 0, %s37
      %s57 = sphi 0, %s57
      %s59 = sphi 0, %s57
      %s60 = sphi 0, %s59
      %s74 = sphi 0, %s60
      %s78 = sphi 0, %s78
      %s80 = sphi 0, %s78
      %s81 = sphi 0, %s80
      %s95 = sphi 0, %s81
      %s99 = sphi 0, %s99
      %s101 = sphi 0, %s99
      %s102 = sphi 0, %s101
      %s116 = sphi 0, %s102
      %s120 = sphi 0, %s120
      %s122 = sphi 0, %s120
      %s123 = sphi 0, %s122
      %s137 = sphi 0, %s123
      %s141 = sphi 0, %s141
      %s143 = sphi 0, %s141
      %s144 = sphi 0, %s143
      %s158 = sphi 0, %s144
      %s162 = sphi 0, %s162
      %s164 = sphi 0, %s162
      %s165 = sphi 0, %s164
      %s179 = sphi 0, %s165
      %s183 = sphi 0, %s183
      %s185 = sphi 0, %s183
      %s186 = sphi 0, %s185
      %s200 = sphi 0, %s186
      %s204 = sphi 0, %s204
      %s206 = sphi 0, %s204
      %s207 = sphi 0, %s206
      %s221 = sphi 0, %s207
      %s225 = sphi 0, %s225
      %s227 = sphi 0, %s225
      %s228 = sphi 0, %s227
      %s242 = sphi 0, %s228
      %s246 = sphi 0, %s246
      %s248 = sphi 0, %s246
      %s249 = sphi 0, %s248
      %s263 = sphi 0, %s249
      %s267 = sphi 0, %s267
      %s269 = sphi 0, %s267
      %s270 = sphi 0, %s269
      %s284 = sphi 0, %s270
      %s288 = sphi 0, %s288
      %s290 = sphi 0, %s288
      %s291 = sphi 0, %s290
      %s305 = sphi 0, %s291
      %s311 = sphi 0, %s313
      %s314 = sphi 0, %s311
      %s315 = sphi 0, %s314
      %s331 = sphi 0, %s315
    $region4: #{tpu_custom_call.1} parent=1 // loop_header_branch
      %26 = sbr.rel (%p24) target = $region8
    $region5: #{tpu_custom_call.1} parent=1 // loop_body
      %s28 = ssub.s32 %s23, 1
      %s29 = ssub.s32 %s23, 2
      %s30 = sadd.s32 %s23, 1
      %s31 = ssub.s32 %s23, %s30
      %p32 = scmp.eq.s32.totalorder %s31, 0
      %s34 = sadd.s32 %s33, 1
      %s35 = scalar_select %p32, %s33, %s34
      %p38 = pneg %p32
      %p39 = scmp.eq.s32.totalorder %s23, 1
      %p40 = por %p38, %p39
      %p41 = scmp.ne.s32.totalorder %s33, %s36
      %p42 = scmp.eq.s32.totalorder %s23, 0
      %p43 = por %p41, %p42
      %p44 = scmp.ne.s32.totalorder %s33, %s36
      %p45 = scmp.eq.s32.totalorder %s28, 1
      %p46 = por %p44, %p45
      %p47 = scmp.ne.s32.totalorder %s36, %s37
      %p48 = scmp.eq.s32.totalorder %s28, 0
      %p49 = por %p47, %p48
      %p50 = scmp.ne.s32.totalorder %s36, %s37
      %p51 = scmp.eq.s32.totalorder %s29, 1
      %p52 = por %p50, %p51
      %p54 = scmp.ne.s32.totalorder %s37, %s53
      %p55 = scmp.eq.s32.totalorder %s29, 0
      %p56 = por %p54, %p55
      %s58 = sadd.s32 %s57, 1
      %p61 = scmp.eq.s32.totalorder %s23, 1
      %p62 = scmp.ne.s32.totalorder %s57, %s59
      %p63 = scmp.eq.s32.totalorder %s23, 0
      %p64 = por %p62, %p63
      %p65 = scmp.ne.s32.totalorder %s57, %s59
      %p66 = scmp.eq.s32.totalorder %s28, 1
      %p67 = por %p65, %p66
      %p68 = scmp.ne.s32.totalorder %s59, %s60
      %p69 = scmp.eq.s32.totalorder %s28, 0
      %p70 = por %p68, %p69
      %p71 = scmp.ne.s32.totalorder %s59, %s60
      %p72 = scmp.eq.s32.totalorder %s29, 1
      %p73 = por %p71, %p72
      %p75 = scmp.ne.s32.totalorder %s60, %s74
      %p76 = scmp.eq.s32.totalorder %s29, 0
      %p77 = por %p75, %p76
      %s79 = sadd.s32 %s78, 1
      %p82 = scmp.eq.s32.totalorder %s23, 1
      %p83 = scmp.ne.s32.totalorder %s78, %s80
      %p84 = scmp.eq.s32.totalorder %s23, 0
      %p85 = por %p83, %p84
      %p86 = scmp.ne.s32.totalorder %s78, %s80
      %p87 = scmp.eq.s32.totalorder %s28, 1
      %p88 = por %p86, %p87
      %p89 = scmp.ne.s32.totalorder %s80, %s81
      %p90 = scmp.eq.s32.totalorder %s28, 0
      %p91 = por %p89, %p90
      %p92 = scmp.ne.s32.totalorder %s80, %s81
      %p93 = scmp.eq.s32.totalorder %s29, 1
      %p94 = por %p92, %p93
      %p96 = scmp.ne.s32.totalorder %s81, %s95
      %p97 = scmp.eq.s32.totalorder %s29, 0
      %p98 = por %p96, %p97
      %s100 = sadd.s32 %s99, 1
      %p103 = scmp.eq.s32.totalorder %s23, 1
      %p104 = scmp.ne.s32.totalorder %s99, %s101
      %p105 = scmp.eq.s32.totalorder %s23, 0
      %p106 = por %p104, %p105
      %p107 = scmp.ne.s32.totalorder %s99, %s101
      %p108 = scmp.eq.s32.totalorder %s28, 1
      %p109 = por %p107, %p108
      %p110 = scmp.ne.s32.totalorder %s101, %s102
      %p111 = scmp.eq.s32.totalorder %s28, 0
      %p112 = por %p110, %p111
      %p113 = scmp.ne.s32.totalorder %s101, %s102
      %p114 = scmp.eq.s32.totalorder %s29, 1
      %p115 = por %p113, %p114
      %p117 = scmp.ne.s32.totalorder %s102, %s116
      %p118 = scmp.eq.s32.totalorder %s29, 0
      %p119 = por %p117, %p118
      %s121 = sadd.s32 %s120, 1
      %p124 = scmp.eq.s32.totalorder %s23, 1
      %p125 = scmp.ne.s32.totalorder %s120, %s122
      %p126 = scmp.eq.s32.totalorder %s23, 0
      %p127 = por %p125, %p126
      %p128 = scmp.ne.s32.totalorder %s120, %s122
      %p129 = scmp.eq.s32.totalorder %s28, 1
      %p130 = por %p128, %p129
      %p131 = scmp.ne.s32.totalorder %s122, %s123
      %p132 = scmp.eq.s32.totalorder %s28, 0
      %p133 = por %p131, %p132
      %p134 = scmp.ne.s32.totalorder %s122, %s123
      %p135 = scmp.eq.s32.totalorder %s29, 1
      %p136 = por %p134, %p135
      %p138 = scmp.ne.s32.totalorder %s123, %s137
      %p139 = scmp.eq.s32.totalorder %s29, 0
      %p140 = por %p138, %p139
      %s142 = sadd.s32 %s141, 1
      %p145 = scmp.eq.s32.totalorder %s23, 1
      %p146 = scmp.ne.s32.totalorder %s141, %s143
      %p147 = scmp.eq.s32.totalorder %s23, 0
      %p148 = por %p146, %p147
      %p149 = scmp.ne.s32.totalorder %s141, %s143
      %p150 = scmp.eq.s32.totalorder %s28, 1
      %p151 = por %p149, %p150
      %p152 = scmp.ne.s32.totalorder %s143, %s144
      %p153 = scmp.eq.s32.totalorder %s28, 0
      %p154 = por %p152, %p153
      %p155 = scmp.ne.s32.totalorder %s143, %s144
      %p156 = scmp.eq.s32.totalorder %s29, 1
      %p157 = por %p155, %p156
      %p159 = scmp.ne.s32.totalorder %s144, %s158
      %p160 = scmp.eq.s32.totalorder %s29, 0
      %p161 = por %p159, %p160
      %s163 = sadd.s32 %s162, 1
      %p166 = scmp.eq.s32.totalorder %s23, 1
      %p167 = scmp.ne.s32.totalorder %s162, %s164
      %p168 = scmp.eq.s32.totalorder %s23, 0
      %p169 = por %p167, %p168
      %p170 = scmp.ne.s32.totalorder %s162, %s164
      %p171 = scmp.eq.s32.totalorder %s28, 1
      %p172 = por %p170, %p171
      %p173 = scmp.ne.s32.totalorder %s164, %s165
      %p174 = scmp.eq.s32.totalorder %s28, 0
      %p175 = por %p173, %p174
      %p176 = scmp.ne.s32.totalorder %s164, %s165
      %p177 = scmp.eq.s32.totalorder %s29, 1
      %p178 = por %p176, %p177
      %p180 = scmp.ne.s32.totalorder %s165, %s179
      %p181 = scmp.eq.s32.totalorder %s29, 0
      %p182 = por %p180, %p181
      %s184 = sadd.s32 %s183, 1
      %p187 = scmp.eq.s32.totalorder %s23, 1
      %p188 = scmp.ne.s32.totalorder %s183, %s185
      %p189 = scmp.eq.s32.totalorder %s23, 0
      %p190 = por %p188, %p189
      %p191 = scmp.ne.s32.totalorder %s183, %s185
      %p192 = scmp.eq.s32.totalorder %s28, 1
      %p193 = por %p191, %p192
      %p194 = scmp.ne.s32.totalorder %s185, %s186
      %p195 = scmp.eq.s32.totalorder %s28, 0
      %p196 = por %p194, %p195
      %p197 = scmp.ne.s32.totalorder %s185, %s186
      %p198 = scmp.eq.s32.totalorder %s29, 1
      %p199 = por %p197, %p198
      %p201 = scmp.ne.s32.totalorder %s186, %s200
      %p202 = scmp.eq.s32.totalorder %s29, 0
      %p203 = por %p201, %p202
      %s205 = sadd.s32 %s204, 1
      %p208 = scmp.eq.s32.totalorder %s23, 1
      %p209 = scmp.ne.s32.totalorder %s204, %s206
      %p210 = scmp.eq.s32.totalorder %s23, 0
      %p211 = por %p209, %p210
      %p212 = scmp.ne.s32.totalorder %s204, %s206
      %p213 = scmp.eq.s32.totalorder %s28, 1
      %p214 = por %p212, %p213
      %p215 = scmp.ne.s32.totalorder %s206, %s207
      %p216 = scmp.eq.s32.totalorder %s28, 0
      %p217 = por %p215, %p216
      %p218 = scmp.ne.s32.totalorder %s206, %s207
      %p219 = scmp.eq.s32.totalorder %s29, 1
      %p220 = por %p218, %p219
      %p222 = scmp.ne.s32.totalorder %s207, %s221
      %p223 = scmp.eq.s32.totalorder %s29, 0
      %p224 = por %p222, %p223
      %s226 = sadd.s32 %s225, 1
      %p229 = scmp.eq.s32.totalorder %s23, 1
      %p230 = scmp.ne.s32.totalorder %s225, %s227
      %p231 = scmp.eq.s32.totalorder %s23, 0
      %p232 = por %p230, %p231
      %p233 = scmp.ne.s32.totalorder %s225, %s227
      %p234 = scmp.eq.s32.totalorder %s28, 1
      %p235 = por %p233, %p234
      %p236 = scmp.ne.s32.totalorder %s227, %s228
      %p237 = scmp.eq.s32.totalorder %s28, 0
      %p238 = por %p236, %p237
      %p239 = scmp.ne.s32.totalorder %s227, %s228
      %p240 = scmp.eq.s32.totalorder %s29, 1
      %p241 = por %p239, %p240
      %p243 = scmp.ne.s32.totalorder %s228, %s242
      %p244 = scmp.eq.s32.totalorder %s29, 0
      %p245 = por %p243, %p244
      %s247 = sadd.s32 %s246, 1
      %p250 = scmp.eq.s32.totalorder %s23, 1
      %p251 = scmp.ne.s32.totalorder %s246, %s248
      %p252 = scmp.eq.s32.totalorder %s23, 0
      %p253 = por %p251, %p252
      %p254 = scmp.ne.s32.totalorder %s246, %s248
      %p255 = scmp.eq.s32.totalorder %s28, 1
      %p256 = por %p254, %p255
      %p257 = scmp.ne.s32.totalorder %s248, %s249
      %p258 = scmp.eq.s32.totalorder %s28, 0
      %p259 = por %p257, %p258
      %p260 = scmp.ne.s32.totalorder %s248, %s249
      %p261 = scmp.eq.s32.totalorder %s29, 1
      %p262 = por %p260, %p261
      %p264 = scmp.ne.s32.totalorder %s249, %s263
      %p265 = scmp.eq.s32.totalorder %s29, 0
      %p266 = por %p264, %p265
      %s268 = sadd.s32 %s267, 1
      %p271 = scmp.eq.s32.totalorder %s23, 1
      %p272 = scmp.ne.s32.totalorder %s267, %s269
      %p273 = scmp.eq.s32.totalorder %s23, 0
      %p274 = por %p272, %p273
      %p275 = scmp.ne.s32.totalorder %s267, %s269
      %p276 = scmp.eq.s32.totalorder %s28, 1
      %p277 = por %p275, %p276
      %p278 = scmp.ne.s32.totalorder %s269, %s270
      %p279 = scmp.eq.s32.totalorder %s28, 0
      %p280 = por %p278, %p279
      %p281 = scmp.ne.s32.totalorder %s269, %s270
      %p282 = scmp.eq.s32.totalorder %s29, 1
      %p283 = por %p281, %p282
      %p285 = scmp.ne.s32.totalorder %s270, %s284
      %p286 = scmp.eq.s32.totalorder %s29, 0
      %p287 = por %p285, %p286
      %s289 = sadd.s32 %s288, 1
      %p292 = scmp.eq.s32.totalorder %s23, 1
      %p293 = scmp.ne.s32.totalorder %s288, %s290
      %p294 = scmp.eq.s32.totalorder %s23, 0
      %p295 = por %p293, %p294
      %p296 = scmp.ne.s32.totalorder %s288, %s290
      %p297 = scmp.eq.s32.totalorder %s28, 1
      %p298 = por %p296, %p297
      %p299 = scmp.ne.s32.totalorder %s290, %s291
      %p300 = scmp.eq.s32.totalorder %s28, 0
      %p301 = por %p299, %p300
      %p302 = scmp.ne.s32.totalorder %s290, %s291
      %p303 = scmp.eq.s32.totalorder %s29, 1
      %p304 = por %p302, %p303
      %p306 = scmp.ne.s32.totalorder %s291, %s305
      %p307 = scmp.eq.s32.totalorder %s29, 0
      %p308 = por %p306, %p307
      %s309 = ssub.s32 %s23, %s30
      %p310 = scmp.eq.s32.totalorder %s309, 0
      %s312 = sadd.s32 %s311, 1
      %s313 = scalar_select %p310, %s311, %s312
      %p316 = pneg %p310
      %p317 = scmp.eq.s32.totalorder %s23, 1
      %p318 = por %p316, %p317
      %p319 = scmp.ne.s32.totalorder %s311, %s314
      %p320 = scmp.eq.s32.totalorder %s23, 0
      %p321 = por %p319, %p320
      %p322 = scmp.ne.s32.totalorder %s311, %s314
      %p323 = scmp.eq.s32.totalorder %s28, 1
      %p324 = por %p322, %p323
      %p325 = scmp.ne.s32.totalorder %s314, %s315
      %p326 = scmp.eq.s32.totalorder %s28, 0
      %p327 = por %p325, %p326
      %p328 = scmp.ne.s32.totalorder %s314, %s315
      %p329 = scmp.eq.s32.totalorder %s29, 1
      %p330 = por %p328, %p329
      %p332 = scmp.ne.s32.totalorder %s315, %s331
      %p333 = scmp.eq.s32.totalorder %s29, 0
      %p334 = por %p332, %p333
      %p335 = scmp.le.s32.totalorder 1, %s23
      %p336 = scmp.lt.s32.totalorder %s23, 3
      %p337 = pnand %p335, %p336
      %p338 = pneg %p337
      // Predicated region
      $region9: #{tpu_custom_call.1} parent=5 // pred_check
        _
      $region10: #{tpu_custom_call.1} parent=5 // pred_check_branch
        %340 = sbr.rel (%p337) target = $region12
      $region11: #{tpu_custom_call.1} parent=5 // pred_region
        %s341 = ssub.s32 %s23, 1
        // Predicated region
        $region13: #{tpu_custom_call.1} parent=11 // pred_check
          %p342 = pneg %p70
        $region14: #{tpu_custom_call.1} parent=11 // pred_check_branch
          %344 = sbr.rel (%p342) target = $region16
        $region15: #{tpu_custom_call.1} parent=11 // pred_region
          _
        $region16: #{tpu_custom_call.1} parent=11 // pred_fallthru
          _
        // Predicated region
        $region17: #{tpu_custom_call.1} parent=11 // pred_check
          %p345 = pneg %p91
        $region18: #{tpu_custom_call.1} parent=11 // pred_check_branch
          %347 = sbr.rel (%p345) target = $region20
        $region19: #{tpu_custom_call.1} parent=11 // pred_region
          _
        $region20: #{tpu_custom_call.1} parent=11 // pred_fallthru
          _
        // Predicated region
        $region21: #{tpu_custom_call.1} parent=11 // pred_check
          %p348 = pneg %p112
        $region22: #{tpu_custom_call.1} parent=11 // pred_check_branch
          %350 = sbr.rel (%p348) target = $region24
        $region23: #{tpu_custom_call.1} parent=11 // pred_region
          _
        $region24: #{tpu_custom_call.1} parent=11 // pred_fallthru
          _
        // Predicated region
        $region25: #{tpu_custom_call.1} parent=11 // pred_check
          %p351 = pneg %p133
        $region26: #{tpu_custom_call.1} parent=11 // pred_check_branch
          %353 = sbr.rel (%p351) target = $region28
        $region27: #{tpu_custom_call.1} parent=11 // pred_region
          _
        $region28: #{tpu_custom_call.1} parent=11 // pred_fallthru
          _
        // Predicated region
        $region29: #{tpu_custom_call.1} parent=11 // pred_check
          %p354 = pneg %p154
        $region30: #{tpu_custom_call.1} parent=11 // pred_check_branch
          %356 = sbr.rel (%p354) target = $region32
        $region31: #{tpu_custom_call.1} parent=11 // pred_region
          _
        $region32: #{tpu_custom_call.1} parent=11 // pred_fallthru
          _
        // Predicated region
        $region33: #{tpu_custom_call.1} parent=11 // pred_check
          %p357 = pneg %p175
        $region34: #{tpu_custom_call.1} parent=11 // pred_check_branch
          %359 = sbr.rel (%p357) target = $region36
        $region35: #{tpu_custom_call.1} parent=11 // pred_region
          _
        $region36: #{tpu_custom_call.1} parent=11 // pred_fallthru
          _
        // Predicated region
        $region37: #{tpu_custom_call.1} parent=11 // pred_check
          %p360 = pneg %p196
        $region38: #{tpu_custom_call.1} parent=11 // pred_check_branch
          %362 = sbr.rel (%p360) target = $region40
        $region39: #{tpu_custom_call.1} parent=11 // pred_region
          %s364 = ssub.s32 256, 256
          %365 = vsyncadd [#allocation3], %s364
          %s366 = sshll.u32 [#allocation2], 4
          %s367 = int_to_ptr.vmem [resolvable:$true] %s366
          %372 = dma.hbm_to_vmem [thread:$0]  %s7, 256, %s367, [#allocation3], 64, 64, 4
        $region40: #{tpu_custom_call.1} parent=11 // pred_fallthru
          _
        // Predicated region
        $region41: #{tpu_custom_call.1} parent=11 // pred_check
          %p373 = pneg %p217
        $region42: #{tpu_custom_call.1} parent=11 // pred_check_branch
          %375 = sbr.rel (%p373) target = $region44
        $region43: #{tpu_custom_call.1} parent=11 // pred_region
          _
        $region44: #{tpu_custom_call.1} parent=11 // pred_fallthru
          _
        // Predicated region
        $region45: #{tpu_custom_call.1} parent=11 // pred_check
          %p376 = pneg %p238
        $region46: #{tpu_custom_call.1} parent=11 // pred_check_branch
          %378 = sbr.rel (%p376) target = $region48
        $region47: #{tpu_custom_call.1} parent=11 // pred_region
          _
        $region48: #{tpu_custom_call.1} parent=11 // pred_fallthru
          _
        // Predicated region
        $region49: #{tpu_custom_call.1} parent=11 // pred_check
          %p379 = pneg %p259
        $region50: #{tpu_custom_call.1} parent=11 // pred_check_branch
          %381 = sbr.rel (%p379) target = $region52
        $region51: #{tpu_custom_call.1} parent=11 // pred_region
          _
        $region52: #{tpu_custom_call.1} parent=11 // pred_fallthru
          _
        // Predicated region
        $region53: #{tpu_custom_call.1} parent=11 // pred_check
          %p382 = pneg %p280
        $region54: #{tpu_custom_call.1} parent=11 // pred_check_branch
          %384 = sbr.rel (%p382) target = $region56
        $region55: #{tpu_custom_call.1} parent=11 // pred_region
          _
        $region56: #{tpu_custom_call.1} parent=11 // pred_fallthru
          _
        // Predicated region
        $region57: #{tpu_custom_call.1} parent=11 // pred_check
          %p385 = pneg %p301
        $region58: #{tpu_custom_call.1} parent=11 // pred_check_branch
          %387 = sbr.rel (%p385) target = $region60
        $region59: #{tpu_custom_call.1} parent=11 // pred_region
          _
        $region60: #{tpu_custom_call.1} parent=11 // pred_fallthru
          _
      $region12: #{tpu_custom_call.1} parent=5 // pred_fallthru
        _
      %p388 = scmp.lt.s32.totalorder %s23, 2
      // Predicated region
      $region61: #{tpu_custom_call.1} parent=5 // pred_check
        %p389 = pneg %p388
      $region62: #{tpu_custom_call.1} parent=5 // pred_check_branch
        %391 = sbr.rel (%p389) target = $region64
      $region63: #{tpu_custom_call.1} parent=5 // pred_region
        // Predicated region
        $region65: #{tpu_custom_call.1} parent=63 // pred_check
          %p392 = pneg %p43
        $region66: #{tpu_custom_call.1} parent=63 // pred_check_branch
          %394 = sbr.rel (%p392) target = $region68
        $region67: #{tpu_custom_call.1} parent=63 // pred_region
          %p395 = scmp.lt.s32.totalorder %s23, 1
          %s396 = scalar_select %p395, %s23, 1
          %s397 = smul.addr %s396, 8
          %s398 = scalar_lea.vmem %s0, %s397
        $region68: #{tpu_custom_call.1} parent=63 // pred_fallthru
          _
      $region64: #{tpu_custom_call.1} parent=5 // pred_fallthru
        _
      %p399 = scmp.le.s32.totalorder 1, %s23
      %p400 = scmp.lt.s32.totalorder %s23, 3
      %p401 = pnand %p399, %p400
      %p402 = pneg %p401
      // Predicated region
      $region69: #{tpu_custom_call.1} parent=5 // pred_check
        _
      $region70: #{tpu_custom_call.1} parent=5 // pred_check_branch
        %404 = sbr.rel (%p401) target = $region72
      $region71: #{tpu_custom_call.1} parent=5 // pred_region
        %s405 = ssub.s32 %s23, 1
        // Predicated region
        $region73: #{tpu_custom_call.1} parent=71 // pred_check
          %p406 = pneg %p196
        $region74: #{tpu_custom_call.1} parent=71 // pred_check_branch
          %408 = sbr.rel (%p406) target = $region76
        $region75: #{tpu_custom_call.1} parent=71 // pred_region
          %409 = dma.done [#allocation3], 256
        $region76: #{tpu_custom_call.1} parent=71 // pred_fallthru
          _
        %p410 = scmp.lt.s32.totalorder %s28, 1
        %s411 = scalar_select %p410, %s28, 1
        %s412 = smul.addr %s411, 8
        %s413 = scalar_lea.vmem %s0, %s412
        %p414 = pneg %p49
        %p415 = pneg %p46
        %p416 = pneg %p70
        %p417 = pneg %p67
        %p418 = pneg %p91
        %p419 = pneg %p88
        %p420 = pneg %p112
        %p421 = pneg %p109
        %p422 = pneg %p133
        %p423 = pneg %p130
        %p424 = pneg %p154
        %p425 = pneg %p151
        %p426 = pneg %p175
        %p427 = pneg %p172
        %p428 = pneg %p196
        %p429 = pneg %p193
        %p430 = pneg %p217
        %p431 = pneg %p214
        %p432 = pneg %p238
        %p433 = pneg %p235
        %p434 = pneg %p259
        %p435 = pneg %p256
        %p436 = pneg %p280
        %p437 = pneg %p277
        %p438 = pneg %p301
        %p439 = pneg %p298
        %p440 = pneg %p327
        %p441 = pneg %p324
        %s442 = sand.u32 %s314, 1
        %s443 = scalar_lea.sflag [#allocation4], %s442
        %s444 = sand.u32 %s314, 1
        %s445 = smul.addr %s444, 8
        %s446 = scalar_lea.vmem [#allocation5], %s445
        %p447 = scmp.lt.s32.totalorder %s28, 1
        %s448 = scalar_select %p447, %s28, 1
        %s449 = smul.addr %s448, 8
        %s450 = scalar_lea.vmem %s0, %s449
        %v452 = vld [vmem:[%s450] sm:$0xff]
        %v453 = vpack.c.bf16 %v452, %v452
        %v454 = vld [vmem:[%s1] sm:$0xf]
        %v455 = vld [vmem:[%s1 + $0x4] sm:$0xf]
        %v456 = vld [vmem:[%s1 + $0x8] sm:$0xf]
        %v457 = vld [vmem:[%s1 + $0xc] sm:$0xf]
        %v458 = vld [vmem:[%s2] sm:$0x1]
        %v460 = vlaneseq
        %v461 = vshrl.u32 %v460, 7
        %v462 = vsub.s32 0, %v461
        %v463 = vrot.slane %v458, %v462
        %v469 = vunpack.c.l.b16 %v454
        %v470 = vunpack.c.l.b16 %v455
        %v471 = vunpack.c.l.b16 %v456
        %v472 = vunpack.c.l.b16 %v457
        %v473 = vpack.c.b16 %v470, %v469
        %v474 = vpack.c.b16 %v472, %v471
        %vm477 = vcmask 261120
        %v479 = vsel %vm477, %v453, 0
        %481 = vmatprep.subr.bf16.mxu0 0
        %482 = vmatpush1.bf16.msra.mxu0 %v473
        %483 = vmatprep.subr.bf16.mxu0 0
        %484 = vmatpush1.bf16.msra.mxu0 %v474
        %485 = vmatprep.subr.bf16.mxu0 0
        %486 = vmatpush1.bf16.msra.mxu0 0
        %487 = vmatprep.subr.bf16.mxu0 0
        %488 = vmatpush1.bf16.msra.mxu0 0
        %489 = vmatprep.subr.bf16.mxu0 0
        %490 = vmatpush1.bf16.msra.mxu0 0
        %491 = vmatprep.subr.bf16.mxu0 0
        %492 = vmatpush1.bf16.msra.mxu0 0
        %493 = vmatprep.subr.bf16.mxu0 0
        %494 = vmatpush1.bf16.msra.mxu0 0
        %495 = vmatprep.subr.bf16.mxu0 0
        %496 = vmatpush1.bf16.msra.mxu0 0
        %497 = vmatprep.subr.bf16.mxu0 0
        %498 = vmatpush1.bf16.msra.mxu0 0
        %499 = vmatprep.subr.bf16.mxu0 0
        %500 = vmatpush1.bf16.msra.mxu0 0
        %501 = vmatprep.subr.bf16.mxu0 0
        %502 = vmatpush1.bf16.msra.mxu0 0
        %503 = vmatprep.subr.bf16.mxu0 0
        %504 = vmatpush1.bf16.msra.mxu0 0
        %505 = vmatprep.subr.bf16.mxu0 0
        %506 = vmatpush1.bf16.msra.mxu0 0
        %507 = vmatprep.subr.bf16.mxu0 0
        %508 = vmatpush1.bf16.msra.mxu0 0
        %509 = vmatprep.subr.bf16.mxu0 0
        %510 = vmatpush1.bf16.msra.mxu0 0
        %511 = vmatprep.subr.bf16.mxu0 0
        %512 = vmatpush1.bf16.msra.mxu0 0
        %513 = vmatprep.mubr.bf16.mxu0 0
        %514 = vmatmul.mubr.bf16.gmra.mrb[0].mxu0 %v479
        %v515 = vpop.f32.mrb[0].mxu0
        %v516 = vadd.f32 %v463, %v515
        %v517 = vpop.f32.mrb[0].mxu0
        %v518 = vpop.f32.mrb[0].mxu0
        %v519 = vpop.f32.mrb[0].mxu0
        %520 = vdwg.mxu0
        %522 = vrot.lane.b32.xlu0 %v516, 120
        %v523 = vpop.permute.xlu0 %522
        %525 = vrot.lane.b32.xlu0 %v516, 112
        %v526 = vpop.permute.xlu0 %525
        %528 = vrot.lane.b32.xlu0 %v516, 104
        %v529 = vpop.permute.xlu0 %528
        %v531 = vpack.c.bf16 %v516, %v516
        %v532 = vpack.c.bf16 %v523, %v523
        %v533 = vpack.c.bf16 %v526, %v526
        %v534 = vpack.c.bf16 %v529, %v529
        %536 = vrot.lane.b32.xlu0 %v531, 96
        %v537 = vpop.permute.xlu0 %536
        %vm538 = vcmask 64512
        %v540 = vsel %vm538, %v531, 0
        %v543 = vsel %vm538, %v537, 0
        %545 = vmatprep.subr.bf16.mxu0 0
        %546 = vmatpush1.bf16.xpose.msra.mxu0 %v543
        %547 = vmatprep.subr.bf16.mxu0 0
        %548 = vmatpush1.bf16.xpose.msra.mxu0 0
        %549 = vmatprep.subr.bf16.mxu0 0
        %550 = vmatpush1.bf16.xpose.msra.mxu0 0
        %551 = vmatprep.subr.bf16.mxu0 0
        %552 = vmatpush1.bf16.xpose.msra.mxu0 0
        %553 = vmatprep.subr.bf16.mxu0 0
        %554 = vmatpush1.bf16.xpose.msra.mxu0 0
        %555 = vmatprep.subr.bf16.mxu0 0
        %556 = vmatpush1.bf16.xpose.msra.mxu0 0
        %557 = vmatprep.subr.bf16.mxu0 0
        %558 = vmatpush1.bf16.xpose.msra.mxu0 0
        %559 = vmatprep.subr.bf16.mxu0 0
        %560 = vmatpush1.bf16.xpose.msra.mxu0 0
        %561 = vmatprep.subr.bf16.mxu0 0
        %562 = vmatpush1.bf16.xpose.msra.mxu0 0
        %563 = vmatprep.subr.bf16.mxu0 0
        %564 = vmatpush1.bf16.xpose.msra.mxu0 0
        %565 = vmatprep.subr.bf16.mxu0 0
        %566 = vmatpush1.bf16.xpose.msra.mxu0 0
        %567 = vmatprep.subr.bf16.mxu0 0
        %568 = vmatpush1.bf16.xpose.msra.mxu0 0
        %569 = vmatprep.subr.bf16.mxu0 0
        %570 = vmatpush1.bf16.xpose.msra.mxu0 0
        %571 = vmatprep.subr.bf16.mxu0 0
        %572 = vmatpush1.bf16.xpose.msra.mxu0 0
        %573 = vmatprep.subr.bf16.mxu0 0
        %574 = vmatpush1.bf16.xpose.msra.mxu0 0
        %575 = vmatprep.subr.bf16.mxu0 0
        %576 = vmatpush1.bf16.xpose.msra.mxu0 0
        %577 = vmatprep.mubr.bf16.mxu0 0
        %578 = vmatmul.mubr.bf16.gmra.mrb[0].mxu0 %v540
        %v579 = vpop.f32.mrb[0].mxu0
        %v580 = vadd.f32 0.0, %v579
        %v581 = vpop.f32.mrb[0].mxu0
        %v582 = vpop.f32.mrb[0].mxu0
        %v583 = vpop.f32.mrb[0].mxu0
        %584 = vdwg.mxu0
        %586 = vrot.lane.b32.xlu0 %v532, 96
        %v587 = vpop.permute.xlu0 %586
        %v589 = vsel %vm538, %v532, 0
        %v592 = vsel %vm538, %v587, 0
        %594 = vmatprep.subr.bf16.mxu0 0
        %595 = vmatpush1.bf16.xpose.msra.mxu0 %v592
        %596 = vmatprep.subr.bf16.mxu0 0
        %597 = vmatpush1.bf16.xpose.msra.mxu0 0
        %598 = vmatprep.subr.bf16.mxu0 0
        %599 = vmatpush1.bf16.xpose.msra.mxu0 0
        %600 = vmatprep.subr.bf16.mxu0 0
        %601 = vmatpush1.bf16.xpose.msra.mxu0 0
        %602 = vmatprep.subr.bf16.mxu0 0
        %603 = vmatpush1.bf16.xpose.msra.mxu0 0
        %604 = vmatprep.subr.bf16.mxu0 0
        %605 = vmatpush1.bf16.xpose.msra.mxu0 0
        %606 = vmatprep.subr.bf16.mxu0 0
        %607 = vmatpush1.bf16.xpose.msra.mxu0 0
        %608 = vmatprep.subr.bf16.mxu0 0
        %609 = vmatpush1.bf16.xpose.msra.mxu0 0
        %610 = vmatprep.subr.bf16.mxu0 0
        %611 = vmatpush1.bf16.xpose.msra.mxu0 0
        %612 = vmatprep.subr.bf16.mxu0 0
        %613 = vmatpush1.bf16.xpose.msra.mxu0 0
        %614 = vmatprep.subr.bf16.mxu0 0
        %615 = vmatpush1.bf16.xpose.msra.mxu0 0
        %616 = vmatprep.subr.bf16.mxu0 0
        %617 = vmatpush1.bf16.xpose.msra.mxu0 0
        %618 = vmatprep.subr.bf16.mxu0 0
        %619 = vmatpush1.bf16.xpose.msra.mxu0 0
        %620 = vmatprep.subr.bf16.mxu0 0
        %621 = vmatpush1.bf16.xpose.msra.mxu0 0
        %622 = vmatprep.subr.bf16.mxu0 0
        %623 = vmatpush1.bf16.xpose.msra.mxu0 0
        %624 = vmatprep.subr.bf16.mxu0 0
        %625 = vmatpush1.bf16.xpose.msra.mxu0 0
        %626 = vmatprep.mubr.bf16.mxu0 0
        %627 = vmatmul.mubr.bf16.gmra.mrb[0].mxu0 %v589
        %v628 = vpop.f32.mrb[0].mxu0
        %v629 = vadd.f32 0.0, %v628
        %v630 = vpop.f32.mrb[0].mxu0
        %v631 = vpop.f32.mrb[0].mxu0
        %v632 = vpop.f32.mrb[0].mxu0
        %633 = vdwg.mxu0
        %635 = vrot.lane.b32.xlu0 %v533, 96
        %v636 = vpop.permute.xlu0 %635
        %v638 = vsel %vm538, %v533, 0
        %v641 = vsel %vm538, %v636, 0
        %643 = vmatprep.subr.bf16.mxu0 0
        %644 = vmatpush1.bf16.xpose.msra.mxu0 %v641
        %645 = vmatprep.subr.bf16.mxu0 0
        %646 = vmatpush1.bf16.xpose.msra.mxu0 0
        %647 = vmatprep.subr.bf16.mxu0 0
        %648 = vmatpush1.bf16.xpose.msra.mxu0 0
        %649 = vmatprep.subr.bf16.mxu0 0
        %650 = vmatpush1.bf16.xpose.msra.mxu0 0
        %651 = vmatprep.subr.bf16.mxu0 0
        %652 = vmatpush1.bf16.xpose.msra.mxu0 0
        %653 = vmatprep.subr.bf16.mxu0 0
        %654 = vmatpush1.bf16.xpose.msra.mxu0 0
        %655 = vmatprep.subr.bf16.mxu0 0
        %656 = vmatpush1.bf16.xpose.msra.mxu0 0
        %657 = vmatprep.subr.bf16.mxu0 0
        %658 = vmatpush1.bf16.xpose.msra.mxu0 0
        %659 = vmatprep.subr.bf16.mxu0 0
        %660 = vmatpush1.bf16.xpose.msra.mxu0 0
        %661 = vmatprep.subr.bf16.mxu0 0
        %662 = vmatpush1.bf16.xpose.msra.mxu0 0
        %663 = vmatprep.subr.bf16.mxu0 0
        %664 = vmatpush1.bf16.xpose.msra.mxu0 0
        %665 = vmatprep.subr.bf16.mxu0 0
        %666 = vmatpush1.bf16.xpose.msra.mxu0 0
        %667 = vmatprep.subr.bf16.mxu0 0
        %668 = vmatpush1.bf16.xpose.msra.mxu0 0
        %669 = vmatprep.subr.bf16.mxu0 0
        %670 = vmatpush1.bf16.xpose.msra.mxu0 0
        %671 = vmatprep.subr.bf16.mxu0 0
        %672 = vmatpush1.bf16.xpose.msra.mxu0 0
        %673 = vmatprep.subr.bf16.mxu0 0
        %674 = vmatpush1.bf16.xpose.msra.mxu0 0
        %675 = vmatprep.mubr.bf16.mxu0 0
        %676 = vmatmul.mubr.bf16.gmra.mrb[0].mxu0 %v638
        %v677 = vpop.f32.mrb[0].mxu0
        %v678 = vadd.f32 0.0, %v677
        %v679 = vpop.f32.mrb[0].mxu0
        %v680 = vpop.f32.mrb[0].mxu0
        %v681 = vpop.f32.mrb[0].mxu0
        %682 = vdwg.mxu0
        %684 = vrot.lane.b32.xlu0 %v534, 96
        %v685 = vpop.permute.xlu0 %684
        %v687 = vsel %vm538, %v534, 0
        %v690 = vsel %vm538, %v685, 0
        %692 = vmatprep.subr.bf16.mxu0 0
        %693 = vmatpush1.bf16.xpose.msra.mxu0 %v690
        %694 = vmatprep.subr.bf16.mxu0 0
        %695 = vmatpush1.bf16.xpose.msra.mxu0 0
        %696 = vmatprep.subr.bf16.mxu0 0
        %697 = vmatpush1.bf16.xpose.msra.mxu0 0
        %698 = vmatprep.subr.bf16.mxu0 0
        %699 = vmatpush1.bf16.xpose.msra.mxu0 0
        %700 = vmatprep.subr.bf16.mxu0 0
        %701 = vmatpush1.bf16.xpose.msra.mxu0 0
        %702 = vmatprep.subr.bf16.mxu0 0
        %703 = vmatpush1.bf16.xpose.msra.mxu0 0
        %704 = vmatprep.subr.bf16.mxu0 0
        %705 = vmatpush1.bf16.xpose.msra.mxu0 0
        %706 = vmatprep.subr.bf16.mxu0 0
        %707 = vmatpush1.bf16.xpose.msra.mxu0 0
        %708 = vmatprep.subr.bf16.mxu0 0
        %709 = vmatpush1.bf16.xpose.msra.mxu0 0
        %710 = vmatprep.subr.bf16.mxu0 0
        %711 = vmatpush1.bf16.xpose.msra.mxu0 0
        %712 = vmatprep.subr.bf16.mxu0 0
        %713 = vmatpush1.bf16.xpose.msra.mxu0 0
        %714 = vmatprep.subr.bf16.mxu0 0
        %715 = vmatpush1.bf16.xpose.msra.mxu0 0
        %716 = vmatprep.subr.bf16.mxu0 0
        %717 = vmatpush1.bf16.xpose.msra.mxu0 0
        %718 = vmatprep.subr.bf16.mxu0 0
        %719 = vmatpush1.bf16.xpose.msra.mxu0 0
        %720 = vmatprep.subr.bf16.mxu0 0
        %721 = vmatpush1.bf16.xpose.msra.mxu0 0
        %722 = vmatprep.subr.bf16.mxu0 0
        %723 = vmatpush1.bf16.xpose.msra.mxu0 0
        %724 = vmatprep.mubr.bf16.mxu0 0
        %725 = vmatmul.mubr.bf16.gmra.mrb[0].mxu0 %v687
        %v726 = vpop.f32.mrb[0].mxu0
        %v727 = vadd.f32 0.0, %v726
        %v728 = vpop.f32.mrb[0].mxu0
        %v729 = vpop.f32.mrb[0].mxu0
        %v730 = vpop.f32.mrb[0].mxu0
        %731 = vdwg.mxu0
        %v732 = vsel %vm538, %v580, -inf
        %733 = vmax.xlane.f32.xlu0 %v732
        %v734 = vpop.xlane.xlu0 %733
        %v735 = vsel %vm538, %v629, -inf
        %736 = vmax.xlane.f32.xlu0 %v735
        %v737 = vpop.xlane.xlu0 %736
        %v738 = vsel %vm538, %v678, -inf
        %739 = vmax.xlane.f32.xlu0 %v738
        %v740 = vpop.xlane.xlu0 %739
        %v741 = vsel %vm538, %v727, -inf
        %742 = vmax.xlane.f32.xlu0 %v741
        %v743 = vpop.xlane.xlu0 %742
        %v744 = vsub.f32 %v580, %v734
        %v745 = vsub.f32 %v629, %v737
        %v746 = vsub.f32 %v678, %v740
        %v747 = vsub.f32 %v727, %v743
        %v748 = vmul.f32 %v744, 1.442695
        %v749 = vpow.pop %v748
        %v750 = vmul.f32 %v745, 1.442695
        %v751 = vpow.pop %v750
        %v752 = vmul.f32 %v746, 1.442695
        %v753 = vpow.pop %v752
        %v754 = vmul.f32 %v747, 1.442695
        %v755 = vpow.pop %v754
        %v756 = vsel %vm538, %v749, 0.0
        %757 = vadd.xlane.f32.xlu0 %v756
        %v758 = vpop.xlane.xlu0 %757
        %v759 = vsel %vm538, %v751, 0.0
        %760 = vadd.xlane.f32.xlu0 %v759
        %v761 = vpop.xlane.xlu0 %760
        %v762 = vsel %vm538, %v753, 0.0
        %763 = vadd.xlane.f32.xlu0 %v762
        %v764 = vpop.xlane.xlu0 %763
        %v765 = vsel %vm538, %v755, 0.0
        %766 = vadd.xlane.f32.xlu0 %v765
        %v767 = vpop.xlane.xlu0 %766
        %v768 = vrcp.pop %v758
        %v769 = vrcp.pop %v761
        %v770 = vrcp.pop %v764
        %v771 = vrcp.pop %v767
        %v772 = vmul.f32 %v749, %v768
        %v773 = vmul.f32 %v751, %v769
        %v774 = vmul.f32 %v753, %v770
        %v775 = vmul.f32 %v755, %v771
        %v776 = vpack.c.bf16 %v772, %v772
        %v777 = vpack.c.bf16 %v773, %v773
        %v778 = vpack.c.bf16 %v774, %v774
        %v779 = vpack.c.bf16 %v775, %v775
        %780 = vrot.lane.b32.xlu0 %v531, 64
        %v781 = vpop.permute.xlu0 %780
        %v783 = vsel %vm538, %v776, 0
        %vm785 = vcmask 1043456
        %v787 = vsel %vm785, %v781, 0
        %789 = vmatprep.subr.bf16.mxu0 0
        %790 = vmatpush1.bf16.msra.mxu0 %v787
        %791 = vmatprep.subr.bf16.mxu0 0
        %792 = vmatpush1.bf16.msra.mxu0 0
        %793 = vmatprep.subr.bf16.mxu0 0
        %794 = vmatpush1.bf16.msra.mxu0 0
        %795 = vmatprep.subr.bf16.mxu0 0
        %796 = vmatpush1.bf16.msra.mxu0 0
        %797 = vmatprep.subr.bf16.mxu0 0
        %798 = vmatpush1.bf16.msra.mxu0 0
        %799 = vmatprep.subr.bf16.mxu0 0
        %800 = vmatpush1.bf16.msra.mxu0 0
        %801 = vmatprep.subr.bf16.mxu0 0
        %802 = vmatpush1.bf16.msra.mxu0 0
        %803 = vmatprep.subr.bf16.mxu0 0
        %804 = vmatpush1.bf16.msra.mxu0 0
        %805 = vmatprep.subr.bf16.mxu0 0
        %806 = vmatpush1.bf16.msra.mxu0 0
        %807 = vmatprep.subr.bf16.mxu0 0
        %808 = vmatpush1.bf16.msra.mxu0 0
        %809 = vmatprep.subr.bf16.mxu0 0
        %810 = vmatpush1.bf16.msra.mxu0 0
        %811 = vmatprep.subr.bf16.mxu0 0
        %812 = vmatpush1.bf16.msra.mxu0 0
        %813 = vmatprep.subr.bf16.mxu0 0
        %814 = vmatpush1.bf16.msra.mxu0 0
        %815 = vmatprep.subr.bf16.mxu0 0
        %816 = vmatpush1.bf16.msra.mxu0 0
        %817 = vmatprep.subr.bf16.mxu0 0
        %818 = vmatpush1.bf16.msra.mxu0 0
        %819 = vmatprep.subr.bf16.mxu0 0
        %820 = vmatpush1.bf16.msra.mxu0 0
        %821 = vmatprep.mubr.bf16.mxu0 0
        %822 = vmatmul.mubr.bf16.gmra.mrb[0].mxu0 %v783
        %v823 = vpop.f32.mrb[0].mxu0
        %v824 = vadd.f32 0.0, %v823
        %v825 = vpop.f32.mrb[0].mxu0
        %v826 = vpop.f32.mrb[0].mxu0
        %v827 = vpop.f32.mrb[0].mxu0
        %828 = vdwg.mxu0
        %829 = vrot.lane.b32.xlu0 %v532, 64
        %v830 = vpop.permute.xlu0 %829
        %v832 = vsel %vm538, %v777, 0
        %v835 = vsel %vm785, %v830, 0
        %837 = vmatprep.subr.bf16.mxu0 0
        %838 = vmatpush1.bf16.msra.mxu0 %v835
        %839 = vmatprep.subr.bf16.mxu0 0
        %840 = vmatpush1.bf16.msra.mxu0 0
        %841 = vmatprep.subr.bf16.mxu0 0
        %842 = vmatpush1.bf16.msra.mxu0 0
        %843 = vmatprep.subr.bf16.mxu0 0
        %844 = vmatpush1.bf16.msra.mxu0 0
        %845 = vmatprep.subr.bf16.mxu0 0
        %846 = vmatpush1.bf16.msra.mxu0 0
        %847 = vmatprep.subr.bf16.mxu0 0
        %848 = vmatpush1.bf16.msra.mxu0 0
        %849 = vmatprep.subr.bf16.mxu0 0
        %850 = vmatpush1.bf16.msra.mxu0 0
        %851 = vmatprep.subr.bf16.mxu0 0
        %852 = vmatpush1.bf16.msra.mxu0 0
        %853 = vmatprep.subr.bf16.mxu0 0
        %854 = vmatpush1.bf16.msra.mxu0 0
        %855 = vmatprep.subr.bf16.mxu0 0
        %856 = vmatpush1.bf16.msra.mxu0 0
        %857 = vmatprep.subr.bf16.mxu0 0
        %858 = vmatpush1.bf16.msra.mxu0 0
        %859 = vmatprep.subr.bf16.mxu0 0
        %860 = vmatpush1.bf16.msra.mxu0 0
        %861 = vmatprep.subr.bf16.mxu0 0
        %862 = vmatpush1.bf16.msra.mxu0 0
        %863 = vmatprep.subr.bf16.mxu0 0
        %864 = vmatpush1.bf16.msra.mxu0 0
        %865 = vmatprep.subr.bf16.mxu0 0
        %866 = vmatpush1.bf16.msra.mxu0 0
        %867 = vmatprep.subr.bf16.mxu0 0
        %868 = vmatpush1.bf16.msra.mxu0 0
        %869 = vmatprep.mubr.bf16.mxu0 0
        %870 = vmatmul.mubr.bf16.gmra.mrb[0].mxu0 %v832
        %v871 = vpop.f32.mrb[0].mxu0
        %v872 = vadd.f32 0.0, %v871
        %v873 = vpop.f32.mrb[0].mxu0
        %v874 = vpop.f32.mrb[0].mxu0
        %v875 = vpop.f32.mrb[0].mxu0
        %876 = vdwg.mxu0
        %877 = vrot.lane.b32.xlu0 %v533, 64
        %v878 = vpop.permute.xlu0 %877
        %v880 = vsel %vm538, %v778, 0
        %v883 = vsel %vm785, %v878, 0
        %885 = vmatprep.subr.bf16.mxu0 0
        %886 = vmatpush1.bf16.msra.mxu0 %v883
        %887 = vmatprep.subr.bf16.mxu0 0
        %888 = vmatpush1.bf16.msra.mxu0 0
        %889 = vmatprep.subr.bf16.mxu0 0
        %890 = vmatpush1.bf16.msra.mxu0 0
        %891 = vmatprep.subr.bf16.mxu0 0
        %892 = vmatpush1.bf16.msra.mxu0 0
        %893 = vmatprep.subr.bf16.mxu0 0
        %894 = vmatpush1.bf16.msra.mxu0 0
        %895 = vmatprep.subr.bf16.mxu0 0
        %896 = vmatpush1.bf16.msra.mxu0 0
        %897 = vmatprep.subr.bf16.mxu0 0
        %898 = vmatpush1.bf16.msra.mxu0 0
        %899 = vmatprep.subr.bf16.mxu0 0
        %900 = vmatpush1.bf16.msra.mxu0 0
        %901 = vmatprep.subr.bf16.mxu0 0
        %902 = vmatpush1.bf16.msra.mxu0 0
        %903 = vmatprep.subr.bf16.mxu0 0
        %904 = vmatpush1.bf16.msra.mxu0 0
        %905 = vmatprep.subr.bf16.mxu0 0
        %906 = vmatpush1.bf16.msra.mxu0 0
        %907 = vmatprep.subr.bf16.mxu0 0
        %908 = vmatpush1.bf16.msra.mxu0 0
        %909 = vmatprep.subr.bf16.mxu0 0
        %910 = vmatpush1.bf16.msra.mxu0 0
        %911 = vmatprep.subr.bf16.mxu0 0
        %912 = vmatpush1.bf16.msra.mxu0 0
        %913 = vmatprep.subr.bf16.mxu0 0
        %914 = vmatpush1.bf16.msra.mxu0 0
        %915 = vmatprep.subr.bf16.mxu0 0
        %916 = vmatpush1.bf16.msra.mxu0 0
        %917 = vmatprep.mubr.bf16.mxu0 0
        %918 = vmatmul.mubr.bf16.gmra.mrb[0].mxu0 %v880
        %v919 = vpop.f32.mrb[0].mxu0
        %v920 = vadd.f32 0.0, %v919
        %v921 = vpop.f32.mrb[0].mxu0
        %v922 = vpop.f32.mrb[0].mxu0
        %v923 = vpop.f32.mrb[0].mxu0
        %924 = vdwg.mxu0
        %925 = vrot.lane.b32.xlu0 %v534, 64
        %v926 = vpop.permute.xlu0 %925
        %v928 = vsel %vm538, %v779, 0
        %v931 = vsel %vm785, %v926, 0
        %933 = vmatprep.subr.bf16.mxu0 0
        %934 = vmatpush1.bf16.msra.mxu0 %v931
        %935 = vmatprep.subr.bf16.mxu0 0
        %936 = vmatpush1.bf16.msra.mxu0 0
        %937 = vmatprep.subr.bf16.mxu0 0
        %938 = vmatpush1.bf16.msra.mxu0 0
        %939 = vmatprep.subr.bf16.mxu0 0
        %940 = vmatpush1.bf16.msra.mxu0 0
        %941 = vmatprep.subr.bf16.mxu0 0
        %942 = vmatpush1.bf16.msra.mxu0 0
        %943 = vmatprep.subr.bf16.mxu0 0
        %944 = vmatpush1.bf16.msra.mxu0 0
        %945 = vmatprep.subr.bf16.mxu0 0
        %946 = vmatpush1.bf16.msra.mxu0 0
        %947 = vmatprep.subr.bf16.mxu0 0
        %948 = vmatpush1.bf16.msra.mxu0 0
        %949 = vmatprep.subr.bf16.mxu0 0
        %950 = vmatpush1.bf16.msra.mxu0 0
        %951 = vmatprep.subr.bf16.mxu0 0
        %952 = vmatpush1.bf16.msra.mxu0 0
        %953 = vmatprep.subr.bf16.mxu0 0
        %954 = vmatpush1.bf16.msra.mxu0 0
        %955 = vmatprep.subr.bf16.mxu0 0
        %956 = vmatpush1.bf16.msra.mxu0 0
        %957 = vmatprep.subr.bf16.mxu0 0
        %958 = vmatpush1.bf16.msra.mxu0 0
        %959 = vmatprep.subr.bf16.mxu0 0
        %960 = vmatpush1.bf16.msra.mxu0 0
        %961 = vmatprep.subr.bf16.mxu0 0
        %962 = vmatpush1.bf16.msra.mxu0 0
        %963 = vmatprep.subr.bf16.mxu0 0
        %964 = vmatpush1.bf16.msra.mxu0 0
        %965 = vmatprep.mubr.bf16.mxu0 0
        %966 = vmatmul.mubr.bf16.gmra.mrb[0].mxu0 %v928
        %v967 = vpop.f32.mrb[0].mxu0
        %v968 = vadd.f32 0.0, %v967
        %v969 = vpop.f32.mrb[0].mxu0
        %v970 = vpop.f32.mrb[0].mxu0
        %v971 = vpop.f32.mrb[0].mxu0
        %972 = vdwg.mxu0
        %974 = vrot.lane.b32.xlu0 %v872, 8
        %v975 = vpop.permute.xlu0 %974
        %978 = vrot.lane.b32.xlu0 %v920, 16
        %v979 = vpop.permute.xlu0 %978
        %982 = vrot.lane.b32.xlu0 %v968, 24
        %v983 = vpop.permute.xlu0 %982
        %v985 = vsel %vm538, %v824, %v975
        %vm986 = vcmask 130048
        %v987 = vsel %vm986, %v985, %v979
        %vm988 = vcmask 195584
        %v989 = vsel %vm988, %v987, %v983
        %v990 = vpack.c.bf16 %v989, %v989
        %v991 = vld [vmem:[%s3] sm:$0xf]
        %v992 = vld [vmem:[%s3 + $0x4] sm:$0xf]
        %v993 = vld [vmem:[%s3 + $0x8] sm:$0xf]
        %v994 = vld [vmem:[%s3 + $0xc] sm:$0xf]
        %v995 = vld [vmem:[%s4] sm:$0x1]
        %v997 = vlaneseq
        %v998 = vshrl.u32 %v997, 7
        %v999 = vsub.s32 0, %v998
        %v1000 = vrot.slane %v995, %v999
        %v1006 = vunpack.c.l.b16 %v991
        %v1007 = vunpack.c.l.b16 %v992
        %v1008 = vunpack.c.l.b16 %v993
        %v1009 = vunpack.c.l.b16 %v994
        %v1010 = vpack.c.b16 %v1007, %v1006
        %v1011 = vpack.c.b16 %v1009, %v1008
        %v1015 = vsel %vm477, %v990, 0
        %1017 = vmatprep.subr.bf16.mxu0 0
        %1018 = vmatpush1.bf16.msra.mxu0 %v1010
        %1019 = vmatprep.subr.bf16.mxu0 0
        %1020 = vmatpush1.bf16.msra.mxu0 %v1011
        %1021 = vmatprep.subr.bf16.mxu0 0
        %1022 = vmatpush1.bf16.msra.mxu0 0
        %1023 = vmatprep.subr.bf16.mxu0 0
        %1024 = vmatpush1.bf16.msra.mxu0 0
        %1025 = vmatprep.subr.bf16.mxu0 0
        %1026 = vmatpush1.bf16.msra.mxu0 0
        %1027 = vmatprep.subr.bf16.mxu0 0
        %1028 = vmatpush1.bf16.msra.mxu0 0
        %1029 = vmatprep.subr.bf16.mxu0 0
        %1030 = vmatpush1.bf16.msra.mxu0 0
        %1031 = vmatprep.subr.bf16.mxu0 0
        %1032 = vmatpush1.bf16.msra.mxu0 0
        %1033 = vmatprep.subr.bf16.mxu0 0
        %1034 = vmatpush1.bf16.msra.mxu0 0
        %1035 = vmatprep.subr.bf16.mxu0 0
        %1036 = vmatpush1.bf16.msra.mxu0 0
        %1037 = vmatprep.subr.bf16.mxu0 0
        %1038 = vmatpush1.bf16.msra.mxu0 0
        %1039 = vmatprep.subr.bf16.mxu0 0
        %1040 = vmatpush1.bf16.msra.mxu0 0
        %1041 = vmatprep.subr.bf16.mxu0 0
        %1042 = vmatpush1.bf16.msra.mxu0 0
        %1043 = vmatprep.subr.bf16.mxu0 0
        %1044 = vmatpush1.bf16.msra.mxu0 0
        %1045 = vmatprep.subr.bf16.mxu0 0
        %1046 = vmatpush1.bf16.msra.mxu0 0
        %1047 = vmatprep.subr.bf16.mxu0 0
        %1048 = vmatpush1.bf16.msra.mxu0 0
        %1049 = vmatprep.mubr.bf16.mxu0 0
        %1050 = vmatmul.mubr.bf16.gmra.mrb[0].mxu0 %v1015
        %v1051 = vpop.f32.mrb[0].mxu0
        %v1052 = vadd.f32 %v1000, %v1051
        %v1053 = vpop.f32.mrb[0].mxu0
        %v1054 = vpop.f32.mrb[0].mxu0
        %v1055 = vpop.f32.mrb[0].mxu0
        %1056 = vdwg.mxu0
        %v1057 = vadd.f32 %v452, %v1052
        %v1058 = vld [vmem:[%s5] sm:$0x1]
        %v1059 = vld [vmem:[%s6] sm:$0x1]
        %v1060 = vsel %vm477, %v1057, 0.0
        %1061 = vadd.xlane.f32.xlu0 %v1060
        %v1062 = vpop.xlane.xlu0 %1061
        %v1063 = vrcp.pop 32.0
        %v1064 = vmul.f32 %v1062, %v1063
        %v1065 = vsub.f32 %v1057, %v1064
        %v1066 = vmul.f32 %v1065, %v1065
        %v1067 = vsel %vm477, %v1066, 0.0
        %1068 = vadd.xlane.f32.xlu0 %v1067
        %v1069 = vpop.xlane.xlu0 %1068
        %v1070 = vmul.f32 %v1069, %v1063
        %v1071 = vadd.f32 %v1070, 1e-05
        %v1072 = vrsqrt.pop %v1071
        %v1073 = vmul.f32 %v1065, %v1072
        %v1075 = vlaneseq
        %v1076 = vshrl.u32 %v1075, 7
        %v1077 = vsub.s32 0, %v1076
        %v1078 = vrot.slane %v1058, %v1077
        %v1080 = vmul.f32 %v1073, %v1078
        %v1082 = vlaneseq
        %v1083 = vshrl.u32 %v1082, 7
        %v1084 = vsub.s32 0, %v1083
        %v1085 = vrot.slane %v1059, %v1084
        %v1087 = vadd.f32 %v1080, %v1085
        %v1088 = vpack.c.bf16 %v1087, %v1087
        %v1089 = vld [vmem:[#allocation2] sm:$0xf]
        %v1090 = vld [vmem:[#allocation2 + $0x4] sm:$0xf]
        %v1091 = vld [vmem:[#allocation2 + $0x8] sm:$0xf]
        %v1092 = vld [vmem:[#allocation2 + $0xc] sm:$0xf]
        %v1093 = vld [vmem:[%s8] sm:$0x1]
        %v1095 = vlaneseq
        %v1096 = vshrl.u32 %v1095, 7
        %v1097 = vsub.s32 0, %v1096
        %v1098 = vrot.slane %v1093, %v1097
        %v1104 = vunpack.c.l.b16 %v1089
        %v1105 = vunpack.c.l.b16 %v1090
        %v1106 = vunpack.c.l.b16 %v1091
        %v1107 = vunpack.c.l.b16 %v1092
        %v1108 = vpack.c.b16 %v1105, %v1104
        %v1109 = vpack.c.b16 %v1107, %v1106
        %v1113 = vsel %vm477, %v1088, 0
        %1115 = vmatprep.subr.bf16.mxu0 0
        %1116 = vmatpush1.bf16.msra.mxu0 %v1108
        %1117 = vmatprep.subr.bf16.mxu0 0
        %1118 = vmatpush1.bf16.msra.mxu0 %v1109
        %1119 = vmatprep.subr.bf16.mxu0 0
        %1120 = vmatpush1.bf16.msra.mxu0 0
        %1121 = vmatprep.subr.bf16.mxu0 0
        %1122 = vmatpush1.bf16.msra.mxu0 0
        %1123 = vmatprep.subr.bf16.mxu0 0
        %1124 = vmatpush1.bf16.msra.mxu0 0
        %1125 = vmatprep.subr.bf16.mxu0 0
        %1126 = vmatpush1.bf16.msra.mxu0 0
        %1127 = vmatprep.subr.bf16.mxu0 0
        %1128 = vmatpush1.bf16.msra.mxu0 0
        %1129 = vmatprep.subr.bf16.mxu0 0
        %1130 = vmatpush1.bf16.msra.mxu0 0
        %1131 = vmatprep.subr.bf16.mxu0 0
        %1132 = vmatpush1.bf16.msra.mxu0 0
        %1133 = vmatprep.subr.bf16.mxu0 0
        %1134 = vmatpush1.bf16.msra.mxu0 0
        %1135 = vmatprep.subr.bf16.mxu0 0
        %1136 = vmatpush1.bf16.msra.mxu0 0
        %1137 = vmatprep.subr.bf16.mxu0 0
        %1138 = vmatpush1.bf16.msra.mxu0 0
        %1139 = vmatprep.subr.bf16.mxu0 0
        %1140 = vmatpush1.bf16.msra.mxu0 0
        %1141 = vmatprep.subr.bf16.mxu0 0
        %1142 = vmatpush1.bf16.msra.mxu0 0
        %1143 = vmatprep.subr.bf16.mxu0 0
        %1144 = vmatpush1.bf16.msra.mxu0 0
        %1145 = vmatprep.subr.bf16.mxu0 0
        %1146 = vmatpush1.bf16.msra.mxu0 0
        %1147 = vmatprep.mubr.bf16.mxu0 0
        %1148 = vmatmul.mubr.bf16.gmra.mrb[0].mxu0 %v1113
        %v1149 = vpop.f32.mrb[0].mxu0
        %v1150 = vadd.f32 %v1098, %v1149
        %v1151 = vpop.f32.mrb[0].mxu0
        %v1152 = vpop.f32.mrb[0].mxu0
        %v1153 = vpop.f32.mrb[0].mxu0
        %1154 = vdwg.mxu0
        %v1155 = vmax.f32 %v1150, 0.0
        %v1156 = vpack.c.bf16 %v1155, %v1155
        %v1157 = vld [vmem:[%s9] sm:$0xf]
        %v1158 = vld [vmem:[%s9 + $0x4] sm:$0xf]
        %v1159 = vld [vmem:[%s9 + $0x8] sm:$0xf]
        %v1160 = vld [vmem:[%s9 + $0xc] sm:$0xf]
        %v1161 = vld [vmem:[%s9 + $0x10] sm:$0xf]
        %v1162 = vld [vmem:[%s9 + $0x14] sm:$0xf]
        %v1163 = vld [vmem:[%s9 + $0x18] sm:$0xf]
        %v1164 = vld [vmem:[%s9 + $0x1c] sm:$0xf]
        %v1165 = vld [vmem:[%s10] sm:$0x1]
        %v1167 = vlaneseq
        %v1168 = vshrl.u32 %v1167, 7
        %v1169 = vsub.s32 0, %v1168
        %v1170 = vrot.slane %v1165, %v1169
        %v1180 = vunpack.c.l.b16 %v1157
        %v1181 = vunpack.c.l.b16 %v1158
        %v1182 = vunpack.c.l.b16 %v1159
        %v1183 = vunpack.c.l.b16 %v1160
        %v1184 = vunpack.c.l.b16 %v1161
        %v1185 = vunpack.c.l.b16 %v1162
        %v1186 = vunpack.c.l.b16 %v1163
        %v1187 = vunpack.c.l.b16 %v1164
        %v1188 = vpack.c.b16 %v1181, %v1180
        %v1189 = vpack.c.b16 %v1183, %v1182
        %v1190 = vpack.c.b16 %v1185, %v1184
        %v1191 = vpack.c.b16 %v1187, %v1186
        %vm1196 = vcmask 523264
        %v1198 = vsel %vm1196, %v1156, 0
        %1200 = vmatprep.subr.bf16.mxu0 0
        %1201 = vmatpush1.bf16.msra.mxu0 %v1188
        %1202 = vmatprep.subr.bf16.mxu0 0
        %1203 = vmatpush1.bf16.msra.mxu0 %v1189
        %1204 = vmatprep.subr.bf16.mxu0 0
        %1205 = vmatpush1.bf16.msra.mxu0 %v1190
        %1206 = vmatprep.subr.bf16.mxu0 0
        %1207 = vmatpush1.bf16.msra.mxu0 %v1191
        %1208 = vmatprep.subr.bf16.mxu0 0
        %1209 = vmatpush1.bf16.msra.mxu0 0
        %1210 = vmatprep.subr.bf16.mxu0 0
        %1211 = vmatpush1.bf16.msra.mxu0 0
        %1212 = vmatprep.subr.bf16.mxu0 0
        %1213 = vmatpush1.bf16.msra.mxu0 0
        %1214 = vmatprep.subr.bf16.mxu0 0
        %1215 = vmatpush1.bf16.msra.mxu0 0
        %1216 = vmatprep.subr.bf16.mxu0 0
        %1217 = vmatpush1.bf16.msra.mxu0 0
        %1218 = vmatprep.subr.bf16.mxu0 0
        %1219 = vmatpush1.bf16.msra.mxu0 0
        %1220 = vmatprep.subr.bf16.mxu0 0
        %1221 = vmatpush1.bf16.msra.mxu0 0
        %1222 = vmatprep.subr.bf16.mxu0 0
        %1223 = vmatpush1.bf16.msra.mxu0 0
        %1224 = vmatprep.subr.bf16.mxu0 0
        %1225 = vmatpush1.bf16.msra.mxu0 0
        %1226 = vmatprep.subr.bf16.mxu0 0
        %1227 = vmatpush1.bf16.msra.mxu0 0
        %1228 = vmatprep.subr.bf16.mxu0 0
        %1229 = vmatpush1.bf16.msra.mxu0 0
        %1230 = vmatprep.subr.bf16.mxu0 0
        %1231 = vmatpush1.bf16.msra.mxu0 0
        %1232 = vmatprep.mubr.bf16.mxu0 0
        %1233 = vmatmul.mubr.bf16.gmra.mrb[0].mxu0 %v1198
        %v1234 = vpop.f32.mrb[0].mxu0
        %v1235 = vadd.f32 %v1170, %v1234
        %v1236 = vpop.f32.mrb[0].mxu0
        %v1237 = vpop.f32.mrb[0].mxu0
        %v1238 = vpop.f32.mrb[0].mxu0
        %1239 = vdwg.mxu0
        %v1240 = vadd.f32 %v1087, %v1235
        %v1241 = vld [vmem:[%s11] sm:$0x1]
        %v1242 = vld [vmem:[%s12] sm:$0x1]
        %v1243 = vsel %vm477, %v1240, 0.0
        %1244 = vadd.xlane.f32.xlu0 %v1243
        %v1245 = vpop.xlane.xlu0 %1244
        %v1246 = vmul.f32 %v1245, %v1063
        %v1247 = vsub.f32 %v1240, %v1246
        %v1248 = vmul.f32 %v1247, %v1247
        %v1249 = vsel %vm477, %v1248, 0.0
        %1250 = vadd.xlane.f32.xlu0 %v1249
        %v1251 = vpop.xlane.xlu0 %1250
        %v1252 = vmul.f32 %v1251, %v1063
        %v1253 = vadd.f32 %v1252, 1e-05
        %v1254 = vrsqrt.pop %v1253
        %v1255 = vmul.f32 %v1247, %v1254
        %v1257 = vlaneseq
        %v1258 = vshrl.u32 %v1257, 7
        %v1259 = vsub.s32 0, %v1258
        %v1260 = vrot.slane %v1241, %v1259
        %v1262 = vmul.f32 %v1255, %v1260
        %v1264 = vlaneseq
        %v1265 = vshrl.u32 %v1264, 7
        %v1266 = vsub.s32 0, %v1265
        %v1267 = vrot.slane %v1242, %v1266
        %v1269 = vadd.f32 %v1262, %v1267
        %1270 = vst.msk [vmem:[%s446] sm:$0xff] %vm477, %v1269
        %s1271 = sand.u32 %s314, 1
        %s1272 = scalar_lea.sflag [#allocation4], %s1271
        %s1273 = sand.u32 %s314, 1
        %s1274 = smul.addr %s1273, 8
        %s1275 = scalar_lea.vmem [#allocation5], %s1274
        // Predicated region
        $region77: #{tpu_custom_call.1} parent=71 // pred_check
          %p1276 = pneg %p324
        $region78: #{tpu_custom_call.1} parent=71 // pred_check_branch
          %1278 = sbr.rel (%p1276) target = $region80
        $region79: #{tpu_custom_call.1} parent=71 // pred_region
          %s1280 = ssub.s32 128, 128
          %1281 = vsyncadd %s1272, %s1280
          %s1282 = smul.addr %s28, 128
          %s1283 = scalar_lea.hbm %s13, %s1282
          %s1285 = sshll.u32 %s1275, 4
          %s1286 = int_to_ptr.vmem [resolvable:$true] %s1285
          %1288 = dma.vmem_to_hbm [thread:$0]  %s1286, 128, %s1283, %s1272
        $region80: #{tpu_custom_call.1} parent=71 // pred_fallthru
          _
      $region72: #{tpu_custom_call.1} parent=5 // pred_fallthru
        _
      %p1289 = scmp.le.s32.totalorder 2, %s23
      // Predicated region
      $region81: #{tpu_custom_call.1} parent=5 // pred_check
        %p1290 = pneg %p1289
      $region82: #{tpu_custom_call.1} parent=5 // pred_check_branch
        %1292 = sbr.rel (%p1290) target = $region84
      $region83: #{tpu_custom_call.1} parent=5 // pred_region
        %s1293 = ssub.s32 %s23, 2
        // Predicated region
        $region85: #{tpu_custom_call.1} parent=83 // pred_check
          %p1294 = pneg %p330
        $region86: #{tpu_custom_call.1} parent=83 // pred_check_branch
          %1296 = sbr.rel (%p1294) target = $region88
        $region87: #{tpu_custom_call.1} parent=83 // pred_region
          %s1297 = sand.u32 %s315, 1
          %s1298 = scalar_lea.sflag [#allocation4], %s1297
          %s1299 = sand.u32 %s315, 1
          %s1300 = smul.addr %s1299, 8
          %s1301 = scalar_lea.vmem [#allocation5], %s1300
          %1302 = dma.done %s1298, 128
        $region88: #{tpu_custom_call.1} parent=83 // pred_fallthru
          _
      $region84: #{tpu_custom_call.1} parent=5 // pred_fallthru
        _
    $region6: #{tpu_custom_call.1} parent=1 // loop_footer
      %s27 = sadd.s32 1, %s23
    $region7: #{tpu_custom_call.1} parent=1 // loop_footer_branch
      %22 = sbr.rel target = $region3
    $region8: #{tpu_custom_call.1} parent=1 // loop_exit
      _
    %1303 = vsyncpa [#allocation3], 1
    %s1304 = scalar_lea.sflag [#allocation3], 1
    %1305 = vsyncpa %s1304, 1
    %1306 = vsyncpa [#allocation4], 1
    %s1307 = scalar_lea.sflag [#allocation4], 1
    %1308 = vsyncpa %s1307, 1

// kernel: tpu_custom_call.1
$region0: #{tpu_custom_call.1}
  #allocation0 [shape = 'u32[]', space=smem, size = 0x4, offset = 0x4, fixed_abs, tag = 'smem constant byte address 0x4 - core index']
  #allocation1 [shape = 'u32[144,128]{1,0:T(1,128)}', space=vmem, size = 0x12000, scoped, tag = 'internal scratch']
  %s0 = inlined_call_operand.vmem [shape: f32[2,8,32], index: 0, kind: input, shape index: {}]
  %s1 = inlined_call_operand.vmem [shape: bf16[32,96], index: 1, kind: input, shape index: {}]
  %s2 = inlined_call_operand.vmem [shape: f32[1,96], index: 2, kind: input, shape index: {}]
  %s3 = inlined_call_operand.vmem [shape: bf16[32,32], index: 3, kind: input, shape index: {}]
  %s4 = inlined_call_operand.vmem [shape: f32[1,32], index: 4, kind: input, shape index: {}]
  %s5 = inlined_call_operand.vmem [shape: f32[1,32], index: 5, kind: input, shape index: {}]
  %s6 = inlined_call_operand.vmem [shape: f32[1,32], index: 6, kind: input, shape index: {}]
  %s7 = inlined_call_operand.hbm [shape: bf16[32,64], index: 7, kind: input, shape index: {}]
  %s8 = inlined_call_operand.vmem [shape: f32[1,64], index: 8, kind: input, shape index: {}]
  %s9 = inlined_call_operand.vmem [shape: bf16[64,32], index: 9, kind: input, shape index: {}]
  %s10 = inlined_call_operand.vmem [shape: f32[1,32], index: 10, kind: input, shape index: {}]
  %s11 = inlined_call_operand.vmem [shape: f32[1,32], index: 11, kind: input, shape index: {}]
  %s12 = inlined_call_operand.vmem [shape: f32[1,32], index: 12, kind: input, shape index: {}]
  %s13 = inlined_call_operand.hbm [shape: f32[2,8,32], index: 13, kind: output, shape index: {}]
  %s14 = sld [smem:[#allocation0]]
  $region89: #{tpu_custom_call.1} parent=0
    _
  %s16 = ssub.s32 1, %s14
  %s17 = scalar_select 0, %s16, %s14
  $region1: #{tpu_custom_call.1} parent=0
    #allocation2 [shape = 'u8[8192]{0}', space=vmem, size = 0x2000, scoped, tag = 'input window, operand 7, single buffered']
    #allocation3 [shape = 's32[2]{0}', space=sflag, size = 0x8, scoped, tag = 'scoped memory for tpu_custom_call.1']
    #allocation4 [shape = 's32[2]{0}', space=sflag, size = 0x8, scoped, tag = 'scoped memory for tpu_custom_call.1']
    #allocation5 [shape = 'u8[8192]{0}', space=vmem, size = 0x2000, scoped, tag = 'output window, operand 0']
    %18 = vsyncpa [#allocation3], 0
    %19 = vsyncpa [#allocation4], 0
    %s20 = scalar_lea.sflag [#allocation4], 1
    %21 = vsyncpa %s20, 0
    loop: start=0, step=1, limit=4
    $region2: #{tpu_custom_call.1} parent=1 // loop_pre_header
      _
    $region3: #{tpu_custom_call.1} parent=1 // loop_header
      %s23 = sphi 0, %s27
      %p24 = scmp.ge.s32.totalorder %s23, 4
      %s33 = sphi 0, %s35
      %s36 = sphi 0, %s33
      %s37 = sphi 0, %s36
      %s53 = sphi 0, %s37
      %s57 = sphi 0, %s57
      %s59 = sphi 0, %s57
      %s60 = sphi 0, %s59
      %s74 = sphi 0, %s60
      %s78 = sphi 0, %s78
      %s80 = sphi 0, %s78
      %s81 = sphi 0, %s80
      %s95 = sphi 0, %s81
      %s99 = sphi 0, %s99
      %s101 = sphi 0, %s99
      %s102 = sphi 0, %s101
      %s116 = sphi 0, %s102
      %s120 = sphi 0, %s120
      %s122 = sphi 0, %s120
      %s123 = sphi 0, %s122
      %s137 = sphi 0, %s123
      %s141 = sphi 0, %s141
      %s143 = sphi 0, %s141
      %s144 = sphi 0, %s143
      %s158 = sphi 0, %s144
      %s162 = sphi 0, %s162
      %s164 = sphi 0, %s162
      %s165 = sphi 0, %s164
      %s179 = sphi 0, %s165
      %s183 = sphi 0, %s183
      %s185 = sphi 0, %s183
      %s186 = sphi 0, %s185
      %s200 = sphi 0, %s186
      %s204 = sphi 0, %s204
      %s206 = sphi 0, %s204
      %s207 = sphi 0, %s206
      %s221 = sphi 0, %s207
      %s225 = sphi 0, %s225
      %s227 = sphi 0, %s225
      %s228 = sphi 0, %s227
      %s242 = sphi 0, %s228
      %s246 = sphi 0, %s246
      %s248 = sphi 0, %s246
      %s249 = sphi 0, %s248
      %s263 = sphi 0, %s249
      %s267 = sphi 0, %s267
      %s269 = sphi 0, %s267
      %s270 = sphi 0, %s269
      %s284 = sphi 0, %s270
      %s288 = sphi 0, %s288
      %s290 = sphi 0, %s288
      %s291 = sphi 0, %s290
      %s305 = sphi 0, %s291
      %s311 = sphi 0, %s313
      %s314 = sphi 0, %s311
      %s315 = sphi 0, %s314
      %s331 = sphi 0, %s315
    $region4: #{tpu_custom_call.1} parent=1 // loop_header_branch
      %26 = sbr.rel (%p24) target = $region8
    $region5: #{tpu_custom_call.1} parent=1 // loop_body
      %s28 = ssub.s32 %s23, 1
      %s29 = ssub.s32 %s23, 2
      %s30 = sadd.s32 %s23, 1
      %s31 = ssub.s32 %s23, %s30
      %p32 = scmp.eq.s32.totalorder %s31, 0
      %s34 = sadd.s32 %s33, 1
      %s35 = scalar_select %p32, %s33, %s34
      %p38 = pneg %p32
      %p39 = scmp.eq.s32.totalorder %s23, 1
      %p40 = por %p38, %p39
      %p41 = scmp.ne.s32.totalorder %s33, %s36
      %p42 = scmp.eq.s32.totalorder %s23, 0
      %p43 = por %p41, %p42
      %p44 = scmp.ne.s32.totalorder %s33, %s36
      %p45 = scmp.eq.s32.totalorder %s28, 1
      %p46 = por %p44, %p45
      %p47 = scmp.ne.s32.totalorder %s36, %s37
      %p48 = scmp.eq.s32.totalorder %s28, 0
      %p49 = por %p47, %p48
      %p50 = scmp.ne.s32.totalorder %s36, %s37
      %p51 = scmp.eq.s32.totalorder %s29, 1
      %p52 = por %p50, %p51
      %p54 = scmp.ne.s32.totalorder %s37, %s53
      %p55 = scmp.eq.s32.totalorder %s29, 0
      %p56 = por %p54, %p55
      %s58 = sadd.s32 %s57, 1
      %p61 = scmp.eq.s32.totalorder %s23, 1
      %p62 = scmp.ne.s32.totalorder %s57, %s59
      %p63 = scmp.eq.s32.totalorder %s23, 0
      %p64 = por %p62, %p63
      %p65 = scmp.ne.s32.totalorder %s57, %s59
      %p66 = scmp.eq.s32.totalorder %s28, 1
      %p67 = por %p65, %p66
      %p68 = scmp.ne.s32.totalorder %s59, %s60
      %p69 = scmp.eq.s32.totalorder %s28, 0
      %p70 = por %p68, %p69
      %p71 = scmp.ne.s32.totalorder %s59, %s60
      %p72 = scmp.eq.s32.totalorder %s29, 1
      %p73 = por %p71, %p72
      %p75 = scmp.ne.s32.totalorder %s60, %s74
      %p76 = scmp.eq.s32.totalorder %s29, 0
      %p77 = por %p75, %p76
      %s79 = sadd.s32 %s78, 1
      %p82 = scmp.eq.s32.totalorder %s23, 1
      %p83 = scmp.ne.s32.totalorder %s78, %s80
      %p84 = scmp.eq.s32.totalorder %s23, 0
      %p85 = por %p83, %p84
      %p86 = scmp.ne.s32.totalorder %s78, %s80
      %p87 = scmp.eq.s32.totalorder %s28, 1
      %p88 = por %p86, %p87
      %p89 = scmp.ne.s32.totalorder %s80, %s81
      %p90 = scmp.eq.s32.totalorder %s28, 0
      %p91 = por %p89, %p90
      %p92 = scmp.ne.s32.totalorder %s80, %s81
      %p93 = scmp.eq.s32.totalorder %s29, 1
      %p94 = por %p92, %p93
      %p96 = scmp.ne.s32.totalorder %s81, %s95
      %p97 = scmp.eq.s32.totalorder %s29, 0
      %p98 = por %p96, %p97
      %s100 = sadd.s32 %s99, 1
      %p103 = scmp.eq.s32.totalorder %s23, 1
      %p104 = scmp.ne.s32.totalorder %s99, %s101
      %p105 = scmp.eq.s32.totalorder %s23, 0
      %p106 = por %p104, %p105
      %p107 = scmp.ne.s32.totalorder %s99, %s101
      %p108 = scmp.eq.s32.totalorder %s28, 1
      %p109 = por %p107, %p108
      %p110 = scmp.ne.s32.totalorder %s101, %s102
      %p111 = scmp.eq.s32.totalorder %s28, 0
      %p112 = por %p110, %p111
      %p113 = scmp.ne.s32.totalorder %s101, %s102
      %p114 = scmp.eq.s32.totalorder %s29, 1
      %p115 = por %p113, %p114
      %p117 = scmp.ne.s32.totalorder %s102, %s116
      %p118 = scmp.eq.s32.totalorder %s29, 0
      %p119 = por %p117, %p118
      %s121 = sadd.s32 %s120, 1
      %p124 = scmp.eq.s32.totalorder %s23, 1
      %p125 = scmp.ne.s32.totalorder %s120, %s122
      %p126 = scmp.eq.s32.totalorder %s23, 0
      %p127 = por %p125, %p126
      %p128 = scmp.ne.s32.totalorder %s120, %s122
      %p129 = scmp.eq.s32.totalorder %s28, 1
      %p130 = por %p128, %p129
      %p131 = scmp.ne.s32.totalorder %s122, %s123
      %p132 = scmp.eq.s32.totalorder %s28, 0
      %p133 = por %p131, %p132
      %p134 = scmp.ne.s32.totalorder %s122, %s123
      %p135 = scmp.eq.s32.totalorder %s29, 1
      %p136 = por %p134, %p135
      %p138 = scmp.ne.s32.totalorder %s123, %s137
      %p139 = scmp.eq.s32.totalorder %s29, 0
      %p140 = por %p138, %p139
      %s142 = sadd.s32 %s141, 1
      %p145 = scmp.eq.s32.totalorder %s23, 1
      %p146 = scmp.ne.s32.totalorder %s141, %s143
      %p147 = scmp.eq.s32.totalorder %s23, 0
      %p148 = por %p146, %p147
      %p149 = scmp.ne.s32.totalorder %s141, %s143
      %p150 = scmp.eq.s32.totalorder %s28, 1
      %p151 = por %p149, %p150
      %p152 = scmp.ne.s32.totalorder %s143, %s144
      %p153 = scmp.eq.s32.totalorder %s28, 0
      %p154 = por %p152, %p153
      %p155 = scmp.ne.s32.totalorder %s143, %s144
      %p156 = scmp.eq.s32.totalorder %s29, 1
      %p157 = por %p155, %p156
      %p159 = scmp.ne.s32.totalorder %s144, %s158
      %p160 = scmp.eq.s32.totalorder %s29, 0
      %p161 = por %p159, %p160
      %s163 = sadd.s32 %s162, 1
      %p166 = scmp.eq.s32.totalorder %s23, 1
      %p167 = scmp.ne.s32.totalorder %s162, %s164
      %p168 = scmp.eq.s32.totalorder %s23, 0
      %p169 = por %p167, %p168
      %p170 = scmp.ne.s32.totalorder %s162, %s164
      %p171 = scmp.eq.s32.totalorder %s28, 1
      %p172 = por %p170, %p171
      %p173 = scmp.ne.s32.totalorder %s164, %s165
      %p174 = scmp.eq.s32.totalorder %s28, 0
      %p175 = por %p173, %p174
      %p176 = scmp.ne.s32.totalorder %s164, %s165
      %p177 = scmp.eq.s32.totalorder %s29, 1
      %p178 = por %p176, %p177
      %p180 = scmp.ne.s32.totalorder %s165, %s179
      %p181 = scmp.eq.s32.totalorder %s29, 0
      %p182 = por %p180, %p181
      %s184 = sadd.s32 %s183, 1
      %p187 = scmp.eq.s32.totalorder %s23, 1
      %p188 = scmp.ne.s32.totalorder %s183, %s185
      %p189 = scmp.eq.s32.totalorder %s23, 0
      %p190 = por %p188, %p189
      %p191 = scmp.ne.s32.totalorder %s183, %s185
      %p192 = scmp.eq.s32.totalorder %s28, 1
      %p193 = por %p191, %p192
      %p194 = scmp.ne.s32.totalorder %s185, %s186
      %p195 = scmp.eq.s32.totalorder %s28, 0
      %p196 = por %p194, %p195
      %p197 = scmp.ne.s32.totalorder %s185, %s186
      %p198 = scmp.eq.s32.totalorder %s29, 1
      %p199 = por %p197, %p198
      %p201 = scmp.ne.s32.totalorder %s186, %s200
      %p202 = scmp.eq.s32.totalorder %s29, 0
      %p203 = por %p201, %p202
      %s205 = sadd.s32 %s204, 1
      %p208 = scmp.eq.s32.totalorder %s23, 1
      %p209 = scmp.ne.s32.totalorder %s204, %s206
      %p210 = scmp.eq.s32.totalorder %s23, 0
      %p211 = por %p209, %p210
      %p212 = scmp.ne.s32.totalorder %s204, %s206
      %p213 = scmp.eq.s32.totalorder %s28, 1
      %p214 = por %p212, %p213
      %p215 = scmp.ne.s32.totalorder %s206, %s207
      %p216 = scmp.eq.s32.totalorder %s28, 0
      %p217 = por %p215, %p216
      %p218 = scmp.ne.s32.totalorder %s206, %s207
      %p219 = scmp.eq.s32.totalorder %s29, 1
      %p220 = por %p218, %p219
      %p222 = scmp.ne.s32.totalorder %s207, %s221
      %p223 = scmp.eq.s32.totalorder %s29, 0
      %p224 = por %p222, %p223
      %s226 = sadd.s32 %s225, 1
      %p229 = scmp.eq.s32.totalorder %s23, 1
      %p230 = scmp.ne.s32.totalorder %s225, %s227
      %p231 = scmp.eq.s32.totalorder %s23, 0
      %p232 = por %p230, %p231
      %p233 = scmp.ne.s32.totalorder %s225, %s227
      %p234 = scmp.eq.s32.totalorder %s28, 1
      %p235 = por %p233, %p234
      %p236 = scmp.ne.s32.totalorder %s227, %s228
      %p237 = scmp.eq.s32.totalorder %s28, 0
      %p238 = por %p236, %p237
      %p239 = scmp.ne.s32.totalorder %s227, %s228
      %p240 = scmp.eq.s32.totalorder %s29, 1
      %p241 = por %p239, %p240
      %p243 = scmp.ne.s32.totalorder %s228, %s242
      %p244 = scmp.eq.s32.totalorder %s29, 0
      %p245 = por %p243, %p244
      %s247 = sadd.s32 %s246, 1
      %p250 = scmp.eq.s32.totalorder %s23, 1
      %p251 = scmp.ne.s32.totalorder %s246, %s248
      %p252 = scmp.eq.s32.totalorder %s23, 0
      %p253 = por %p251, %p252
      %p254 = scmp.ne.s32.totalorder %s246, %s248
      %p255 = scmp.eq.s32.totalorder %s28, 1
      %p256 = por %p254, %p255
      %p257 = scmp.ne.s32.totalorder %s248, %s249
      %p258 = scmp.eq.s32.totalorder %s28, 0
      %p259 = por %p257, %p258
      %p260 = scmp.ne.s32.totalorder %s248, %s249
      %p261 = scmp.eq.s32.totalorder %s29, 1
      %p262 = por %p260, %p261
      %p264 = scmp.ne.s32.totalorder %s249, %s263
      %p265 = scmp.eq.s32.totalorder %s29, 0
      %p266 = por %p264, %p265
      %s268 = sadd.s32 %s267, 1
      %p271 = scmp.eq.s32.totalorder %s23, 1
      %p272 = scmp.ne.s32.totalorder %s267, %s269
      %p273 = scmp.eq.s32.totalorder %s23, 0
      %p274 = por %p272, %p273
      %p275 = scmp.ne.s32.totalorder %s267, %s269
      %p276 = scmp.eq.s32.totalorder %s28, 1
      %p277 = por %p275, %p276
      %p278 = scmp.ne.s32.totalorder %s269, %s270
      %p279 = scmp.eq.s32.totalorder %s28, 0
      %p280 = por %p278, %p279
      %p281 = scmp.ne.s32.totalorder %s269, %s270
      %p282 = scmp.eq.s32.totalorder %s29, 1
      %p283 = por %p281, %p282
      %p285 = scmp.ne.s32.totalorder %s270, %s284
      %p286 = scmp.eq.s32.totalorder %s29, 0
      %p287 = por %p285, %p286
      %s289 = sadd.s32 %s288, 1
      %p292 = scmp.eq.s32.totalorder %s23, 1
      %p293 = scmp.ne.s32.totalorder %s288, %s290
      %p294 = scmp.eq.s32.totalorder %s23, 0
      %p295 = por %p293, %p294
      %p296 = scmp.ne.s32.totalorder %s288, %s290
      %p297 = scmp.eq.s32.totalorder %s28, 1
      %p298 = por %p296, %p297
      %p299 = scmp.ne.s32.totalorder %s290, %s291
      %p300 = scmp.eq.s32.totalorder %s28, 0
      %p301 = por %p299, %p300
      %p302 = scmp.ne.s32.totalorder %s290, %s291
      %p303 = scmp.eq.s32.totalorder %s29, 1
      %p304 = por %p302, %p303
      %p306 = scmp.ne.s32.totalorder %s291, %s305
      %p307 = scmp.eq.s32.totalorder %s29, 0
      %p308 = por %p306, %p307
      %s309 = ssub.s32 %s23, %s30
      %p310 = scmp.eq.s32.totalorder %s309, 0
      %s312 = sadd.s32 %s311, 1
      %s313 = scalar_select %p310, %s311, %s312
      %p316 = pneg %p310
      %p317 = scmp.eq.s32.totalorder %s23, 1
      %p318 = por %p316, %p317
      %p319 = scmp.ne.s32.totalorder %s311, %s314
      %p320 = scmp.eq.s32.totalorder %s23, 0
      %p321 = por %p319, %p320
      %p322 = scmp.ne.s32.totalorder %s311, %s314
      %p323 = scmp.eq.s32.totalorder %s28, 1
      %p324 = por %p322, %p323
      %p325 = scmp.ne.s32.totalorder %s314, %s315
      %p326 = scmp.eq.s32.totalorder %s28, 0
      %p327 = por %p325, %p326
      %p328 = scmp.ne.s32.totalorder %s314, %s315
      %p329 = scmp.eq.s32.totalorder %s29, 1
      %p330 = por %p328, %p329
      %p332 = scmp.ne.s32.totalorder %s315, %s331
      %p333 = scmp.eq.s32.totalorder %s29, 0
      %p334 = por %p332, %p333
      %p335 = scmp.le.s32.totalorder 1, %s23
      %p336 = scmp.lt.s32.totalorder %s23, 3
      %p337 = pnand %p335, %p336
      %p338 = pneg %p337
      // Predicated region
      $region9: #{tpu_custom_call.1} parent=5 // pred_check
        _
      $region10: #{tpu_custom_call.1} parent=5 // pred_check_branch
        %340 = sbr.rel (%p337) target = $region12
      $region11: #{tpu_custom_call.1} parent=5 // pred_region
        %s341 = ssub.s32 %s23, 1
        // Predicated region
        $region13: #{tpu_custom_call.1} parent=11 // pred_check
          %p342 = pneg %p70
        $region14: #{tpu_custom_call.1} parent=11 // pred_check_branch
          %344 = sbr.rel (%p342) target = $region16
        $region15: #{tpu_custom_call.1} parent=11 // pred_region
          _
        $region16: #{tpu_custom_call.1} parent=11 // pred_fallthru
          _
        // Predicated region
        $region17: #{tpu_custom_call.1} parent=11 // pred_check
          %p345 = pneg %p91
        $region18: #{tpu_custom_call.1} parent=11 // pred_check_branch
          %347 = sbr.rel (%p345) target = $region20
        $region19: #{tpu_custom_call.1} parent=11 // pred_region
          _
        $region20: #{tpu_custom_call.1} parent=11 // pred_fallthru
          _
        // Predicated region
        $region21: #{tpu_custom_call.1} parent=11 // pred_check
          %p348 = pneg %p112
        $region22: #{tpu_custom_call.1} parent=11 // pred_check_branch
          %350 = sbr.rel (%p348) target = $region24
        $region23: #{tpu_custom_call.1} parent=11 // pred_region
          _
        $region24: #{tpu_custom_call.1} parent=11 // pred_fallthru
          _
        // Predicated region
        $region25: #{tpu_custom_call.1} parent=11 // pred_check
          %p351 = pneg %p133
        $region26: #{tpu_custom_call.1} parent=11 // pred_check_branch
          %353 = sbr.rel (%p351) target = $region28
        $region27: #{tpu_custom_call.1} parent=11 // pred_region
          _
        $region28: #{tpu_custom_call.1} parent=11 // pred_fallthru
          _
        // Predicated region
        $region29: #{tpu_custom_call.1} parent=11 // pred_check
          %p354 = pneg %p154
        $region30: #{tpu_custom_call.1} parent=11 // pred_check_branch
          %356 = sbr.rel (%p354) target = $region32
        $region31: #{tpu_custom_call.1} parent=11 // pred_region
          _
        $region32: #{tpu_custom_call.1} parent=11 // pred_fallthru
          _
        // Predicated region
        $region33: #{tpu_custom_call.1} parent=11 // pred_check
          %p357 = pneg %p175
        $region34: #{tpu_custom_call.1} parent=11 // pred_check_branch
          %359 = sbr.rel (%p357) target = $region36
        $region35: #{tpu_custom_call.1} parent=11 // pred_region
          _
        $region36: #{tpu_custom_call.1} parent=11 // pred_fallthru
          _
        // Predicated region
        $region37: #{tpu_custom_call.1} parent=11 // pred_check
          %p360 = pneg %p196
        $region38: #{tpu_custom_call.1} parent=11 // pred_check_branch
          %362 = sbr.rel (%p360) target = $region40
        $region39: #{tpu_custom_call.1} parent=11 // pred_region
          %s364 = ssub.s32 256, 256
          %365 = vsyncadd [#allocation3], %s364
          %s366 = sshll.u32 [#allocation2], 4
          %s367 = int_to_ptr.vmem [resolvable:$true] %s366
          %372 = dma.hbm_to_vmem [thread:$0]  %s7, 256, %s367, [#allocation3], 64, 64, 4
        $region40: #{tpu_custom_call.1} parent=11 // pred_fallthru
          _
        // Predicated region
        $region41: #{tpu_custom_call.1} parent=11 // pred_check
          %p373 = pneg %p217
        $region42: #{tpu_custom_call.1} parent=11 // pred_check_branch
          %375 = sbr.rel (%p373) target = $region44
        $region43: #{tpu_custom_call.1} parent=11 // pred_region
          _
        $region44: #{tpu_custom_call.1} parent=11 // pred_fallthru
          _
        // Predicated region
        $region45: #{tpu_custom_call.1} parent=11 // pred_check
          %p376 = pneg %p238
        $region46: #{tpu_custom_call.1} parent=11 // pred_check_branch
          %378 = sbr.rel (%p376) target = $region48
        $region47: #{tpu_custom_call.1} parent=11 // pred_region
          _
        $region48: #{tpu_custom_call.1} parent=11 // pred_fallthru
          _
        // Predicated region
        $region49: #{tpu_custom_call.1} parent=11 // pred_check
          %p379 = pneg %p259
        $region50: #{tpu_custom_call.1} parent=11 // pred_check_branch
          %381 = sbr.rel (%p379) target = $region52
        $region51: #{tpu_custom_call.1} parent=11 // pred_region
          _
        $region52: #{tpu_custom_call.1} parent=11 // pred_fallthru
          _
        // Predicated region
        $region53: #{tpu_custom_call.1} parent=11 // pred_check
          %p382 = pneg %p280
        $region54: #{tpu_custom_call.1} parent=11 // pred_check_branch
          %384 = sbr.rel (%p382) target = $region56
        $region55: #{tpu_custom_call.1} parent=11 // pred_region
          _
        $region56: #{tpu_custom_call.1} parent=11 // pred_fallthru
          _
        // Predicated region
        $region57: #{tpu_custom_call.1} parent=11 // pred_check
          %p385 = pneg %p301
        $region58: #{tpu_custom_call.1} parent=11 // pred_check_branch
          %387 = sbr.rel (%p385) target = $region60
        $region59: #{tpu_custom_call.1} parent=11 // pred_region
          _
        $region60: #{tpu_custom_call.1} parent=11 // pred_fallthru
          _
      $region12: #{tpu_custom_call.1} parent=5 // pred_fallthru
        _
      %p388 = scmp.lt.s32.totalorder %s23, 2
      // Predicated region
      $region61: #{tpu_custom_call.1} parent=5 // pred_check
        %p389 = pneg %p388
      $region62: #{tpu_custom_call.1} parent=5 // pred_check_branch
        %391 = sbr.rel (%p389) target = $region64
      $region63: #{tpu_custom_call.1} parent=5 // pred_region
        // Predicated region
        $region65: #{tpu_custom_call.1} parent=63 // pred_check
          %p392 = pneg %p43
        $region66: #{tpu_custom_call.1} parent=63 // pred_check_branch
          %394 = sbr.rel (%p392) target = $region68
        $region67: #{tpu_custom_call.1} parent=63 // pred_region
          %p395 = scmp.lt.s32.totalorder %s23, 1
          %s396 = scalar_select %p395, %s23, 1
          %s397 = smul.addr %s396, 8
          %s398 = scalar_lea.vmem %s0, %s397
        $region68: #{tpu_custom_call.1} parent=63 // pred_fallthru
          _
      $region64: #{tpu_custom_call.1} parent=5 // pred_fallthru
        _
      %p399 = scmp.le.s32.totalorder 1, %s23
      %p400 = scmp.lt.s32.totalorder %s23, 3
      %p401 = pnand %p399, %p400
      %p402 = pneg %p401
      // Predicated region
      $region69: #{tpu_custom_call.1} parent=5 // pred_check
        _
      $region70: #{tpu_custom_call.1} parent=5 // pred_check_branch
        %404 = sbr.rel (%p401) target = $region72
      $region71: #{tpu_custom_call.1} parent=5 // pred_region
        %s405 = ssub.s32 %s23, 1
        // Predicated region
        $region73: #{tpu_custom_call.1} parent=71 // pred_check
          %p406 = pneg %p196
        $region74: #{tpu_custom_call.1} parent=71 // pred_check_branch
          %408 = sbr.rel (%p406) target = $region76
        $region75: #{tpu_custom_call.1} parent=71 // pred_region
          %409 = dma.done [#allocation3], 256
        $region76: #{tpu_custom_call.1} parent=71 // pred_fallthru
          _
        %p410 = scmp.lt.s32.totalorder %s28, 1
        %s411 = scalar_select %p410, %s28, 1
        %s412 = smul.addr %s411, 8
        %s413 = scalar_lea.vmem %s0, %s412
        %p414 = pneg %p49
        %p415 = pneg %p46
        %p416 = pneg %p70
        %p417 = pneg %p67
        %p418 = pneg %p91
        %p419 = pneg %p88
        %p420 = pneg %p112
        %p421 = pneg %p109
        %p422 = pneg %p133
        %p423 = pneg %p130
        %p424 = pneg %p154
        %p425 = pneg %p151
        %p426 = pneg %p175
        %p427 = pneg %p172
        %p428 = pneg %p196
        %p429 = pneg %p193
        %p430 = pneg %p217
        %p431 = pneg %p214
        %p432 = pneg %p238
        %p433 = pneg %p235
        %p434 = pneg %p259
        %p435 = pneg %p256
        %p436 = pneg %p280
        %p437 = pneg %p277
        %p438 = pneg %p301
        %p439 = pneg %p298
        %p440 = pneg %p327
        %p441 = pneg %p324
        %s442 = sand.u32 %s314, 1
        %s443 = scalar_lea.sflag [#allocation4], %s442
        %s444 = sand.u32 %s314, 1
        %s445 = smul.addr %s444, 8
        %s446 = scalar_lea.vmem [#allocation5], %s445
        %p447 = scmp.lt.s32.totalorder %s28, 1
        %s448 = scalar_select %p447, %s28, 1
        %s449 = smul.addr %s448, 8
        %s450 = scalar_lea.vmem %s0, %s449
        %v452 = vld [vmem:[%s450] sm:$0xff]
        %v453 = vpack.c.bf16 %v452, %v452
        %v454 = vld [vmem:[%s1] sm:$0xf]
        %v455 = vld [vmem:[%s1 + $0x4] sm:$0xf]
        %v456 = vld [vmem:[%s1 + $0x8] sm:$0xf]
        %v457 = vld [vmem:[%s1 + $0xc] sm:$0xf]
        %v458 = vld [vmem:[%s2] sm:$0x1]
        %v460 = vlaneseq
        %v461 = vshrl.u32 %v460, 7
        %v462 = vsub.s32 0, %v461
        %v463 = vrot.slane %v458, %v462
        %v469 = vunpack.c.l.b16 %v454
        %v470 = vunpack.c.l.b16 %v455
        %v471 = vunpack.c.l.b16 %v456
        %v472 = vunpack.c.l.b16 %v457
        %v473 = vpack.c.b16 %v470, %v469
        %v474 = vpack.c.b16 %v472, %v471
        %vm477 = vcmask 261120
        %v479 = vsel %vm477, %v453, 0
        %481 = vmatprep.subr.bf16.mxu0 0
        %482 = vmatpush1.bf16.msra.mxu0 %v473
        %483 = vmatprep.subr.bf16.mxu0 0
        %484 = vmatpush1.bf16.msra.mxu0 %v474
        %485 = vmatprep.subr.bf16.mxu0 0
        %486 = vmatpush1.bf16.msra.mxu0 0
        %487 = vmatprep.subr.bf16.mxu0 0
        %488 = vmatpush1.bf16.msra.mxu0 0
        %489 = vmatprep.subr.bf16.mxu0 0
        %490 = vmatpush1.bf16.msra.mxu0 0
        %491 = vmatprep.subr.bf16.mxu0 0
        %492 = vmatpush1.bf16.msra.mxu0 0
        %493 = vmatprep.subr.bf16.mxu0 0
        %494 = vmatpush1.bf16.msra.mxu0 0
        %495 = vmatprep.subr.bf16.mxu0 0
        %496 = vmatpush1.bf16.msra.mxu0 0
        %497 = vmatprep.subr.bf16.mxu0 0
        %498 = vmatpush1.bf16.msra.mxu0 0
        %499 = vmatprep.subr.bf16.mxu0 0
        %500 = vmatpush1.bf16.msra.mxu0 0
        %501 = vmatprep.subr.bf16.mxu0 0
        %502 = vmatpush1.bf16.msra.mxu0 0
        %503 = vmatprep.subr.bf16.mxu0 0
        %504 = vmatpush1.bf16.msra.mxu0 0
        %505 = vmatprep.subr.bf16.mxu0 0
        %506 = vmatpush1.bf16.msra.mxu0 0
        %507 = vmatprep.subr.bf16.mxu0 0
        %508 = vmatpush1.bf16.msra.mxu0 0
        %509 = vmatprep.subr.bf16.mxu0 0
        %510 = vmatpush1.bf16.msra.mxu0 0
        %511 = vmatprep.subr.bf16.mxu0 0
        %512 = vmatpush1.bf16.msra.mxu0 0
        %513 = vmatprep.mubr.bf16.mxu0 0
        %514 = vmatmul.mubr.bf16.gmra.mrb[0].mxu0 %v479
        %v515 = vpop.f32.mrb[0].mxu0
        %v516 = vadd.f32 %v463, %v515
        %v517 = vpop.f32.mrb[0].mxu0
        %v518 = vpop.f32.mrb[0].mxu0
        %v519 = vpop.f32.mrb[0].mxu0
        %520 = vdwg.mxu0
        %522 = vrot.lane.b32.xlu0 %v516, 120
        %v523 = vpop.permute.xlu0 %522
        %525 = vrot.lane.b32.xlu0 %v516, 112
        %v526 = vpop.permute.xlu0 %525
        %528 = vrot.lane.b32.xlu0 %v516, 104
        %v529 = vpop.permute.xlu0 %528
        %v531 = vpack.c.bf16 %v516, %v516
        %v532 = vpack.c.bf16 %v523, %v523
        %v533 = vpack.c.bf16 %v526, %v526
        %v534 = vpack.c.bf16 %v529, %v529
        %536 = vrot.lane.b32.xlu0 %v531, 96
        %v537 = vpop.permute.xlu0 %536
        %vm538 = vcmask 64512
        %v540 = vsel %vm538, %v531, 0
        %v543 = vsel %vm538, %v537, 0
        %545 = vmatprep.subr.bf16.mxu0 0
        %546 = vmatpush1.bf16.xpose.msra.mxu0 %v543
        %547 = vmatprep.subr.bf16.mxu0 0
        %548 = vmatpush1.bf16.xpose.msra.mxu0 0
        %549 = vmatprep.subr.bf16.mxu0 0
        %550 = vmatpush1.bf16.xpose.msra.mxu0 0
        %551 = vmatprep.subr.bf16.mxu0 0
        %552 = vmatpush1.bf16.xpose.msra.mxu0 0
        %553 = vmatprep.subr.bf16.mxu0 0
        %554 = vmatpush1.bf16.xpose.msra.mxu0 0
        %555 = vmatprep.subr.bf16.mxu0 0
        %556 = vmatpush1.bf16.xpose.msra.mxu0 0
        %557 = vmatprep.subr.bf16.mxu0 0
        %558 = vmatpush1.bf16.xpose.msra.mxu0 0
        %559 = vmatprep.subr.bf16.mxu0 0
        %560 = vmatpush1.bf16.xpose.msra.mxu0 0
        %561 = vmatprep.subr.bf16.mxu0 0
        %562 = vmatpush1.bf16.xpose.msra.mxu0 0
        %563 = vmatprep.subr.bf16.mxu0 0
        %564 = vmatpush1.bf16.xpose.msra.mxu0 0
        %565 = vmatprep.subr.bf16.mxu0 0
        %566 = vmatpush1.bf16.xpose.msra.mxu0 0
        %567 = vmatprep.subr.bf16.mxu0 0
        %568 = vmatpush1.bf16.xpose.msra.mxu0 0
        %569 = vmatprep.subr.bf16.mxu0 0
        %570 = vmatpush1.bf16.xpose.msra.mxu0 0
        %571 = vmatprep.subr.bf16.mxu0 0
        %572 = vmatpush1.bf16.xpose.msra.mxu0 0
        %573 = vmatprep.subr.bf16.mxu0 0
        %574 = vmatpush1.bf16.xpose.msra.mxu0 0
        %575 = vmatprep.subr.bf16.mxu0 0
        %576 = vmatpush1.bf16.xpose.msra.mxu0 0
        %577 = vmatprep.mubr.bf16.mxu0 0
        %578 = vmatmul.mubr.bf16.gmra.mrb[0].mxu0 %v540
        %v579 = vpop.f32.mrb[0].mxu0
        %v580 = vadd.f32 0.0, %v579
        %v581 = vpop.f32.mrb[0].mxu0
        %v582 = vpop.f32.mrb[0].mxu0
        %v583 = vpop.f32.mrb[0].mxu0
        %584 = vdwg.mxu0
        %586 = vrot.lane.b32.xlu0 %v532, 96
        %v587 = vpop.permute.xlu0 %586
        %v589 = vsel %vm538, %v532, 0
        %v592 = vsel %vm538, %v587, 0
        %594 = vmatprep.subr.bf16.mxu0 0
        %595 = vmatpush1.bf16.xpose.msra.mxu0 %v592
        %596 = vmatprep.subr.bf16.mxu0 0
        %597 = vmatpush1.bf16.xpose.msra.mxu0 0
        %598 = vmatprep.subr.bf16.mxu0 0
        %599 = vmatpush1.bf16.xpose.msra.mxu0 0
        %600 = vmatprep.subr.bf16.mxu0 0
        %601 = vmatpush1.bf16.xpose.msra.mxu0 0
        %602 = vmatprep.subr.bf16.mxu0 0
        %603 = vmatpush1.bf16.xpose.msra.mxu0 0
        %604 = vmatprep.subr.bf16.mxu0 0
        %605 = vmatpush1.bf16.xpose.msra.mxu0 0
        %606 = vmatprep.subr.bf16.mxu0 0
        %607 = vmatpush1.bf16.xpose.msra.mxu0 0
        %608 = vmatprep.subr.bf16.mxu0 0
        %609 = vmatpush1.bf16.xpose.msra.mxu0 0
        %610 = vmatprep.subr.bf16.mxu0 0
        %611 = vmatpush1.bf16.xpose.msra.mxu0 0
        %612 = vmatprep.subr.bf16.mxu0 0
        %613 = vmatpush1.bf16.xpose.msra.mxu0 0
        %614 = vmatprep.subr.bf16.mxu0 0
        %615 = vmatpush1.bf16.xpose.msra.mxu0 0
        %616 = vmatprep.subr.bf16.mxu0 0
        %617 = vmatpush1.bf16.xpose.msra.mxu0 0
        %618 = vmatprep.subr.bf16.mxu0 0
        %619 = vmatpush1.bf16.xpose.msra.mxu0 0
        %620 = vmatprep.subr.bf16.mxu0 0
        %621 = vmatpush1.bf16.xpose.msra.mxu0 0
        %622 = vmatprep.subr.bf16.mxu0 0
        %623 = vmatpush1.bf16.xpose.msra.mxu0 0
        %624 = vmatprep.subr.bf16.mxu0 0
        %625 = vmatpush1.bf16.xpose.msra.mxu0 0
        %626 = vmatprep.mubr.bf16.mxu0 0
        %627 = vmatmul.mubr.bf16.gmra.mrb[0].mxu0 %v589
        %v628 = vpop.f32.mrb[0].mxu0
        %v629 = vadd.f32 0.0, %v628
        %v630 = vpop.f32.mrb[0].mxu0
        %v631 = vpop.f32.mrb[0].mxu0
        %v632 = vpop.f32.mrb[0].mxu0
        %633 = vdwg.mxu0
        %635 = vrot.lane.b32.xlu0 %v533, 96
        %v636 = vpop.permute.xlu0 %635
        %v638 = vsel %vm538, %v533, 0
        %v641 = vsel %vm538, %v636, 0
        %643 = vmatprep.subr.bf16.mxu0 0
        %644 = vmatpush1.bf16.xpose.msra.mxu0 %v641
        %645 = vmatprep.subr.bf16.mxu0 0
        %646 = vmatpush1.bf16.xpose.msra.mxu0 0
        %647 = vmatprep.subr.bf16.mxu0 0
        %648 = vmatpush1.bf16.xpose.msra.mxu0 0
        %649 = vmatprep.subr.bf16.mxu0 0
        %650 = vmatpush1.bf16.xpose.msra.mxu0 0
        %651 = vmatprep.subr.bf16.mxu0 0
        %652 = vmatpush1.bf16.xpose.msra.mxu0 0
        %653 = vmatprep.subr.bf16.mxu0 0
        %654 = vmatpush1.bf16.xpose.msra.mxu0 0
        %655 = vmatprep.subr.bf16.mxu0 0
        %656 = vmatpush1.bf16.xpose.msra.mxu0 0
        %657 = vmatprep.subr.bf16.mxu0 0
        %658 = vmatpush1.bf16.xpose.msra.mxu0 0
        %659 = vmatprep.subr.bf16.mxu0 0
        %660 = vmatpush1.bf16.xpose.msra.mxu0 0
        %661 = vmatprep.subr.bf16.mxu0 0
        %662 = vmatpush1.bf16.xpose.msra.mxu0 0
        %663 = vmatprep.subr.bf16.mxu0 0
        %664 = vmatpush1.bf16.xpose.msra.mxu0 0
        %665 = vmatprep.subr.bf16.mxu0 0
        %666 = vmatpush1.bf16.xpose.msra.mxu0 0
        %667 = vmatprep.subr.bf16.mxu0 0
        %668 = vmatpush1.bf16.xpose.msra.mxu0 0
        %669 = vmatprep.subr.bf16.mxu0 0
        %670 = vmatpush1.bf16.xpose.msra.mxu0 0
        %671 = vmatprep.subr.bf16.mxu0 0
        %672 = vmatpush1.bf16.xpose.msra.mxu0 0
        %673 = vmatprep.subr.bf16.mxu0 0
        %674 = vmatpush1.bf16.xpose.msra.mxu0 0
        %675 = vmatprep.mubr.bf16.mxu0 0
        %676 = vmatmul.mubr.bf16.gmra.mrb[0].mxu0 %v638
        %v677 = vpop.f32.mrb[0].mxu0
        %v678 = vadd.f32 0.0, %v677
        %v679 = vpop.f32.mrb[0].mxu0
        %v680 = vpop.f32.mrb[0].mxu0
        %v681 = vpop.f32.mrb[0].mxu0
        %682 = vdwg.mxu0
        %684 = vrot.lane.b32.xlu0 %v534, 96
        %v685 = vpop.permute.xlu0 %684
        %v687 = vsel %vm538, %v534, 0
        %v690 = vsel %vm538, %v685, 0
        %692 = vmatprep.subr.bf16.mxu0 0
        %693 = vmatpush1.bf16.xpose.msra.mxu0 %v690
        %694 = vmatprep.subr.bf16.mxu0 0
        %695 = vmatpush1.bf16.xpose.msra.mxu0 0
        %696 = vmatprep.subr.bf16.mxu0 0
        %697 = vmatpush1.bf16.xpose.msra.mxu0 0
        %698 = vmatprep.subr.bf16.mxu0 0
        %699 = vmatpush1.bf16.xpose.msra.mxu0 0
        %700 = vmatprep.subr.bf16.mxu0 0
        %701 = vmatpush1.bf16.xpose.msra.mxu0 0
        %702 = vmatprep.subr.bf16.mxu0 0
        %703 = vmatpush1.bf16.xpose.msra.mxu0 0
        %704 = vmatprep.subr.bf16.mxu0 0
        %705 = vmatpush1.bf16.xpose.msra.mxu0 0
        %706 = vmatprep.subr.bf16.mxu0 0
        %707 = vmatpush1.bf16.xpose.msra.mxu0 0
        %708 = vmatprep.subr.bf16.mxu0 0
        %709 = vmatpush1.bf16.xpose.msra.mxu0 0
        %710 = vmatprep.subr.bf16.mxu0 0
        %711 = vmatpush1.bf16.xpose.msra.mxu0 0
        %712 = vmatprep.subr.bf16.mxu0 0
        %713 = vmatpush1.bf16.xpose.msra.mxu0 0
        %714 = vmatprep.subr.bf16.mxu0 0
        %715 = vmatpush1.bf16.xpose.msra.mxu0 0
        %716 = vmatprep.subr.bf16.mxu0 0
        %717 = vmatpush1.bf16.xpose.msra.mxu0 0
        %718 = vmatprep.subr.bf16.mxu0 0
        %719 = vmatpush1.bf16.xpose.msra.mxu0 0
        %720 = vmatprep.subr.bf16.mxu0 0
        %721 = vmatpush1.bf16.xpose.msra.mxu0 0
        %722 = vmatprep.subr.bf16.mxu0 0
        %723 = vmatpush1.bf16.xpose.msra.mxu0 0
        %724 = vmatprep.mubr.bf16.mxu0 0
        %725 = vmatmul.mubr.bf16.gmra.mrb[0].mxu0 %v687
        %v726 = vpop.f32.mrb[0].mxu0
        %v727 = vadd.f32 0.0, %v726
        %v728 = vpop.f32.mrb[0].mxu0
        %v729 = vpop.f32.mrb[0].mxu0
        %v730 = vpop.f32.mrb[0].mxu0
        %731 = vdwg.mxu0
        %v732 = vsel %vm538, %v580, -inf
        %733 = vmax.xlane.f32.xlu0 %v732
        %v734 = vpop.xlane.xlu0 %733
        %v735 = vsel %vm538, %v629, -inf
        %736 = vmax.xlane.f32.xlu0 %v735
        %v737 = vpop.xlane.xlu0 %736
        %v738 = vsel %vm538, %v678, -inf
        %739 = vmax.xlane.f32.xlu0 %v738
        %v740 = vpop.xlane.xlu0 %739
        %v741 = vsel %vm538, %v727, -inf
        %742 = vmax.xlane.f32.xlu0 %v741
        %v743 = vpop.xlane.xlu0 %742
        %v744 = vsub.f32 %v580, %v734
        %v745 = vsub.f32 %v629, %v737
        %v746 = vsub.f32 %v678, %v740
        %v747 = vsub.f32 %v727, %v743
        %v748 = vmul.f32 %v744, 1.442695
        %v749 = vpow.pop %v748
        %v750 = vmul.f32 %v745, 1.442695
        %v751 = vpow.pop %v750
        %v752 = vmul.f32 %v746, 1.442695
        %v753 = vpow.pop %v752
        %v754 = vmul.f32 %v747, 1.442695
        %v755 = vpow.pop %v754
        %v756 = vsel %vm538, %v749, 0.0
        %757 = vadd.xlane.f32.xlu0 %v756
        %v758 = vpop.xlane.xlu0 %757
        %v759 = vsel %vm538, %v751, 0.0
        %760 = vadd.xlane.f32.xlu0 %v759
        %v761 = vpop.xlane.xlu0 %760
        %v762 = vsel %vm538, %v753, 0.0
        %763 = vadd.xlane.f32.xlu0 %v762
        %v764 = vpop.xlane.xlu0 %763
        %v765 = vsel %vm538, %v755, 0.0
        %766 = vadd.xlane.f32.xlu0 %v765
        %v767 = vpop.xlane.xlu0 %766
        %v768 = vrcp.pop %v758
        %v769 = vrcp.pop %v761
        %v770 = vrcp.pop %v764
        %v771 = vrcp.pop %v767
        %v772 = vmul.f32 %v749, %v768
        %v773 = vmul.f32 %v751, %v769
        %v774 = vmul.f32 %v753, %v770
        %v775 = vmul.f32 %v755, %v771
        %v776 = vpack.c.bf16 %v772, %v772
        %v777 = vpack.c.bf16 %v773, %v773
        %v778 = vpack.c.bf16 %v774, %v774
        %v779 = vpack.c.bf16 %v775, %v775
        %780 = vrot.lane.b32.xlu0 %v531, 64
        %v781 = vpop.permute.xlu0 %780
        %v783 = vsel %vm538, %v776, 0
        %vm785 = vcmask 1043456
        %v787 = vsel %vm785, %v781, 0
        %789 = vmatprep.subr.bf16.mxu0 0
        %790 = vmatpush1.bf16.msra.mxu0 %v787
        %791 = vmatprep.subr.bf16.mxu0 0
        %792 = vmatpush1.bf16.msra.mxu0 0
        %793 = vmatprep.subr.bf16.mxu0 0
        %794 = vmatpush1.bf16.msra.mxu0 0
        %795 = vmatprep.subr.bf16.mxu0 0
        %796 = vmatpush1.bf16.msra.mxu0 0
        %797 = vmatprep.subr.bf16.mxu0 0
        %798 = vmatpush1.bf16.msra.mxu0 0
        %799 = vmatprep.subr.bf16.mxu0 0
        %800 = vmatpush1.bf16.msra.mxu0 0
        %801 = vmatprep.subr.bf16.mxu0 0
        %802 = vmatpush1.bf16.msra.mxu0 0
        %803 = vmatprep.subr.bf16.mxu0 0
        %804 = vmatpush1.bf16.msra.mxu0 0
        %805 = vmatprep.subr.bf16.mxu0 0
        %806 = vmatpush1.bf16.msra.mxu0 0
        %807 = vmatprep.subr.bf16.mxu0 0
        %808 = vmatpush1.bf16.msra.mxu0 0
        %809 = vmatprep.subr.bf16.mxu0 0
        %810 = vmatpush1.bf16.msra.mxu0 0
        %811 = vmatprep.subr.bf16.mxu0 0
        %812 = vmatpush1.bf16.msra.mxu0 0
        %813 = vmatprep.subr.bf16.mxu0 0
        %814 = vmatpush1.bf16.msra.mxu0 0
        %815 = vmatprep.subr.bf16.mxu0 0
        %816 = vmatpush1.bf16.msra.mxu0 0
        %817 = vmatprep.subr.bf16.mxu0 0
        %818 = vmatpush1.bf16.msra.mxu0 0
        %819 = vmatprep.subr.bf16.mxu0 0
        %820 = vmatpush1.bf16.msra.mxu0 0
        %821 = vmatprep.mubr.bf16.mxu0 0
        %822 = vmatmul.mubr.bf16.gmra.mrb[0].mxu0 %v783
        %v823 = vpop.f32.mrb[0].mxu0
        %v824 = vadd.f32 0.0, %v823
        %v825 = vpop.f32.mrb[0].mxu0
        %v826 = vpop.f32.mrb[0].mxu0
        %v827 = vpop.f32.mrb[0].mxu0
        %828 = vdwg.mxu0
        %829 = vrot.lane.b32.xlu0 %v532, 64
        %v830 = vpop.permute.xlu0 %829
        %v832 = vsel %vm538, %v777, 0
        %v835 = vsel %vm785, %v830, 0
        %837 = vmatprep.subr.bf16.mxu0 0
        %838 = vmatpush1.bf16.msra.mxu0 %v835
        %839 = vmatprep.subr.bf16.mxu0 0
        %840 = vmatpush1.bf16.msra.mxu0 0
        %841 = vmatprep.subr.bf16.mxu0 0
        %842 = vmatpush1.bf16.msra.mxu0 0
        %843 = vmatprep.subr.bf16.mxu0 0
        %844 = vmatpush1.bf16.msra.mxu0 0
        %845 = vmatprep.subr.bf16.mxu0 0
        %846 = vmatpush1.bf16.msra.mxu0 0
        %847 = vmatprep.subr.bf16.mxu0 0
        %848 = vmatpush1.bf16.msra.mxu0 0
        %849 = vmatprep.subr.bf16.mxu0 0
        %850 = vmatpush1.bf16.msra.mxu0 0
        %851 = vmatprep.subr.bf16.mxu0 0
        %852 = vmatpush1.bf16.msra.mxu0 0
        %853 = vmatprep.subr.bf16.mxu0 0
        %854 = vmatpush1.bf16.msra.mxu0 0
        %855 = vmatprep.subr.bf16.mxu0 0
        %856 = vmatpush1.bf16.msra.mxu0 0
        %857 = vmatprep.subr.bf16.mxu0 0
        %858 = vmatpush1.bf16.msra.mxu0 0
        %859 = vmatprep.subr.bf16.mxu0 0
        %860 = vmatpush1.bf16.msra.mxu0 0
        %861 = vmatprep.subr.bf16.mxu0 0
        %862 = vmatpush1.bf16.msra.mxu0 0
        %863 = vmatprep.subr.bf16.mxu0 0
        %864 = vmatpush1.bf16.msra.mxu0 0
        %865 = vmatprep.subr.bf16.mxu0 0
        %866 = vmatpush1.bf16.msra.mxu0 0
        %867 = vmatprep.subr.bf16.mxu0 0
        %868 = vmatpush1.bf16.msra.mxu0 0
        %869 = vmatprep.mubr.bf16.mxu0 0
        %870 = vmatmul.mubr.bf16.gmra.mrb[0].mxu0 %v832
        %v871 = vpop.f32.mrb[0].mxu0
        %v872 = vadd.f32 0.0, %v871
        %v873 = vpop.f32.mrb[0].mxu0
        %v874 = vpop.f32.mrb[0].mxu0
        %v875 = vpop.f32.mrb[0].mxu0
        %876 = vdwg.mxu0
        %877 = vrot.lane.b32.xlu0 %v533, 64
        %v878 = vpop.permute.xlu0 %877
        %v880 = vsel %vm538, %v778, 0
        %v883 = vsel %vm785, %v878, 0
        %885 = vmatprep.subr.bf16.mxu0 0
        %886 = vmatpush1.bf16.msra.mxu0 %v883
        %887 = vmatprep.subr.bf16.mxu0 0
        %888 = vmatpush1.bf16.msra.mxu0 0
        %889 = vmatprep.subr.bf16.mxu0 0
        %890 = vmatpush1.bf16.msra.mxu0 0
        %891 = vmatprep.subr.bf16.mxu0 0
        %892 = vmatpush1.bf16.msra.mxu0 0
        %893 = vmatprep.subr.bf16.mxu0 0
        %894 = vmatpush1.bf16.msra.mxu0 0
        %895 = vmatprep.subr.bf16.mxu0 0
        %896 = vmatpush1.bf16.msra.mxu0 0
        %897 = vmatprep.subr.bf16.mxu0 0
        %898 = vmatpush1.bf16.msra.mxu0 0
        %899 = vmatprep.subr.bf16.mxu0 0
        %900 = vmatpush1.bf16.msra.mxu0 0
        %901 = vmatprep.subr.bf16.mxu0 0
        %902 = vmatpush1.bf16.msra.mxu0 0
        %903 = vmatprep.subr.bf16.mxu0 0
        %904 = vmatpush1.bf16.msra.mxu0 0
        %905 = vmatprep.subr.bf16.mxu0 0
        %906 = vmatpush1.bf16.msra.mxu0 0
        %907 = vmatprep.subr.bf16.mxu0 0
        %908 = vmatpush1.bf16.msra.mxu0 0
        %909 = vmatprep.subr.bf16.mxu0 0
        %910 = vmatpush1.bf16.msra.mxu0 0
        %911 = vmatprep.subr.bf16.mxu0 0
        %912 = vmatpush1.bf16.msra.mxu0 0
        %913 = vmatprep.subr.bf16.mxu0 0
        %914 = vmatpush1.bf16.msra.mxu0 0
        %915 = vmatprep.subr.bf16.mxu0 0
        %916 = vmatpush1.bf16.msra.mxu0 0
        %917 = vmatprep.mubr.bf16.mxu0 0
        %918 = vmatmul.mubr.bf16.gmra.mrb[0].mxu0 %v880
        %v919 = vpop.f32.mrb[0].mxu0
        %v920 = vadd.f32 0.0, %v919
        %v921 = vpop.f32.mrb[0].mxu0
        %v922 = vpop.f32.mrb[0].mxu0
        %v923 = vpop.f32.mrb[0].mxu0
        %924 = vdwg.mxu0
        %925 = vrot.lane.b32.xlu0 %v534, 64
        %v926 = vpop.permute.xlu0 %925
        %v928 = vsel %vm538, %v779, 0
        %v931 = vsel %vm785, %v926, 0
        %933 = vmatprep.subr.bf16.mxu0 0
        %934 = vmatpush1.bf16.msra.mxu0 %v931
        %935 = vmatprep.subr.bf16.mxu0 0
        %936 = vmatpush1.bf16.msra.mxu0 0
        %937 = vmatprep.subr.bf16.mxu0 0
        %938 = vmatpush1.bf16.msra.mxu0 0
        %939 = vmatprep.subr.bf16.mxu0 0
        %940 = vmatpush1.bf16.msra.mxu0 0
        %941 = vmatprep.subr.bf16.mxu0 0
        %942 = vmatpush1.bf16.msra.mxu0 0
        %943 = vmatprep.subr.bf16.mxu0 0
        %944 = vmatpush1.bf16.msra.mxu0 0
        %945 = vmatprep.subr.bf16.mxu0 0
        %946 = vmatpush1.bf16.msra.mxu0 0
        %947 = vmatprep.subr.bf16.mxu0 0
        %948 = vmatpush1.bf16.msra.mxu0 0
        %949 = vmatprep.subr.bf16.mxu0 0
        %950 = vmatpush1.bf16.msra.mxu0 0
        %951 = vmatprep.subr.bf16.mxu0 0
        %952 = vmatpush1.bf16.msra.mxu0 0
        %953 = vmatprep.subr.bf16.mxu0 0
        %954 = vmatpush1.bf16.msra.mxu0 0
        %955 = vmatprep.subr.bf16.mxu0 0
        %956 = vmatpush1.bf16.msra.mxu0 0
        %957 = vmatprep.subr.bf16.mxu0 0
        %958 = vmatpush1.bf16.msra.mxu0 0
        %959 = vmatprep.subr.bf16.mxu0 0
        %960 = vmatpush1.bf16.msra.mxu0 0
        %961 = vmatprep.subr.bf16.mxu0 0
        %962 = vmatpush1.bf16.msra.mxu0 0
        %963 = vmatprep.subr.bf16.mxu0 0
        %964 = vmatpush1.bf16.msra.mxu0 0
        %965 = vmatprep.mubr.bf16.mxu0 0
        %966 = vmatmul.mubr.bf16.gmra.mrb[0].mxu0 %v928
        %v967 = vpop.f32.mrb[0].mxu0
        %v968 = vadd.f32 0.0, %v967
        %v969 = vpop.f32.mrb[0].mxu0
        %v970 = vpop.f32.mrb[0].mxu0
        %v971 = vpop.f32.mrb[0].mxu0
        %972 = vdwg.mxu0
        %974 = vrot.lane.b32.xlu0 %v872, 8
        %v975 = vpop.permute.xlu0 %974
        %978 = vrot.lane.b32.xlu0 %v920, 16
        %v979 = vpop.permute.xlu0 %978
        %982 = vrot.lane.b32.xlu0 %v968, 24
        %v983 = vpop.permute.xlu0 %982
        %v985 = vsel %vm538, %v824, %v975
        %vm986 = vcmask 130048
        %v987 = vsel %vm986, %v985, %v979
        %vm988 = vcmask 195584
        %v989 = vsel %vm988, %v987, %v983
        %v990 = vpack.c.bf16 %v989, %v989
        %v991 = vld [vmem:[%s3] sm:$0xf]
        %v992 = vld [vmem:[%s3 + $0x4] sm:$0xf]
        %v993 = vld [vmem:[%s3 + $0x8] sm:$0xf]
        %v994 = vld [vmem:[%s3 + $0xc] sm:$0xf]
        %v995 = vld [vmem:[%s4] sm:$0x1]
        %v997 = vlaneseq
        %v998 = vshrl.u32 %v997, 7
        %v999 = vsub.s32 0, %v998
        %v1000 = vrot.slane %v995, %v999
        %v1006 = vunpack.c.l.b16 %v991
        %v1007 = vunpack.c.l.b16 %v992
        %v1008 = vunpack.c.l.b16 %v993
        %v1009 = vunpack.c.l.b16 %v994
        %v1010 = vpack.c.b16 %v1007, %v1006
        %v1011 = vpack.c.b16 %v1009, %v1008
        %v1015 = vsel %vm477, %v990, 0
        %1017 = vmatprep.subr.bf16.mxu0 0
        %1018 = vmatpush1.bf16.msra.mxu0 %v1010
        %1019 = vmatprep.subr.bf16.mxu0 0
        %1020 = vmatpush1.bf16.msra.mxu0 %v1011
        %1021 = vmatprep.subr.bf16.mxu0 0
        %1022 = vmatpush1.bf16.msra.mxu0 0
        %1023 = vmatprep.subr.bf16.mxu0 0
        %1024 = vmatpush1.bf16.msra.mxu0 0
        %1025 = vmatprep.subr.bf16.mxu0 0
        %1026 = vmatpush1.bf16.msra.mxu0 0
        %1027 = vmatprep.subr.bf16.mxu0 0
        %1028 = vmatpush1.bf16.msra.mxu0 0
        %1029 = vmatprep.subr.bf16.mxu0 0
        %1030 = vmatpush1.bf16.msra.mxu0 0
        %1031 = vmatprep.subr.bf16.mxu0 0
        %1032 = vmatpush1.bf16.msra.mxu0 0
        %1033 = vmatprep.subr.bf16.mxu0 0
        %1034 = vmatpush1.bf16.msra.mxu0 0
        %1035 = vmatprep.subr.bf16.mxu0 0
        %1036 = vmatpush1.bf16.msra.mxu0 0
        %1037 = vmatprep.subr.bf16.mxu0 0
        %1038 = vmatpush1.bf16.msra.mxu0 0
        %1039 = vmatprep.subr.bf16.mxu0 0
        %1040 = vmatpush1.bf16.msra.mxu0 0
        %1041 = vmatprep.subr.bf16.mxu0 0
        %1042 = vmatpush1.bf16.msra.mxu0 0
        %1043 = vmatprep.subr.bf16.mxu0 0
        %1044 = vmatpush1.bf16.msra.mxu0 0
        %1045 = vmatprep.subr.bf16.mxu0 0
        %1046 = vmatpush1.bf16.msra.mxu0 0
        %1047 = vmatprep.subr.bf16.mxu0 0
        %1048 = vmatpush1.bf16.msra.mxu0 0
        %1049 = vmatprep.mubr.bf16.mxu0 0
        %1050 = vmatmul.mubr.bf16.gmra.mrb[0].mxu0 %v1015
        %v1051 = vpop.f32.mrb[0].mxu0
        %v1052 = vadd.f32 %v1000, %v1051
        %v1053 = vpop.f32.mrb[0].mxu0
        %v1054 = vpop.f32.mrb[0].mxu0
        %v1055 = vpop.f32.mrb[0].mxu0
        %1056 = vdwg.mxu0
        %v1057 = vadd.f32 %v452, %v1052
        %v1058 = vld [vmem:[%s5] sm:$0x1]
        %v1059 = vld [vmem:[%s6] sm:$0x1]
        %v1060 = vsel %vm477, %v1057, 0.0
        %1061 = vadd.xlane.f32.xlu0 %v1060
        %v1062 = vpop.xlane.xlu0 %1061
        %v1063 = vrcp.pop 32.0
        %v1064 = vmul.f32 %v1062, %v1063
        %v1065 = vsub.f32 %v1057, %v1064
        %v1066 = vmul.f32 %v1065, %v1065
        %v1067 = vsel %vm477, %v1066, 0.0
        %1068 = vadd.xlane.f32.xlu0 %v1067
        %v1069 = vpop.xlane.xlu0 %1068
        %v1070 = vmul.f32 %v1069, %v1063
        %v1071 = vadd.f32 %v1070, 1e-05
        %v1072 = vrsqrt.pop %v1071
        %v1073 = vmul.f32 %v1065, %v1072
        %v1075 = vlaneseq
        %v1076 = vshrl.u32 %v1075, 7
        %v1077 = vsub.s32 0, %v1076
        %v1078 = vrot.slane %v1058, %v1077
        %v1080 = vmul.f32 %v1073, %v1078
        %v1082 = vlaneseq
        %v1083 = vshrl.u32 %v1082, 7
        %v1084 = vsub.s32 0, %v1083
        %v1085 = vrot.slane %v1059, %v1084
        %v1087 = vadd.f32 %v1080, %v1085
        %v1088 = vpack.c.bf16 %v1087, %v1087
        %v1089 = vld [vmem:[#allocation2] sm:$0xf]
        %v1090 = vld [vmem:[#allocation2 + $0x4] sm:$0xf]
        %v1091 = vld [vmem:[#allocation2 + $0x8] sm:$0xf]
        %v1092 = vld [vmem:[#allocation2 + $0xc] sm:$0xf]
        %v1093 = vld [vmem:[%s8] sm:$0x1]
        %v1095 = vlaneseq
        %v1096 = vshrl.u32 %v1095, 7
        %v1097 = vsub.s32 0, %v1096
        %v1098 = vrot.slane %v1093, %v1097
        %v1104 = vunpack.c.l.b16 %v1089
        %v1105 = vunpack.c.l.b16 %v1090
        %v1106 = vunpack.c.l.b16 %v1091
        %v1107 = vunpack.c.l.b16 %v1092
        %v1108 = vpack.c.b16 %v1105, %v1104
        %v1109 = vpack.c.b16 %v1107, %v1106
        %v1113 = vsel %vm477, %v1088, 0
        %1115 = vmatprep.subr.bf16.mxu0 0
        %1116 = vmatpush1.bf16.msra.mxu0 %v1108
        %1117 = vmatprep.subr.bf16.mxu0 0
        %1118 = vmatpush1.bf16.msra.mxu0 %v1109
        %1119 = vmatprep.subr.bf16.mxu0 0
        %1120 = vmatpush1.bf16.msra.mxu0 0
        %1121 = vmatprep.subr.bf16.mxu0 0
        %1122 = vmatpush1.bf16.msra.mxu0 0
        %1123 = vmatprep.subr.bf16.mxu0 0
        %1124 = vmatpush1.bf16.msra.mxu0 0
        %1125 = vmatprep.subr.bf16.mxu0 0
        %1126 = vmatpush1.bf16.msra.mxu0 0
        %1127 = vmatprep.subr.bf16.mxu0 0
        %1128 = vmatpush1.bf16.msra.mxu0 0
        %1129 = vmatprep.subr.bf16.mxu0 0
        %1130 = vmatpush1.bf16.msra.mxu0 0
        %1131 = vmatprep.subr.bf16.mxu0 0
        %1132 = vmatpush1.bf16.msra.mxu0 0
        %1133 = vmatprep.subr.bf16.mxu0 0
        %1134 = vmatpush1.bf16.msra.mxu0 0
        %1135 = vmatprep.subr.bf16.mxu0 0
        %1136 = vmatpush1.bf16.msra.mxu0 0
        %1137 = vmatprep.subr.bf16.mxu0 0
        %1138 = vmatpush1.bf16.msra.mxu0 0
        %1139 = vmatprep.subr.bf16.mxu0 0
        %1140 = vmatpush1.bf16.msra.mxu0 0
        %1141 = vmatprep.subr.bf16.mxu0 0
        %1142 = vmatpush1.bf16.msra.mxu0 0
        %1143 = vmatprep.subr.bf16.mxu0 0
        %1144 = vmatpush1.bf16.msra.mxu0 0
        %1145 = vmatprep.subr.bf16.mxu0 0
        %1146 = vmatpush1.bf16.msra.mxu0 0
        %1147 = vmatprep.mubr.bf16.mxu0 0
        %1148 = vmatmul.mubr.bf16.gmra.mrb[0].mxu0 %v1113
        %v1149 = vpop.f32.mrb[0].mxu0
        %v1150 = vadd.f32 %v1098, %v1149
        %v1151 = vpop.f32.mrb[0].mxu0
        %v1152 = vpop.f32.mrb[0].mxu0
        %v1153 = vpop.f32.mrb[0].mxu0
        %1154 = vdwg.mxu0
        %v1155 = vmax.f32 %v1150, 0.0
        %v1156 = vpack.c.bf16 %v1155, %v1155
        %v1157 = vld [vmem:[%s9] sm:$0xf]
        %v1158 = vld [vmem:[%s9 + $0x4] sm:$0xf]
        %v1159 = vld [vmem:[%s9 + $0x8] sm:$0xf]
        %v1160 = vld [vmem:[%s9 + $0xc] sm:$0xf]
        %v1161 = vld [vmem:[%s9 + $0x10] sm:$0xf]
        %v1162 = vld [vmem:[%s9 + $0x14] sm:$0xf]
        %v1163 = vld [vmem:[%s9 + $0x18] sm:$0xf]
        %v1164 = vld [vmem:[%s9 + $0x1c] sm:$0xf]
        %v1165 = vld [vmem:[%s10] sm:$0x1]
        %v1167 = vlaneseq
        %v1168 = vshrl.u32 %v1167, 7
        %v1169 = vsub.s32 0, %v1168
        %v1170 = vrot.slane %v1165, %v1169
        %v1180 = vunpack.c.l.b16 %v1157
        %v1181 = vunpack.c.l.b16 %v1158
        %v1182 = vunpack.c.l.b16 %v1159
        %v1183 = vunpack.c.l.b16 %v1160
        %v1184 = vunpack.c.l.b16 %v1161
        %v1185 = vunpack.c.l.b16 %v1162
        %v1186 = vunpack.c.l.b16 %v1163
        %v1187 = vunpack.c.l.b16 %v1164
        %v1188 = vpack.c.b16 %v1181, %v1180
        %v1189 = vpack.c.b16 %v1183, %v1182
        %v1190 = vpack.c.b16 %v1185, %v1184
        %v1191 = vpack.c.b16 %v1187, %v1186
        %vm1196 = vcmask 523264
        %v1198 = vsel %vm1196, %v1156, 0
        %1200 = vmatprep.subr.bf16.mxu0 0
        %1201 = vmatpush1.bf16.msra.mxu0 %v1188
        %1202 = vmatprep.subr.bf16.mxu0 0
        %1203 = vmatpush1.bf16.msra.mxu0 %v1189
        %1204 = vmatprep.subr.bf16.mxu0 0
        %1205 = vmatpush1.bf16.msra.mxu0 %v1190
        %1206 = vmatprep.subr.bf16.mxu0 0
        %1207 = vmatpush1.bf16.msra.mxu0 %v1191
        %1208 = vmatprep.subr.bf16.mxu0 0
        %1209 = vmatpush1.bf16.msra.mxu0 0
        %1210 = vmatprep.subr.bf16.mxu0 0
        %1211 = vmatpush1.bf16.msra.mxu0 0
        %1212 = vmatprep.subr.bf16.mxu0 0
        %1213 = vmatpush1.bf16.msra.mxu0 0
        %1214 = vmatprep.subr.bf16.mxu0 0
        %1215 = vmatpush1.bf16.msra.mxu0 0
        %1216 = vmatprep.subr.bf16.mxu0 0
        %1217 = vmatpush1.bf16.msra.mxu0 0
        %1218 = vmatprep.subr.bf16.mxu0 0
        %1219 = vmatpush1.bf16.msra.mxu0 0
        %1220 = vmatprep.subr.bf16.mxu0 0
        %1221 = vmatpush1.bf16.msra.mxu0 0
        %1222 = vmatprep.subr.bf16.mxu0 0
        %1223 = vmatpush1.bf16.msra.mxu0 0
        %1224 = vmatprep.subr.bf16.mxu0 0
        %1225 = vmatpush1.bf16.msra.mxu0 0
        %1226 = vmatprep.subr.bf16.mxu0 0
        %1227 = vmatpush1.bf16.msra.mxu0 0
        %1228 = vmatprep.subr.bf16.mxu0 0
        %1229 = vmatpush1.bf16.msra.mxu0 0
        %1230 = vmatprep.subr.bf16.mxu0 0
        %1231 = vmatpush1.bf16.msra.mxu0 0
        %1232 = vmatprep.mubr.bf16.mxu0 0
        %1233 = vmatmul.mubr.bf16.gmra.mrb[0].mxu0 %v1198
        %v1234 = vpop.f32.mrb[0].mxu0
        %v1235 = vadd.f32 %v1170, %v1234
        %v1236 = vpop.f32.mrb[0].mxu0
        %v1237 = vpop.f32.mrb[0].mxu0
        %v1238 = vpop.f32.mrb[0].mxu0
        %1239 = vdwg.mxu0
        %v1240 = vadd.f32 %v1087, %v1235
        %v1241 = vld [vmem:[%s11] sm:$0x1]
        %v1242 = vld [vmem:[%s12] sm:$0x1]
        %v1243 = vsel %vm477, %v1240, 0.0
        %1244 = vadd.xlane.f32.xlu0 %v1243
        %v1245 = vpop.xlane.xlu0 %1244
        %v1246 = vmul.f32 %v1245, %v1063
        %v1247 = vsub.f32 %v1240, %v1246
        %v1248 = vmul.f32 %v1247, %v1247
        %v1249 = vsel %vm477, %v1248, 0.0
        %1250 = vadd.xlane.f32.xlu0 %v1249
        %v1251 = vpop.xlane.xlu0 %1250
        %v1252 = vmul.f32 %v1251, %v1063
        %v1253 = vadd.f32 %v1252, 1e-05
        %v1254 = vrsqrt.pop %v1253
        %v1255 = vmul.f32 %v1247, %v1254
        %v1257 = vlaneseq
        %v1258 = vshrl.u32 %v1257, 7
        %v1259 = vsub.s32 0, %v1258
        %v1260 = vrot.slane %v1241, %v1259
        %v1262 = vmul.f32 %v1255, %v1260
        %v1264 = vlaneseq
        %v1265 = vshrl.u32 %v1264, 7
        %v1266 = vsub.s32 0, %v1265
        %v1267 = vrot.slane %v1242, %v1266
        %v1269 = vadd.f32 %v1262, %v1267
        %1270 = vst.msk [vmem:[%s446] sm:$0xff] %vm477, %v1269
        %s1271 = sand.u32 %s314, 1
        %s1272 = scalar_lea.sflag [#allocation4], %s1271
        %s1273 = sand.u32 %s314, 1
        %s1274 = smul.addr %s1273, 8
        %s1275 = scalar_lea.vmem [#allocation5], %s1274
        // Predicated region
        $region77: #{tpu_custom_call.1} parent=71 // pred_check
          %p1276 = pneg %p324
        $region78: #{tpu_custom_call.1} parent=71 // pred_check_branch
          %1278 = sbr.rel (%p1276) target = $region80
        $region79: #{tpu_custom_call.1} parent=71 // pred_region
          %s1280 = ssub.s32 128, 128
          %1281 = vsyncadd %s1272, %s1280
          %s1282 = smul.addr %s28, 128
          %s1283 = scalar_lea.hbm %s13, %s1282
          %s1285 = sshll.u32 %s1275, 4
          %s1286 = int_to_ptr.vmem [resolvable:$true] %s1285
          %1288 = dma.vmem_to_hbm [thread:$0]  %s1286, 128, %s1283, %s1272
        $region80: #{tpu_custom_call.1} parent=71 // pred_fallthru
          _
      $region72: #{tpu_custom_call.1} parent=5 // pred_fallthru
        _
      %p1289 = scmp.le.s32.totalorder 2, %s23
      // Predicated region
      $region81: #{tpu_custom_call.1} parent=5 // pred_check
        %p1290 = pneg %p1289
      $region82: #{tpu_custom_call.1} parent=5 // pred_check_branch
        %1292 = sbr.rel (%p1290) target = $region84
      $region83: #{tpu_custom_call.1} parent=5 // pred_region
        %s1293 = ssub.s32 %s23, 2
        // Predicated region
        $region85: #{tpu_custom_call.1} parent=83 // pred_check
          %p1294 = pneg %p330
        $region86: #{tpu_custom_call.1} parent=83 // pred_check_branch
          %1296 = sbr.rel (%p1294) target = $region88
        $region87: #{tpu_custom_call.1} parent=83 // pred_region
          %s1297 = sand.u32 %s315, 1
          %s1298 = scalar_lea.sflag [#allocation4], %s1297
          %s1299 = sand.u32 %s315, 1
          %s1300 = smul.addr %s1299, 8
          %s1301 = scalar_lea.vmem [#allocation5], %s1300
          %1302 = dma.done %s1298, 128
        $region88: #{tpu_custom_call.1} parent=83 // pred_fallthru
          _
      $region84: #{tpu_custom_call.1} parent=5 // pred_fallthru
        _
    $region6: #{tpu_custom_call.1} parent=1 // loop_footer
      %s27 = sadd.s32 1, %s23
    $region7: #{tpu_custom_call.1} parent=1 // loop_footer_branch
      %22 = sbr.rel target = $region3
    $region8: #{tpu_custom_call.1} parent=1 // loop_exit
      _
    %1303 = vsyncpa [#allocation3], 1
    %s1304 = scalar_lea.sflag [#allocation3], 1
    %1305 = vsyncpa %s1304, 1
    %1306 = vsyncpa [#allocation4], 1
    %s1307 = scalar_lea.sflag [#allocation4], 1
    %1308 = vsyncpa %s1307, 1

</llo_original>
